<compile_context>
chip_gen: v6e
topology: v6e:2x2x1
jax: 0.10.0
libtpu: 0.0.40
codegen_flags: <defaults>
</compile_context>

<pallas_src>
import functools

import numpy as np
import jax
import jax.numpy as jnp
from jax.experimental import pallas as pl
from jax.experimental.pallas import tpu as pltpu


def _round_up(n, m):
    return ((n + m - 1) // m) * m


# --------------------------------------------------------------------------
# Single fused kernel: GRU (over T) -> MLP(tanh) -> fused head -> flow apply
# --------------------------------------------------------------------------
def nf_full_kernel(ny, x_ref, zt_ref, wih_ref, bih_ref, whh_ref, bhh_ref,
                   w1_hbm, b1_hbm, w2_hbm, b2_hbm, wh_hbm, bh_hbm,
                   out_ref,
                   xp_ref, w1_v, b1_v, w2_v, b2_v, wh_v, bh_v, sems):
    f32 = jnp.float32
    Bp = out_ref.shape[0]                 # padded batch (multiple of 8)
    nh = whh_ref.shape[0]                 # nh_rnn
    T = x_ref.shape[0] // Bp              # x is (T*Bp, nx), time-major rows
    na = zt_ref.shape[1]                  # ny*ny*nk (multiple of 128)
    head_pw = wh_hbm.shape[1]             # na + 128 (padded head width)

    # ---- Phase 0: prefetch Phase-3 weights HBM->VMEM; hidden behind the
    #      serial recurrence, waited on only right before Phase 3. ----
    copies = []
    for i, (src, dst) in enumerate(((w1_hbm, w1_v), (b1_hbm, b1_v),
                                    (w2_hbm, w2_v), (b2_hbm, b2_v),
                                    (wh_hbm, wh_v), (bh_hbm, bh_v))):
        cp = pltpu.make_async_copy(src, dst, sems.at[i])
        cp.start()
        copies.append(cp)

    # ---- Phase 1: hoisted input projections for ALL timesteps (one matmul),
    #      input biases folded in.  Stored to VMEM scratch so the unrolled
    #      loop reads tile-aligned slices instead of holding 24 live vregs. ----
    xp_ref[...] = (jnp.dot(x_ref[...], wih_ref[...], preferred_element_type=f32)
                   + bih_ref[...])

    # ---- Phase 2: recurrence.  One fused (nh, 3*nh) dot per step; gates are
    #      128-aligned lane slices.  Gate order [r | z | n]. ----
    bhh = jnp.broadcast_to(bhh_ref[...], (Bp, 3 * nh))     # broadcast hoisted
    h = jnp.zeros((Bp, nh), f32)
    for t in range(T):                                     # static unroll (tiny T)
        xpt = xp_ref[t * Bp:(t + 1) * Bp, :]               # 8-row aligned slice
        # whh streamed from VMEM each step (not held as a 48-vreg live value).
        hp = jnp.dot(h, whh_ref[...], preferred_element_type=f32) + bhh
        r = jax.nn.sigmoid(xpt[:, :nh] + hp[:, :nh])
        zg = jax.nn.sigmoid(xpt[:, nh:2 * nh] + hp[:, nh:2 * nh])
        n = jnp.tanh(xpt[:, 2 * nh:] + r * hp[:, 2 * nh:])
        h = (1.0 - zg) * n + zg * h

    # ---- Wait for the prefetched Phase-3 weights (overlapped above). ----
    for cp in copies:
        cp.wait()

    # ---- Phase 3: MLP + fused head matmul + flow apply (all on the MXU). ----
    h1 = jnp.tanh(jnp.dot(h, w1_v[...], preferred_element_type=f32) + b1_v[...])
    h2 = jnp.tanh(jnp.dot(h1, w2_v[...], preferred_element_type=f32) + b2_v[...])
    head = jnp.dot(h2, wh_v[...], preferred_element_type=f32) + bh_v[...]

    # Segment-sum matrix S (na, 128) generated in-kernel (VPU iota), no HBM DMA:
    # S[i, m] = 1 iff m*ny <= i < (m+1)*ny   (zero for padded columns m >= nk*ny)
    i_idx = jax.lax.broadcasted_iota(jnp.int32, (na, 128), 0)
    m_idx = jax.lax.broadcasted_iota(jnp.int32, (na, 128), 1)
    seg = jnp.where((i_idx >= m_idx * ny) & (i_idx < m_idx * ny + ny),
                    1.0, 0.0).astype(f32)

    a_flat = head[:, :na]                                  # (Bp, na)
    # head[:, na:na+128] == [b_flat | zeros] thanks to zero-padded head weight,
    # so y_pad = (a*z)@S + that slice gives [y | zeros] in one aligned vreg.
    y_pad = (jnp.dot(a_flat * zt_ref[...], seg, preferred_element_type=f32)
             + head[:, na:na + 128])

    # Lane-dense merged output slab: [A_flat | b_flat | 0-pad | y | 0-pad].
    out_ref[:, :head_pw] = head
    out_ref[:, head_pw:] = y_pad


# --------------------------------------------------------------------------
# NFFull forward (fix_first=False, x_birnn=False; z given explicitly)
# --------------------------------------------------------------------------
def nf_full_forward(x, z, params, nk, ny):
    f32 = jnp.float32
    T, B, nx = x.shape
    nh = params['w_hh'].shape[0]
    na = ny * ny * nk
    nb = ny * nk
    # TODO(synk): lane packing below assumes na % 128 == 0 and nb <= 128.
    assert na % 128 == 0 and nb <= 128

    Bp = _round_up(B, 8)                       # sublane-tile-aligned batch
    nh0 = params['w1'].shape[1]
    nh1 = params['w2'].shape[1]
    nh0p = _round_up(nh0, 128)                 # 300 -> 384
    nh1p = _round_up(nh1, 128)                 # 200 -> 256
    head_w = na + nb
    head_pw = na + 128                         # head padded to 128-multiple
    out_w = head_pw + 128                      # + one 128-lane vreg for y

    # Cheap XLA-side prep (zero padding / tiling); kernel results never
    # round-trip through HBM.
    x2p = jnp.pad(x.astype(f32), ((0, 0), (0, Bp - B), (0, 0))).reshape(T * Bp, nx)
    zt = jnp.pad(jnp.tile(z.astype(f32), (1, nk * ny)), ((0, Bp - B), (0, 0)))
    w1p = jnp.pad(params['w1'], ((0, 0), (0, nh0p - nh0)))
    b1p = jnp.pad(params['b1'], ((0, 0), (0, nh0p - nh0)))
    w2p = jnp.pad(params['w2'], ((0, nh0p - nh0), (0, nh1p - nh1)))
    b2p = jnp.pad(params['b2'], ((0, 0), (0, nh1p - nh1)))
    whp = jnp.pad(params['w_head'], ((0, nh1p - nh1), (0, head_pw - head_w)))
    bhp = jnp.pad(params['b_head'], ((0, 0), (0, head_pw - head_w)))

    vmem_spec = pl.BlockSpec(memory_space=pltpu.MemorySpace.VMEM)
    hbm_spec = pl.BlockSpec(memory_space=pl.ANY)   # manual-DMA'd weights

    flops = 2 * (T * Bp * nx * 3 * nh + T * Bp * nh * 3 * nh
                 + Bp * nh * nh0p + Bp * nh0p * nh1p + Bp * nh1p * head_pw
                 + Bp * na * 128)
    transcendentals = T * Bp * 3 * nh + Bp * (nh0p + nh1p)
    bytes_accessed = 4 * (T * Bp * nx + Bp * na + nx * 3 * nh + 3 * nh
                          + nh * 3 * nh + 3 * nh
                          + nh * nh0p + nh0p + nh0p * nh1p + nh1p
                          + nh1p * head_pw + head_pw + Bp * out_w)

    # No grid: everything is tiny and VMEM-resident (~2 MiB << 64 MiB even on
    # v7x); the recurrence is an in-kernel unrolled loop.
    out = pl.pallas_call(
        functools.partial(nf_full_kernel, ny),
        out_shape=jax.ShapeDtypeStruct((Bp, out_w), f32),
        in_specs=[vmem_spec] * 6 + [hbm_spec] * 6,
        out_specs=vmem_spec,
        scratch_shapes=[
            pltpu.VMEM((T * Bp, 3 * nh), f32),           # hoisted input proj
            pltpu.VMEM((nh, nh0p), f32), pltpu.VMEM((1, nh0p), f32),
            pltpu.VMEM((nh0p, nh1p), f32), pltpu.VMEM((1, nh1p), f32),
            pltpu.VMEM((nh1p, head_pw), f32), pltpu.VMEM((1, head_pw), f32),
            pltpu.SemaphoreType.DMA((6,)),
        ],
        cost_estimate=pl.CostEstimate(flops=flops,
                                      transcendentals=transcendentals,
                                      bytes_accessed=bytes_accessed),
    )(x2p, zt,
      params['w_ih'], params['b_ih'], params['w_hh'], params['b_hh'],
      w1p, b1p, w2p, b2p, whp, bhp)

    out = out[:B]
    # Row-major views, identical to PyTorch .view(-1, ny, ny) / .view(-1, ny).
    A = out[:, :na].reshape(B * nk, ny, ny)
    bvec = out[:, na:na + nb].reshape(B * nk, ny)
    y = out[:, head_pw:head_pw + nb].reshape(B * nk, ny)
    return y, A, bvec


# --------------------------------------------------------------------------
# Deterministic parameter init (shapes from NFFull.__init__, PyTorch-style U(-k,k))
# Weights are stored pre-fused: GRU gates [r|z|n] along 3*nh, heads [A|b].
# --------------------------------------------------------------------------
def init_params(key, nx, ny, nk, nh_rnn, nh_mlp):
    keys = iter(jax.random.split(key, 16))

    def uni(shape, k):
        return jax.random.uniform(next(keys), shape, jnp.float32, -k, k)

    kr = 1.0 / float(np.sqrt(nh_rnn))
    nh0, nh1 = nh_mlp
    k1 = 1.0 / float(np.sqrt(nh_rnn))
    k2 = 1.0 / float(np.sqrt(nh0))
    kh = 1.0 / float(np.sqrt(nh1))
    na = ny * ny * nk
    nb = ny * nk
    return {
        'w_ih': uni((nx, 3 * nh_rnn), kr), 'b_ih': uni((1, 3 * nh_rnn), kr),
        'w_hh': uni((nh_rnn, 3 * nh_rnn), kr), 'b_hh': uni((1, 3 * nh_rnn), kr),
        'w1': uni((nh_rnn, nh0), k1), 'b1': uni((1, nh0), k1),
        'w2': uni((nh0, nh1), k2), 'b2': uni((1, nh1), k2),
        'w_head': uni((nh1, na + nb), kh), 'b_head': uni((1, na + nb), kh),
    }


# --------------------------------------------------------------------------
# Pure-JAX reference (same math, no Pallas) for the correctness check
# --------------------------------------------------------------------------
def forward_ref(x, z, params, nk, ny):
    g = params
    nh = g['w_hh'].shape[0]
    T, B, nx = x.shape

    def step(h, xt):
        xi = xt @ g['w_ih'] + g['b_ih']
        hh = h @ g['w_hh'] + g['b_hh']
        r = jax.nn.sigmoid(xi[:, :nh] + hh[:, :nh])
        zz = jax.nn.sigmoid(xi[:, nh:2 * nh] + hh[:, nh:2 * nh])
        n = jnp.tanh(xi[:, 2 * nh:] + r * hh[:, 2 * nh:])
        return (1.0 - zz) * n + zz * h, None

    h0 = jnp.zeros((B, nh), jnp.float32)
    h_x, _ = jax.lax.scan(step, h0, x)
    h1 = jnp.tanh(h_x @ g['w1'] + g['b1'])
    h2 = jnp.tanh(h1 @ g['w2'] + g['b2'])
    head = h2 @ g['w_head'] + g['b_head']
    na = ny * ny * nk
    A = head[:, :na].reshape(B * nk, ny, ny)
    bvec = head[:, na:].reshape(B * nk, ny)
    z_rep = jnp.repeat(z, nk, axis=0)
    y = jnp.einsum('nij,nj->ni', A, z_rep) + bvec
    return y, A, bvec


if __name__ == "__main__":
    # Small, module-consistent shapes (specs defaults: nh_rnn=128, nh_mlp=[300,200]).
    nx, ny, nk = 16, 8, 4
    T, B = 8, 2
    nh_rnn = 128
    nh_mlp = [300, 200]
    # fix_first=False, x_birnn=False (specs defaults) -> nac == nk.
    # TODO(synk): fix_first=True branch (identity-prepended A, zero-prepended b) not implemented.

    key = jax.random.PRNGKey(0)
    kp, kx, kz = jax.random.split(key, 3)
    params = init_params(kp, nx, ny, nk, nh_rnn, nh_mlp)
    x = jax.random.normal(kx, (T, B, nx), jnp.float32)
    # z is provided explicitly (deterministic); z=None would draw randn((B, ny, 1)).
    z = jax.random.normal(kz, (B, ny), jnp.float32)

    fwd = jax.jit(nf_full_forward, static_argnums=(3, 4))
    y, A, b = jax.block_until_ready(fwd(x, z, params, nk, ny))

    assert y.shape == (B * nk, ny)
    assert A.shape == (B * nk, ny, ny)
    assert b.shape == (B * nk, ny)
    assert bool(jnp.all(jnp.isfinite(y)))

    # Reference at highest matmul precision.  Tolerance 2e-4: the kernel uses
    # the MXU's default f32 pass structure (per the review, a slightly looser
    # tolerance is preferred over depending on exact-precision parity).
    with jax.default_matmul_precision("highest"):
        y_ref, A_ref, b_ref = forward_ref(x, z, params, nk, ny)
    np.testing.assert_allclose(np.asarray(A), np.asarray(A_ref), rtol=2e-4, atol=2e-4)
    np.testing.assert_allclose(np.asarray(b), np.asarray(b_ref), rtol=2e-4, atol=2e-4)
    np.testing.assert_allclose(np.asarray(y), np.asarray(y_ref), rtol=2e-4, atol=2e-4)

    print("KERNEL_OK")
</pallas_src>

<mosaic_0001>
module attributes {stable_mosaic.version = 11 : i64} {
  func.func @nf_full_kernel(%arg0: memref<64x16xf32, #tpu.memory_space<vmem>>, %arg1: memref<8x256xf32, #tpu.memory_space<vmem>>, %arg2: memref<16x384xf32, #tpu.memory_space<vmem>>, %arg3: memref<1x384xf32, #tpu.memory_space<vmem>>, %arg4: memref<128x384xf32, #tpu.memory_space<vmem>>, %arg5: memref<1x384xf32, #tpu.memory_space<vmem>>, %arg6: memref<128x384xf32, #tpu.memory_space<any>>, %arg7: memref<1x384xf32, #tpu.memory_space<any>>, %arg8: memref<384x256xf32, #tpu.memory_space<any>>, %arg9: memref<1x256xf32, #tpu.memory_space<any>>, %arg10: memref<256x384xf32, #tpu.memory_space<any>>, %arg11: memref<1x384xf32, #tpu.memory_space<any>>, %arg12: memref<8x512xf32, #tpu.memory_space<vmem>>, %arg13: memref<64x384xf32, #tpu.memory_space<vmem>>, %arg14: memref<128x384xf32, #tpu.memory_space<vmem>>, %arg15: memref<1x384xf32, #tpu.memory_space<vmem>>, %arg16: memref<384x256xf32, #tpu.memory_space<vmem>>, %arg17: memref<1x256xf32, #tpu.memory_space<vmem>>, %arg18: memref<256x384xf32, #tpu.memory_space<vmem>>, %arg19: memref<1x384xf32, #tpu.memory_space<vmem>>, %arg20: memref<6x!tpu.dma_semaphore, #tpu.memory_space<semaphore_mem>>) attributes {dimension_semantics = [], scalar_prefetch = 0 : i64, scratch_operands = 8 : i64, tpu.core_type = #tpu.core_type<tc>} {
    %c0_i32 = arith.constant 0 : i32
    %0 = tpu.memref_slice %arg20[%c0_i32] : memref<6x!tpu.dma_semaphore, #tpu.memory_space<semaphore_mem>> -> memref<1x!tpu.dma_semaphore, #tpu.memory_space<semaphore_mem>>
    %1 = tpu.memref_squeeze %0 : memref<1x!tpu.dma_semaphore, #tpu.memory_space<semaphore_mem>> -> memref<!tpu.dma_semaphore, #tpu.memory_space<semaphore_mem>>
    tpu.enqueue_dma source(%arg6 : memref<128x384xf32, #tpu.memory_space<any>>) target(%arg14 : memref<128x384xf32, #tpu.memory_space<vmem>>) target_semaphore(%1 : memref<!tpu.dma_semaphore, #tpu.memory_space<semaphore_mem>>)
    %c1_i32 = arith.constant 1 : i32
    %2 = tpu.memref_slice %arg20[%c1_i32] : memref<6x!tpu.dma_semaphore, #tpu.memory_space<semaphore_mem>> -> memref<1x!tpu.dma_semaphore, #tpu.memory_space<semaphore_mem>>
    %3 = tpu.memref_squeeze %2 : memref<1x!tpu.dma_semaphore, #tpu.memory_space<semaphore_mem>> -> memref<!tpu.dma_semaphore, #tpu.memory_space<semaphore_mem>>
    tpu.enqueue_dma source(%arg7 : memref<1x384xf32, #tpu.memory_space<any>>) target(%arg15 : memref<1x384xf32, #tpu.memory_space<vmem>>) target_semaphore(%3 : memref<!tpu.dma_semaphore, #tpu.memory_space<semaphore_mem>>)
    %c2_i32 = arith.constant 2 : i32
    %4 = tpu.memref_slice %arg20[%c2_i32] : memref<6x!tpu.dma_semaphore, #tpu.memory_space<semaphore_mem>> -> memref<1x!tpu.dma_semaphore, #tpu.memory_space<semaphore_mem>>
    %5 = tpu.memref_squeeze %4 : memref<1x!tpu.dma_semaphore, #tpu.memory_space<semaphore_mem>> -> memref<!tpu.dma_semaphore, #tpu.memory_space<semaphore_mem>>
    tpu.enqueue_dma source(%arg8 : memref<384x256xf32, #tpu.memory_space<any>>) target(%arg16 : memref<384x256xf32, #tpu.memory_space<vmem>>) target_semaphore(%5 : memref<!tpu.dma_semaphore, #tpu.memory_space<semaphore_mem>>)
    %c3_i32 = arith.constant 3 : i32
    %6 = tpu.memref_slice %arg20[%c3_i32] : memref<6x!tpu.dma_semaphore, #tpu.memory_space<semaphore_mem>> -> memref<1x!tpu.dma_semaphore, #tpu.memory_space<semaphore_mem>>
    %7 = tpu.memref_squeeze %6 : memref<1x!tpu.dma_semaphore, #tpu.memory_space<semaphore_mem>> -> memref<!tpu.dma_semaphore, #tpu.memory_space<semaphore_mem>>
    tpu.enqueue_dma source(%arg9 : memref<1x256xf32, #tpu.memory_space<any>>) target(%arg17 : memref<1x256xf32, #tpu.memory_space<vmem>>) target_semaphore(%7 : memref<!tpu.dma_semaphore, #tpu.memory_space<semaphore_mem>>)
    %c4_i32 = arith.constant 4 : i32
    %8 = tpu.memref_slice %arg20[%c4_i32] : memref<6x!tpu.dma_semaphore, #tpu.memory_space<semaphore_mem>> -> memref<1x!tpu.dma_semaphore, #tpu.memory_space<semaphore_mem>>
    %9 = tpu.memref_squeeze %8 : memref<1x!tpu.dma_semaphore, #tpu.memory_space<semaphore_mem>> -> memref<!tpu.dma_semaphore, #tpu.memory_space<semaphore_mem>>
    tpu.enqueue_dma source(%arg10 : memref<256x384xf32, #tpu.memory_space<any>>) target(%arg18 : memref<256x384xf32, #tpu.memory_space<vmem>>) target_semaphore(%9 : memref<!tpu.dma_semaphore, #tpu.memory_space<semaphore_mem>>)
    %c5_i32 = arith.constant 5 : i32
    %10 = tpu.memref_slice %arg20[%c5_i32] : memref<6x!tpu.dma_semaphore, #tpu.memory_space<semaphore_mem>> -> memref<1x!tpu.dma_semaphore, #tpu.memory_space<semaphore_mem>>
    %11 = tpu.memref_squeeze %10 : memref<1x!tpu.dma_semaphore, #tpu.memory_space<semaphore_mem>> -> memref<!tpu.dma_semaphore, #tpu.memory_space<semaphore_mem>>
    tpu.enqueue_dma source(%arg11 : memref<1x384xf32, #tpu.memory_space<any>>) target(%arg19 : memref<1x384xf32, #tpu.memory_space<vmem>>) target_semaphore(%11 : memref<!tpu.dma_semaphore, #tpu.memory_space<semaphore_mem>>)
    %c0 = arith.constant 0 : index
    %c0_0 = arith.constant 0 : index
    %12 = vector.load %arg0[%c0, %c0_0] : memref<64x16xf32, #tpu.memory_space<vmem>>, vector<64x16xf32>
    %c0_1 = arith.constant 0 : index
    %c0_2 = arith.constant 0 : index
    %13 = vector.load %arg2[%c0_1, %c0_2] : memref<16x384xf32, #tpu.memory_space<vmem>>, vector<16x384xf32>
    %cst = arith.constant dense<0.000000e+00> : vector<64x384xf32>
    %14 = tpu.matmul %12, %13, %cst {dimension_numbers = #tpu.dot_dimension_numbers<[1], [0], [0], [1], [0, 0, 1, 1], [], []>} : vector<64x16xf32>, vector<16x384xf32>, vector<64x384xf32> -> vector<64x384xf32>
    %c0_3 = arith.constant 0 : index
    %c0_4 = arith.constant 0 : index
    %15 = vector.load %arg3[%c0_3, %c0_4] : memref<1x384xf32, #tpu.memory_space<vmem>>, vector<1x384xf32>
    %16 = vector.broadcast %15 : vector<1x384xf32> to vector<64x384xf32>
    %17 = arith.addf %14, %16 : vector<64x384xf32>
    %c0_5 = arith.constant 0 : index
    %c0_6 = arith.constant 0 : index
    %18 = vector.load %arg13[%c0_5, %c0_6] : memref<64x384xf32, #tpu.memory_space<vmem>>, vector<64x384xf32>
    tpu.vector_store %arg13[%c0_5, %c0_6], %17 {strides = array<i32>} : memref<64x384xf32, #tpu.memory_space<vmem>>, vector<64x384xf32>,
    %c0_7 = arith.constant 0 : index
    %c0_8 = arith.constant 0 : index
    %19 = vector.load %arg5[%c0_7, %c0_8] : memref<1x384xf32, #tpu.memory_space<vmem>>, vector<1x384xf32>
    %20 = vector.shape_cast %19 : vector<1x384xf32> to vector<1x384xf32>
    %21 = vector.broadcast %20 : vector<1x384xf32> to vector<8x384xf32>
    %cst_9 = arith.constant 0.000000e+00 : f32
    %22 = vector.broadcast %cst_9 : f32 to vector<8x128xf32>
    %c0_10 = arith.constant 0 : index
    %c0_11 = arith.constant 0 : index
    %23 = vector.load %arg13[%c0_10, %c0_11] : memref<64x384xf32, #tpu.memory_space<vmem>>, vector<8x384xf32>
    %c0_12 = arith.constant 0 : index
    %c0_13 = arith.constant 0 : index
    %24 = vector.load %arg4[%c0_12, %c0_13] : memref<128x384xf32, #tpu.memory_space<vmem>>, vector<128x384xf32>
    %cst_14 = arith.constant dense<0.000000e+00> : vector<8x384xf32>
    %25 = tpu.matmul %22, %24, %cst_14 {dimension_numbers = #tpu.dot_dimension_numbers<[1], [0], [0], [1], [0, 0, 1, 1], [], []>} : vector<8x128xf32>, vector<128x384xf32>, vector<8x384xf32> -> vector<8x384xf32>
    %26 = arith.addf %25, %21 : vector<8x384xf32>
    %27 = vector.extract_strided_slice %23 {offsets = [0, 0], sizes = [8, 128], strides = [1, 1]} : vector<8x384xf32> to vector<8x128xf32>
    %28 = vector.extract_strided_slice %26 {offsets = [0, 0], sizes = [8, 128], strides = [1, 1]} : vector<8x384xf32> to vector<8x128xf32>
    %29 = arith.addf %27, %28 : vector<8x128xf32>
    %30 = arith.negf %29 : vector<8x128xf32>
    %31 = math.exp %30 : vector<8x128xf32>
    %cst_15 = arith.constant 1.000000e+00 : f32
    %32 = vector.broadcast %cst_15 : f32 to vector<8x128xf32>
    %33 = arith.addf %32, %31 : vector<8x128xf32>
    %34 = arith.divf %32, %33 : vector<8x128xf32>
    %35 = vector.extract_strided_slice %23 {offsets = [0, 128], sizes = [8, 128], strides = [1, 1]} : vector<8x384xf32> to vector<8x128xf32>
    %36 = vector.extract_strided_slice %26 {offsets = [0, 128], sizes = [8, 128], strides = [1, 1]} : vector<8x384xf32> to vector<8x128xf32>
    %37 = arith.addf %35, %36 : vector<8x128xf32>
    %38 = arith.negf %37 : vector<8x128xf32>
    %39 = math.exp %38 : vector<8x128xf32>
    %cst_16 = arith.constant 1.000000e+00 : f32
    %40 = vector.broadcast %cst_16 : f32 to vector<8x128xf32>
    %41 = arith.addf %40, %39 : vector<8x128xf32>
    %42 = arith.divf %40, %41 : vector<8x128xf32>
    %43 = vector.extract_strided_slice %23 {offsets = [0, 256], sizes = [8, 128], strides = [1, 1]} : vector<8x384xf32> to vector<8x128xf32>
    %44 = vector.extract_strided_slice %26 {offsets = [0, 256], sizes = [8, 128], strides = [1, 1]} : vector<8x384xf32> to vector<8x128xf32>
    %45 = arith.mulf %34, %44 : vector<8x128xf32>
    %46 = arith.addf %43, %45 : vector<8x128xf32>
    %47 = math.tanh %46 : vector<8x128xf32>
    %cst_17 = arith.constant 1.000000e+00 : f32
    %48 = vector.broadcast %cst_17 : f32 to vector<8x128xf32>
    %49 = arith.subf %48, %42 : vector<8x128xf32>
    %50 = arith.mulf %49, %47 : vector<8x128xf32>
    %51 = arith.mulf %42, %22 : vector<8x128xf32>
    %52 = arith.addf %50, %51 : vector<8x128xf32>
    %c8 = arith.constant 8 : index
    %c0_18 = arith.constant 0 : index
    %53 = vector.load %arg13[%c8, %c0_18] : memref<64x384xf32, #tpu.memory_space<vmem>>, vector<8x384xf32>
    %c0_19 = arith.constant 0 : index
    %c0_20 = arith.constant 0 : index
    %54 = vector.load %arg4[%c0_19, %c0_20] : memref<128x384xf32, #tpu.memory_space<vmem>>, vector<128x384xf32>
    %cst_21 = arith.constant dense<0.000000e+00> : vector<8x384xf32>
    %55 = tpu.matmul %52, %54, %cst_21 {dimension_numbers = #tpu.dot_dimension_numbers<[1], [0], [0], [1], [0, 0, 1, 1], [], []>} : vector<8x128xf32>, vector<128x384xf32>, vector<8x384xf32> -> vector<8x384xf32>
    %56 = arith.addf %55, %21 : vector<8x384xf32>
    %57 = vector.extract_strided_slice %53 {offsets = [0, 0], sizes = [8, 128], strides = [1, 1]} : vector<8x384xf32> to vector<8x128xf32>
    %58 = vector.extract_strided_slice %56 {offsets = [0, 0], sizes = [8, 128], strides = [1, 1]} : vector<8x384xf32> to vector<8x128xf32>
    %59 = arith.addf %57, %58 : vector<8x128xf32>
    %60 = arith.negf %59 : vector<8x128xf32>
    %61 = math.exp %60 : vector<8x128xf32>
    %cst_22 = arith.constant 1.000000e+00 : f32
    %62 = vector.broadcast %cst_22 : f32 to vector<8x128xf32>
    %63 = arith.addf %62, %61 : vector<8x128xf32>
    %64 = arith.divf %62, %63 : vector<8x128xf32>
    %65 = vector.extract_strided_slice %53 {offsets = [0, 128], sizes = [8, 128], strides = [1, 1]} : vector<8x384xf32> to vector<8x128xf32>
    %66 = vector.extract_strided_slice %56 {offsets = [0, 128], sizes = [8, 128], strides = [1, 1]} : vector<8x384xf32> to vector<8x128xf32>
    %67 = arith.addf %65, %66 : vector<8x128xf32>
    %68 = arith.negf %67 : vector<8x128xf32>
    %69 = math.exp %68 : vector<8x128xf32>
    %cst_23 = arith.constant 1.000000e+00 : f32
    %70 = vector.broadcast %cst_23 : f32 to vector<8x128xf32>
    %71 = arith.addf %70, %69 : vector<8x128xf32>
    %72 = arith.divf %70, %71 : vector<8x128xf32>
    %73 = vector.extract_strided_slice %53 {offsets = [0, 256], sizes = [8, 128], strides = [1, 1]} : vector<8x384xf32> to vector<8x128xf32>
    %74 = vector.extract_strided_slice %56 {offsets = [0, 256], sizes = [8, 128], strides = [1, 1]} : vector<8x384xf32> to vector<8x128xf32>
    %75 = arith.mulf %64, %74 : vector<8x128xf32>
    %76 = arith.addf %73, %75 : vector<8x128xf32>
    %77 = math.tanh %76 : vector<8x128xf32>
    %cst_24 = arith.constant 1.000000e+00 : f32
    %78 = vector.broadcast %cst_24 : f32 to vector<8x128xf32>
    %79 = arith.subf %78, %72 : vector<8x128xf32>
    %80 = arith.mulf %79, %77 : vector<8x128xf32>
    %81 = arith.mulf %72, %52 : vector<8x128xf32>
    %82 = arith.addf %80, %81 : vector<8x128xf32>
    %c16 = arith.constant 16 : index
    %c0_25 = arith.constant 0 : index
    %83 = vector.load %arg13[%c16, %c0_25] : memref<64x384xf32, #tpu.memory_space<vmem>>, vector<8x384xf32>
    %c0_26 = arith.constant 0 : index
    %c0_27 = arith.constant 0 : index
    %84 = vector.load %arg4[%c0_26, %c0_27] : memref<128x384xf32, #tpu.memory_space<vmem>>, vector<128x384xf32>
    %cst_28 = arith.constant dense<0.000000e+00> : vector<8x384xf32>
    %85 = tpu.matmul %82, %84, %cst_28 {dimension_numbers = #tpu.dot_dimension_numbers<[1], [0], [0], [1], [0, 0, 1, 1], [], []>} : vector<8x128xf32>, vector<128x384xf32>, vector<8x384xf32> -> vector<8x384xf32>
    %86 = arith.addf %85, %21 : vector<8x384xf32>
    %87 = vector.extract_strided_slice %83 {offsets = [0, 0], sizes = [8, 128], strides = [1, 1]} : vector<8x384xf32> to vector<8x128xf32>
    %88 = vector.extract_strided_slice %86 {offsets = [0, 0], sizes = [8, 128], strides = [1, 1]} : vector<8x384xf32> to vector<8x128xf32>
    %89 = arith.addf %87, %88 : vector<8x128xf32>
    %90 = arith.negf %89 : vector<8x128xf32>
    %91 = math.exp %90 : vector<8x128xf32>
    %cst_29 = arith.constant 1.000000e+00 : f32
    %92 = vector.broadcast %cst_29 : f32 to vector<8x128xf32>
    %93 = arith.addf %92, %91 : vector<8x128xf32>
    %94 = arith.divf %92, %93 : vector<8x128xf32>
    %95 = vector.extract_strided_slice %83 {offsets = [0, 128], sizes = [8, 128], strides = [1, 1]} : vector<8x384xf32> to vector<8x128xf32>
    %96 = vector.extract_strided_slice %86 {offsets = [0, 128], sizes = [8, 128], strides = [1, 1]} : vector<8x384xf32> to vector<8x128xf32>
    %97 = arith.addf %95, %96 : vector<8x128xf32>
    %98 = arith.negf %97 : vector<8x128xf32>
    %99 = math.exp %98 : vector<8x128xf32>
    %cst_30 = arith.constant 1.000000e+00 : f32
    %100 = vector.broadcast %cst_30 : f32 to vector<8x128xf32>
    %101 = arith.addf %100, %99 : vector<8x128xf32>
    %102 = arith.divf %100, %101 : vector<8x128xf32>
    %103 = vector.extract_strided_slice %83 {offsets = [0, 256], sizes = [8, 128], strides = [1, 1]} : vector<8x384xf32> to vector<8x128xf32>
    %104 = vector.extract_strided_slice %86 {offsets = [0, 256], sizes = [8, 128], strides = [1, 1]} : vector<8x384xf32> to vector<8x128xf32>
    %105 = arith.mulf %94, %104 : vector<8x128xf32>
    %106 = arith.addf %103, %105 : vector<8x128xf32>
    %107 = math.tanh %106 : vector<8x128xf32>
    %cst_31 = arith.constant 1.000000e+00 : f32
    %108 = vector.broadcast %cst_31 : f32 to vector<8x128xf32>
    %109 = arith.subf %108, %102 : vector<8x128xf32>
    %110 = arith.mulf %109, %107 : vector<8x128xf32>
    %111 = arith.mulf %102, %82 : vector<8x128xf32>
    %112 = arith.addf %110, %111 : vector<8x128xf32>
    %c24 = arith.constant 24 : index
    %c0_32 = arith.constant 0 : index
    %113 = vector.load %arg13[%c24, %c0_32] : memref<64x384xf32, #tpu.memory_space<vmem>>, vector<8x384xf32>
    %c0_33 = arith.constant 0 : index
    %c0_34 = arith.constant 0 : index
    %114 = vector.load %arg4[%c0_33, %c0_34] : memref<128x384xf32, #tpu.memory_space<vmem>>, vector<128x384xf32>
    %cst_35 = arith.constant dense<0.000000e+00> : vector<8x384xf32>
    %115 = tpu.matmul %112, %114, %cst_35 {dimension_numbers = #tpu.dot_dimension_numbers<[1], [0], [0], [1], [0, 0, 1, 1], [], []>} : vector<8x128xf32>, vector<128x384xf32>, vector<8x384xf32> -> vector<8x384xf32>
    %116 = arith.addf %115, %21 : vector<8x384xf32>
    %117 = vector.extract_strided_slice %113 {offsets = [0, 0], sizes = [8, 128], strides = [1, 1]} : vector<8x384xf32> to vector<8x128xf32>
    %118 = vector.extract_strided_slice %116 {offsets = [0, 0], sizes = [8, 128], strides = [1, 1]} : vector<8x384xf32> to vector<8x128xf32>
    %119 = arith.addf %117, %118 : vector<8x128xf32>
    %120 = arith.negf %119 : vector<8x128xf32>
    %121 = math.exp %120 : vector<8x128xf32>
    %cst_36 = arith.constant 1.000000e+00 : f32
    %122 = vector.broadcast %cst_36 : f32 to vector<8x128xf32>
    %123 = arith.addf %122, %121 : vector<8x128xf32>
    %124 = arith.divf %122, %123 : vector<8x128xf32>
    %125 = vector.extract_strided_slice %113 {offsets = [0, 128], sizes = [8, 128], strides = [1, 1]} : vector<8x384xf32> to vector<8x128xf32>
    %126 = vector.extract_strided_slice %116 {offsets = [0, 128], sizes = [8, 128], strides = [1, 1]} : vector<8x384xf32> to vector<8x128xf32>
    %127 = arith.addf %125, %126 : vector<8x128xf32>
    %128 = arith.negf %127 : vector<8x128xf32>
    %129 = math.exp %128 : vector<8x128xf32>
    %cst_37 = arith.constant 1.000000e+00 : f32
    %130 = vector.broadcast %cst_37 : f32 to vector<8x128xf32>
    %131 = arith.addf %130, %129 : vector<8x128xf32>
    %132 = arith.divf %130, %131 : vector<8x128xf32>
    %133 = vector.extract_strided_slice %113 {offsets = [0, 256], sizes = [8, 128], strides = [1, 1]} : vector<8x384xf32> to vector<8x128xf32>
    %134 = vector.extract_strided_slice %116 {offsets = [0, 256], sizes = [8, 128], strides = [1, 1]} : vector<8x384xf32> to vector<8x128xf32>
    %135 = arith.mulf %124, %134 : vector<8x128xf32>
    %136 = arith.addf %133, %135 : vector<8x128xf32>
    %137 = math.tanh %136 : vector<8x128xf32>
    %cst_38 = arith.constant 1.000000e+00 : f32
    %138 = vector.broadcast %cst_38 : f32 to vector<8x128xf32>
    %139 = arith.subf %138, %132 : vector<8x128xf32>
    %140 = arith.mulf %139, %137 : vector<8x128xf32>
    %141 = arith.mulf %132, %112 : vector<8x128xf32>
    %142 = arith.addf %140, %141 : vector<8x128xf32>
    %c32 = arith.constant 32 : index
    %c0_39 = arith.constant 0 : index
    %143 = vector.load %arg13[%c32, %c0_39] : memref<64x384xf32, #tpu.memory_space<vmem>>, vector<8x384xf32>
    %c0_40 = arith.constant 0 : index
    %c0_41 = arith.constant 0 : index
    %144 = vector.load %arg4[%c0_40, %c0_41] : memref<128x384xf32, #tpu.memory_space<vmem>>, vector<128x384xf32>
    %cst_42 = arith.constant dense<0.000000e+00> : vector<8x384xf32>
    %145 = tpu.matmul %142, %144, %cst_42 {dimension_numbers = #tpu.dot_dimension_numbers<[1], [0], [0], [1], [0, 0, 1, 1], [], []>} : vector<8x128xf32>, vector<128x384xf32>, vector<8x384xf32> -> vector<8x384xf32>
    %146 = arith.addf %145, %21 : vector<8x384xf32>
    %147 = vector.extract_strided_slice %143 {offsets = [0, 0], sizes = [8, 128], strides = [1, 1]} : vector<8x384xf32> to vector<8x128xf32>
    %148 = vector.extract_strided_slice %146 {offsets = [0, 0], sizes = [8, 128], strides = [1, 1]} : vector<8x384xf32> to vector<8x128xf32>
    %149 = arith.addf %147, %148 : vector<8x128xf32>
    %150 = arith.negf %149 : vector<8x128xf32>
    %151 = math.exp %150 : vector<8x128xf32>
    %cst_43 = arith.constant 1.000000e+00 : f32
    %152 = vector.broadcast %cst_43 : f32 to vector<8x128xf32>
    %153 = arith.addf %152, %151 : vector<8x128xf32>
    %154 = arith.divf %152, %153 : vector<8x128xf32>
    %155 = vector.extract_strided_slice %143 {offsets = [0, 128], sizes = [8, 128], strides = [1, 1]} : vector<8x384xf32> to vector<8x128xf32>
    %156 = vector.extract_strided_slice %146 {offsets = [0, 128], sizes = [8, 128], strides = [1, 1]} : vector<8x384xf32> to vector<8x128xf32>
    %157 = arith.addf %155, %156 : vector<8x128xf32>
    %158 = arith.negf %157 : vector<8x128xf32>
    %159 = math.exp %158 : vector<8x128xf32>
    %cst_44 = arith.constant 1.000000e+00 : f32
    %160 = vector.broadcast %cst_44 : f32 to vector<8x128xf32>
    %161 = arith.addf %160, %159 : vector<8x128xf32>
    %162 = arith.divf %160, %161 : vector<8x128xf32>
    %163 = vector.extract_strided_slice %143 {offsets = [0, 256], sizes = [8, 128], strides = [1, 1]} : vector<8x384xf32> to vector<8x128xf32>
    %164 = vector.extract_strided_slice %146 {offsets = [0, 256], sizes = [8, 128], strides = [1, 1]} : vector<8x384xf32> to vector<8x128xf32>
    %165 = arith.mulf %154, %164 : vector<8x128xf32>
    %166 = arith.addf %163, %165 : vector<8x128xf32>
    %167 = math.tanh %166 : vector<8x128xf32>
    %cst_45 = arith.constant 1.000000e+00 : f32
    %168 = vector.broadcast %cst_45 : f32 to vector<8x128xf32>
    %169 = arith.subf %168, %162 : vector<8x128xf32>
    %170 = arith.mulf %169, %167 : vector<8x128xf32>
    %171 = arith.mulf %162, %142 : vector<8x128xf32>
    %172 = arith.addf %170, %171 : vector<8x128xf32>
    %c40 = arith.constant 40 : index
    %c0_46 = arith.constant 0 : index
    %173 = vector.load %arg13[%c40, %c0_46] : memref<64x384xf32, #tpu.memory_space<vmem>>, vector<8x384xf32>
    %c0_47 = arith.constant 0 : index
    %c0_48 = arith.constant 0 : index
    %174 = vector.load %arg4[%c0_47, %c0_48] : memref<128x384xf32, #tpu.memory_space<vmem>>, vector<128x384xf32>
    %cst_49 = arith.constant dense<0.000000e+00> : vector<8x384xf32>
    %175 = tpu.matmul %172, %174, %cst_49 {dimension_numbers = #tpu.dot_dimension_numbers<[1], [0], [0], [1], [0, 0, 1, 1], [], []>} : vector<8x128xf32>, vector<128x384xf32>, vector<8x384xf32> -> vector<8x384xf32>
    %176 = arith.addf %175, %21 : vector<8x384xf32>
    %177 = vector.extract_strided_slice %173 {offsets = [0, 0], sizes = [8, 128], strides = [1, 1]} : vector<8x384xf32> to vector<8x128xf32>
    %178 = vector.extract_strided_slice %176 {offsets = [0, 0], sizes = [8, 128], strides = [1, 1]} : vector<8x384xf32> to vector<8x128xf32>
    %179 = arith.addf %177, %178 : vector<8x128xf32>
    %180 = arith.negf %179 : vector<8x128xf32>
    %181 = math.exp %180 : vector<8x128xf32>
    %cst_50 = arith.constant 1.000000e+00 : f32
    %182 = vector.broadcast %cst_50 : f32 to vector<8x128xf32>
    %183 = arith.addf %182, %181 : vector<8x128xf32>
    %184 = arith.divf %182, %183 : vector<8x128xf32>
    %185 = vector.extract_strided_slice %173 {offsets = [0, 128], sizes = [8, 128], strides = [1, 1]} : vector<8x384xf32> to vector<8x128xf32>
    %186 = vector.extract_strided_slice %176 {offsets = [0, 128], sizes = [8, 128], strides = [1, 1]} : vector<8x384xf32> to vector<8x128xf32>
    %187 = arith.addf %185, %186 : vector<8x128xf32>
    %188 = arith.negf %187 : vector<8x128xf32>
    %189 = math.exp %188 : vector<8x128xf32>
    %cst_51 = arith.constant 1.000000e+00 : f32
    %190 = vector.broadcast %cst_51 : f32 to vector<8x128xf32>
    %191 = arith.addf %190, %189 : vector<8x128xf32>
    %192 = arith.divf %190, %191 : vector<8x128xf32>
    %193 = vector.extract_strided_slice %173 {offsets = [0, 256], sizes = [8, 128], strides = [1, 1]} : vector<8x384xf32> to vector<8x128xf32>
    %194 = vector.extract_strided_slice %176 {offsets = [0, 256], sizes = [8, 128], strides = [1, 1]} : vector<8x384xf32> to vector<8x128xf32>
    %195 = arith.mulf %184, %194 : vector<8x128xf32>
    %196 = arith.addf %193, %195 : vector<8x128xf32>
    %197 = math.tanh %196 : vector<8x128xf32>
    %cst_52 = arith.constant 1.000000e+00 : f32
    %198 = vector.broadcast %cst_52 : f32 to vector<8x128xf32>
    %199 = arith.subf %198, %192 : vector<8x128xf32>
    %200 = arith.mulf %199, %197 : vector<8x128xf32>
    %201 = arith.mulf %192, %172 : vector<8x128xf32>
    %202 = arith.addf %200, %201 : vector<8x128xf32>
    %c48 = arith.constant 48 : index
    %c0_53 = arith.constant 0 : index
    %203 = vector.load %arg13[%c48, %c0_53] : memref<64x384xf32, #tpu.memory_space<vmem>>, vector<8x384xf32>
    %c0_54 = arith.constant 0 : index
    %c0_55 = arith.constant 0 : index
    %204 = vector.load %arg4[%c0_54, %c0_55] : memref<128x384xf32, #tpu.memory_space<vmem>>, vector<128x384xf32>
    %cst_56 = arith.constant dense<0.000000e+00> : vector<8x384xf32>
    %205 = tpu.matmul %202, %204, %cst_56 {dimension_numbers = #tpu.dot_dimension_numbers<[1], [0], [0], [1], [0, 0, 1, 1], [], []>} : vector<8x128xf32>, vector<128x384xf32>, vector<8x384xf32> -> vector<8x384xf32>
    %206 = arith.addf %205, %21 : vector<8x384xf32>
    %207 = vector.extract_strided_slice %203 {offsets = [0, 0], sizes = [8, 128], strides = [1, 1]} : vector<8x384xf32> to vector<8x128xf32>
    %208 = vector.extract_strided_slice %206 {offsets = [0, 0], sizes = [8, 128], strides = [1, 1]} : vector<8x384xf32> to vector<8x128xf32>
    %209 = arith.addf %207, %208 : vector<8x128xf32>
    %210 = arith.negf %209 : vector<8x128xf32>
    %211 = math.exp %210 : vector<8x128xf32>
    %cst_57 = arith.constant 1.000000e+00 : f32
    %212 = vector.broadcast %cst_57 : f32 to vector<8x128xf32>
    %213 = arith.addf %212, %211 : vector<8x128xf32>
    %214 = arith.divf %212, %213 : vector<8x128xf32>
    %215 = vector.extract_strided_slice %203 {offsets = [0, 128], sizes = [8, 128], strides = [1, 1]} : vector<8x384xf32> to vector<8x128xf32>
    %216 = vector.extract_strided_slice %206 {offsets = [0, 128], sizes = [8, 128], strides = [1, 1]} : vector<8x384xf32> to vector<8x128xf32>
    %217 = arith.addf %215, %216 : vector<8x128xf32>
    %218 = arith.negf %217 : vector<8x128xf32>
    %219 = math.exp %218 : vector<8x128xf32>
    %cst_58 = arith.constant 1.000000e+00 : f32
    %220 = vector.broadcast %cst_58 : f32 to vector<8x128xf32>
    %221 = arith.addf %220, %219 : vector<8x128xf32>
    %222 = arith.divf %220, %221 : vector<8x128xf32>
    %223 = vector.extract_strided_slice %203 {offsets = [0, 256], sizes = [8, 128], strides = [1, 1]} : vector<8x384xf32> to vector<8x128xf32>
    %224 = vector.extract_strided_slice %206 {offsets = [0, 256], sizes = [8, 128], strides = [1, 1]} : vector<8x384xf32> to vector<8x128xf32>
    %225 = arith.mulf %214, %224 : vector<8x128xf32>
    %226 = arith.addf %223, %225 : vector<8x128xf32>
    %227 = math.tanh %226 : vector<8x128xf32>
    %cst_59 = arith.constant 1.000000e+00 : f32
    %228 = vector.broadcast %cst_59 : f32 to vector<8x128xf32>
    %229 = arith.subf %228, %222 : vector<8x128xf32>
    %230 = arith.mulf %229, %227 : vector<8x128xf32>
    %231 = arith.mulf %222, %202 : vector<8x128xf32>
    %232 = arith.addf %230, %231 : vector<8x128xf32>
    %c56 = arith.constant 56 : index
    %c0_60 = arith.constant 0 : index
    %233 = vector.load %arg13[%c56, %c0_60] : memref<64x384xf32, #tpu.memory_space<vmem>>, vector<8x384xf32>
    %c0_61 = arith.constant 0 : index
    %c0_62 = arith.constant 0 : index
    %234 = vector.load %arg4[%c0_61, %c0_62] : memref<128x384xf32, #tpu.memory_space<vmem>>, vector<128x384xf32>
    %cst_63 = arith.constant dense<0.000000e+00> : vector<8x384xf32>
    %235 = tpu.matmul %232, %234, %cst_63 {dimension_numbers = #tpu.dot_dimension_numbers<[1], [0], [0], [1], [0, 0, 1, 1], [], []>} : vector<8x128xf32>, vector<128x384xf32>, vector<8x384xf32> -> vector<8x384xf32>
    %236 = arith.addf %235, %21 : vector<8x384xf32>
    %237 = vector.extract_strided_slice %233 {offsets = [0, 0], sizes = [8, 128], strides = [1, 1]} : vector<8x384xf32> to vector<8x128xf32>
    %238 = vector.extract_strided_slice %236 {offsets = [0, 0], sizes = [8, 128], strides = [1, 1]} : vector<8x384xf32> to vector<8x128xf32>
    %239 = arith.addf %237, %238 : vector<8x128xf32>
    %240 = arith.negf %239 : vector<8x128xf32>
    %241 = math.exp %240 : vector<8x128xf32>
    %cst_64 = arith.constant 1.000000e+00 : f32
    %242 = vector.broadcast %cst_64 : f32 to vector<8x128xf32>
    %243 = arith.addf %242, %241 : vector<8x128xf32>
    %244 = arith.divf %242, %243 : vector<8x128xf32>
    %245 = vector.extract_strided_slice %233 {offsets = [0, 128], sizes = [8, 128], strides = [1, 1]} : vector<8x384xf32> to vector<8x128xf32>
    %246 = vector.extract_strided_slice %236 {offsets = [0, 128], sizes = [8, 128], strides = [1, 1]} : vector<8x384xf32> to vector<8x128xf32>
    %247 = arith.addf %245, %246 : vector<8x128xf32>
    %248 = arith.negf %247 : vector<8x128xf32>
    %249 = math.exp %248 : vector<8x128xf32>
    %cst_65 = arith.constant 1.000000e+00 : f32
    %250 = vector.broadcast %cst_65 : f32 to vector<8x128xf32>
    %251 = arith.addf %250, %249 : vector<8x128xf32>
    %252 = arith.divf %250, %251 : vector<8x128xf32>
    %253 = vector.extract_strided_slice %233 {offsets = [0, 256], sizes = [8, 128], strides = [1, 1]} : vector<8x384xf32> to vector<8x128xf32>
    %254 = vector.extract_strided_slice %236 {offsets = [0, 256], sizes = [8, 128], strides = [1, 1]} : vector<8x384xf32> to vector<8x128xf32>
    %255 = arith.mulf %244, %254 : vector<8x128xf32>
    %256 = arith.addf %253, %255 : vector<8x128xf32>
    %257 = math.tanh %256 : vector<8x128xf32>
    %cst_66 = arith.constant 1.000000e+00 : f32
    %258 = vector.broadcast %cst_66 : f32 to vector<8x128xf32>
    %259 = arith.subf %258, %252 : vector<8x128xf32>
    %260 = arith.mulf %259, %257 : vector<8x128xf32>
    %261 = arith.mulf %252, %232 : vector<8x128xf32>
    %262 = arith.addf %260, %261 : vector<8x128xf32>
    %c0_i32_67 = arith.constant 0 : i32
    %263 = tpu.memref_slice %arg20[%c0_i32_67] : memref<6x!tpu.dma_semaphore, #tpu.memory_space<semaphore_mem>> -> memref<1x!tpu.dma_semaphore, #tpu.memory_space<semaphore_mem>>
    %264 = tpu.memref_squeeze %263 : memref<1x!tpu.dma_semaphore, #tpu.memory_space<semaphore_mem>> -> memref<!tpu.dma_semaphore, #tpu.memory_space<semaphore_mem>>
    tpu.wait_dma2 semaphore(%264 : memref<!tpu.dma_semaphore, #tpu.memory_space<semaphore_mem>>) src(%arg6 : memref<128x384xf32, #tpu.memory_space<any>>) dst(%arg14 : memref<128x384xf32, #tpu.memory_space<vmem>>)
    %c1_i32_68 = arith.constant 1 : i32
    %265 = tpu.memref_slice %arg20[%c1_i32_68] : memref<6x!tpu.dma_semaphore, #tpu.memory_space<semaphore_mem>> -> memref<1x!tpu.dma_semaphore, #tpu.memory_space<semaphore_mem>>
    %266 = tpu.memref_squeeze %265 : memref<1x!tpu.dma_semaphore, #tpu.memory_space<semaphore_mem>> -> memref<!tpu.dma_semaphore, #tpu.memory_space<semaphore_mem>>
    tpu.wait_dma2 semaphore(%266 : memref<!tpu.dma_semaphore, #tpu.memory_space<semaphore_mem>>) src(%arg7 : memref<1x384xf32, #tpu.memory_space<any>>) dst(%arg15 : memref<1x384xf32, #tpu.memory_space<vmem>>)
    %c2_i32_69 = arith.constant 2 : i32
    %267 = tpu.memref_slice %arg20[%c2_i32_69] : memref<6x!tpu.dma_semaphore, #tpu.memory_space<semaphore_mem>> -> memref<1x!tpu.dma_semaphore, #tpu.memory_space<semaphore_mem>>
    %268 = tpu.memref_squeeze %267 : memref<1x!tpu.dma_semaphore, #tpu.memory_space<semaphore_mem>> -> memref<!tpu.dma_semaphore, #tpu.memory_space<semaphore_mem>>
    tpu.wait_dma2 semaphore(%268 : memref<!tpu.dma_semaphore, #tpu.memory_space<semaphore_mem>>) src(%arg8 : memref<384x256xf32, #tpu.memory_space<any>>) dst(%arg16 : memref<384x256xf32, #tpu.memory_space<vmem>>)
    %c3_i32_70 = arith.constant 3 : i32
    %269 = tpu.memref_slice %arg20[%c3_i32_70] : memref<6x!tpu.dma_semaphore, #tpu.memory_space<semaphore_mem>> -> memref<1x!tpu.dma_semaphore, #tpu.memory_space<semaphore_mem>>
    %270 = tpu.memref_squeeze %269 : memref<1x!tpu.dma_semaphore, #tpu.memory_space<semaphore_mem>> -> memref<!tpu.dma_semaphore, #tpu.memory_space<semaphore_mem>>
    tpu.wait_dma2 semaphore(%270 : memref<!tpu.dma_semaphore, #tpu.memory_space<semaphore_mem>>) src(%arg9 : memref<1x256xf32, #tpu.memory_space<any>>) dst(%arg17 : memref<1x256xf32, #tpu.memory_space<vmem>>)
    %c4_i32_71 = arith.constant 4 : i32
    %271 = tpu.memref_slice %arg20[%c4_i32_71] : memref<6x!tpu.dma_semaphore, #tpu.memory_space<semaphore_mem>> -> memref<1x!tpu.dma_semaphore, #tpu.memory_space<semaphore_mem>>
    %272 = tpu.memref_squeeze %271 : memref<1x!tpu.dma_semaphore, #tpu.memory_space<semaphore_mem>> -> memref<!tpu.dma_semaphore, #tpu.memory_space<semaphore_mem>>
    tpu.wait_dma2 semaphore(%272 : memref<!tpu.dma_semaphore, #tpu.memory_space<semaphore_mem>>) src(%arg10 : memref<256x384xf32, #tpu.memory_space<any>>) dst(%arg18 : memref<256x384xf32, #tpu.memory_space<vmem>>)
    %c5_i32_72 = arith.constant 5 : i32
    %273 = tpu.memref_slice %arg20[%c5_i32_72] : memref<6x!tpu.dma_semaphore, #tpu.memory_space<semaphore_mem>> -> memref<1x!tpu.dma_semaphore, #tpu.memory_space<semaphore_mem>>
    %274 = tpu.memref_squeeze %273 : memref<1x!tpu.dma_semaphore, #tpu.memory_space<semaphore_mem>> -> memref<!tpu.dma_semaphore, #tpu.memory_space<semaphore_mem>>
    tpu.wait_dma2 semaphore(%274 : memref<!tpu.dma_semaphore, #tpu.memory_space<semaphore_mem>>) src(%arg11 : memref<1x384xf32, #tpu.memory_space<any>>) dst(%arg19 : memref<1x384xf32, #tpu.memory_space<vmem>>)
    %c0_73 = arith.constant 0 : index
    %c0_74 = arith.constant 0 : index
    %275 = vector.load %arg14[%c0_73, %c0_74] : memref<128x384xf32, #tpu.memory_space<vmem>>, vector<128x384xf32>
    %cst_75 = arith.constant dense<0.000000e+00> : vector<8x384xf32>
    %276 = tpu.matmul %262, %275, %cst_75 {dimension_numbers = #tpu.dot_dimension_numbers<[1], [0], [0], [1], [0, 0, 1, 1], [], []>} : vector<8x128xf32>, vector<128x384xf32>, vector<8x384xf32> -> vector<8x384xf32>
    %c0_76 = arith.constant 0 : index
    %c0_77 = arith.constant 0 : index
    %277 = vector.load %arg15[%c0_76, %c0_77] : memref<1x384xf32, #tpu.memory_space<vmem>>, vector<1x384xf32>
    %278 = vector.broadcast %277 : vector<1x384xf32> to vector<8x384xf32>
    %279 = arith.addf %276, %278 : vector<8x384xf32>
    %280 = math.tanh %279 : vector<8x384xf32>
    %c0_78 = arith.constant 0 : index
    %c0_79 = arith.constant 0 : index
    %281 = vector.load %arg16[%c0_78, %c0_79] : memref<384x256xf32, #tpu.memory_space<vmem>>, vector<384x256xf32>
    %cst_80 = arith.constant dense<0.000000e+00> : vector<8x256xf32>
    %282 = tpu.matmul %280, %281, %cst_80 {dimension_numbers = #tpu.dot_dimension_numbers<[1], [0], [0], [1], [0, 0, 1, 1], [], []>} : vector<8x384xf32>, vector<384x256xf32>, vector<8x256xf32> -> vector<8x256xf32>
    %c0_81 = arith.constant 0 : index
    %c0_82 = arith.constant 0 : index
    %283 = vector.load %arg17[%c0_81, %c0_82] : memref<1x256xf32, #tpu.memory_space<vmem>>, vector<1x256xf32>
    %284 = vector.broadcast %283 : vector<1x256xf32> to vector<8x256xf32>
    %285 = arith.addf %282, %284 : vector<8x256xf32>
    %286 = math.tanh %285 : vector<8x256xf32>
    %c0_83 = arith.constant 0 : index
    %c0_84 = arith.constant 0 : index
    %287 = vector.load %arg18[%c0_83, %c0_84] : memref<256x384xf32, #tpu.memory_space<vmem>>, vector<256x384xf32>
    %cst_85 = arith.constant dense<0.000000e+00> : vector<8x384xf32>
    %288 = tpu.matmul %286, %287, %cst_85 {dimension_numbers = #tpu.dot_dimension_numbers<[1], [0], [0], [1], [0, 0, 1, 1], [], []>} : vector<8x256xf32>, vector<256x384xf32>, vector<8x384xf32> -> vector<8x384xf32>
    %c0_86 = arith.constant 0 : index
    %c0_87 = arith.constant 0 : index
    %289 = vector.load %arg19[%c0_86, %c0_87] : memref<1x384xf32, #tpu.memory_space<vmem>>, vector<1x384xf32>
    %290 = vector.broadcast %289 : vector<1x384xf32> to vector<8x384xf32>
    %291 = arith.addf %288, %290 : vector<8x384xf32>
    %292 = tpu.iota {dimensions = array<i32: 0>} : vector<256x128xi32>
    %293 = tpu.iota {dimensions = array<i32: 1>} : vector<256x128xi32>
    %c8_i32 = arith.constant 8 : i32
    %294 = vector.broadcast %c8_i32 : i32 to vector<256x128xi32>
    %295 = arith.muli %293, %294 : vector<256x128xi32>
    %296 = arith.cmpi sge, %292, %295 : vector<256x128xi32>
    %c8_i32_88 = arith.constant 8 : i32
    %297 = vector.broadcast %c8_i32_88 : i32 to vector<256x128xi32>
    %298 = arith.muli %293, %297 : vector<256x128xi32>
    %c8_i32_89 = arith.constant 8 : i32
    %299 = vector.broadcast %c8_i32_89 : i32 to vector<256x128xi32>
    %300 = arith.addi %298, %299 : vector<256x128xi32>
    %301 = arith.cmpi slt, %292, %300 : vector<256x128xi32>
    %302 = arith.andi %296, %301 : vector<256x128xi1>
    %cst_90 = arith.constant 1.000000e+00 : f32
    %cst_91 = arith.constant 0.000000e+00 : f32
    %303 = vector.broadcast %cst_90 : f32 to vector<256x128xf32>
    %304 = vector.broadcast %cst_91 : f32 to vector<256x128xf32>
    %305 = arith.select %302, %303, %304 : vector<256x128xi1>, vector<256x128xf32>
    %306 = vector.extract_strided_slice %291 {offsets = [0, 0], sizes = [8, 256], strides = [1, 1]} : vector<8x384xf32> to vector<8x256xf32>
    %c0_92 = arith.constant 0 : index
    %c0_93 = arith.constant 0 : index
    %307 = vector.load %arg1[%c0_92, %c0_93] : memref<8x256xf32, #tpu.memory_space<vmem>>, vector<8x256xf32>
    %308 = arith.mulf %306, %307 : vector<8x256xf32>
    %cst_94 = arith.constant dense<0.000000e+00> : vector<8x128xf32>
    %309 = tpu.matmul %308, %305, %cst_94 {dimension_numbers = #tpu.dot_dimension_numbers<[1], [0], [0], [1], [0, 0, 1, 1], [], []>} : vector<8x256xf32>, vector<256x128xf32>, vector<8x128xf32> -> vector<8x128xf32>
    %310 = vector.extract_strided_slice %291 {offsets = [0, 256], sizes = [8, 128], strides = [1, 1]} : vector<8x384xf32> to vector<8x128xf32>
    %311 = arith.addf %309, %310 : vector<8x128xf32>
    %c0_95 = arith.constant 0 : index
    %c0_96 = arith.constant 0 : index
    %312 = vector.load %arg12[%c0_95, %c0_96] : memref<8x512xf32, #tpu.memory_space<vmem>>, vector<8x384xf32>
    tpu.vector_store %arg12[%c0_95, %c0_96], %291 {strides = array<i32>} : memref<8x512xf32, #tpu.memory_space<vmem>>, vector<8x384xf32>,
    %c0_97 = arith.constant 0 : index
    %c384 = arith.constant 384 : index
    %313 = vector.load %arg12[%c0_97, %c384] : memref<8x512xf32, #tpu.memory_space<vmem>>, vector<8x128xf32>
    tpu.vector_store %arg12[%c0_97, %c384], %311 {strides = array<i32>} : memref<8x512xf32, #tpu.memory_space<vmem>>, vector<8x128xf32>,
    return
  }
}

</mosaic_0001>

<llo_original>
// kernel: tile.9
$region0: #{tile.9}
  %s0 = inlined_call_operand.vmem [shape: f32[2,32,8], index: 0, kind: input, shape index: {}]
  %s1 = inlined_call_operand.vmem [shape: f32[2,256], index: 1, kind: output, shape index: {}]
  $region1: #{tile.9} parent=0
    #allocation0 [shape = 'u8[8192]{0}', space=vmem, size = 0x2000, scoped, tag = 'scoped mem for output reshape']
    %s2 = smov 3
    %v3 = vld [vmem:[%s0] ss:$16 sm:%s2]
    %s4 = smov 12
    %v5 = vld [vmem:[%s0] ss:$16 sm:%s4]
    %vm6 = vcmask 1043458
    %v7 = vsel %vm6, %v5, %v3
    %vm8 = vcmask 64512
    %9 = vst.msk [vmem:[#allocation0] ss:$8 sm:$0x3] %vm8, %v7
    %s10 = scalar_lea.vmem [#allocation0], 4294967281
    %11 = vst.msk [vmem:[%s10] ss:$8 sm:$0xc] %vm8, %v7
    %s12 = scalar_lea.vmem %s0, 15
    %v13 = vld [vmem:[%s12] sm:$0x1]
    %s14 = scalar_lea.vmem %s0, 63
    %s15 = smov 6
    %v16 = vld [vmem:[%s14] ss:$-16 sm:%s15]
    %vm17 = vcmask 1042433
    %v18 = vsel %vm17, %v16, %v13
    %s19 = scalar_lea.vmem %s0, 60
    %v20 = vld [vmem:[%s19] sm:$0x8]
    %vm21 = vcmask 1043459
    %v22 = vsel %vm21, %v20, %v18
    %23 = vrot.lane.b32.xlu0 %v22, 120
    %v24 = vpop.permute.xlu0 %23
    %vm25 = vcmask 1048512
    %26 = vst.msk [vmem:[#allocation0] sm:$0x3] %vm25, %v24
    %s27 = scalar_lea.vmem [#allocation0], 6
    %28 = vst.msk [vmem:[%s27] sm:$0xc] %vm25, %v24
    %s29 = scalar_lea.vmem %s0, 14
    %v30 = vld [vmem:[%s29] sm:$0x1]
    %s31 = scalar_lea.vmem %s0, 62
    %s32 = smov 6
    %v33 = vld [vmem:[%s31] ss:$-16 sm:%s32]
    %vm34 = vcmask 1042433
    %v35 = vsel %vm34, %v33, %v30
    %s36 = scalar_lea.vmem %s0, 59
    %v37 = vld [vmem:[%s36] sm:$0x8]
    %vm38 = vcmask 1043459
    %v39 = vsel %vm38, %v37, %v35
    %40 = vrot.lane.b32.xlu0 %v39, 112
    %v41 = vpop.permute.xlu0 %40
    %vm42 = vcmask 982912
    %43 = vst.msk [vmem:[#allocation0] sm:$0x3] %vm42, %v41
    %s44 = scalar_lea.vmem [#allocation0], 6
    %45 = vst.msk [vmem:[%s44] sm:$0xc] %vm42, %v41
    %s46 = scalar_lea.vmem %s0, 13
    %v47 = vld [vmem:[%s46] sm:$0x1]
    %s48 = scalar_lea.vmem %s0, 61
    %s49 = smov 6
    %v50 = vld [vmem:[%s48] ss:$-16 sm:%s49]
    %vm51 = vcmask 1042433
    %v52 = vsel %vm51, %v50, %v47
    %s53 = scalar_lea.vmem %s0, 58
    %v54 = vld [vmem:[%s53] sm:$0x8]
    %vm55 = vcmask 1043459
    %v56 = vsel %vm55, %v54, %v52
    %57 = vrot.lane.b32.xlu0 %v56, 104
    %v58 = vpop.permute.xlu0 %57
    %vm59 = vcmask 917312
    %60 = vst.msk [vmem:[#allocation0] sm:$0x3] %vm59, %v58
    %s61 = scalar_lea.vmem [#allocation0], 6
    %62 = vst.msk [vmem:[%s61] sm:$0xc] %vm59, %v58
    %s63 = scalar_lea.vmem %s0, 12
    %v64 = vld [vmem:[%s63] sm:$0x1]
    %s65 = scalar_lea.vmem %s0, 60
    %s66 = smov 6
    %v67 = vld [vmem:[%s65] ss:$-16 sm:%s66]
    %vm68 = vcmask 1042433
    %v69 = vsel %vm68, %v67, %v64
    %s70 = scalar_lea.vmem %s0, 57
    %v71 = vld [vmem:[%s70] sm:$0x8]
    %vm72 = vcmask 1043459
    %v73 = vsel %vm72, %v71, %v69
    %74 = vrot.lane.b32.xlu0 %v73, 96
    %v75 = vpop.permute.xlu0 %74
    %vm76 = vcmask 851712
    %77 = vst.msk [vmem:[#allocation0] sm:$0x3] %vm76, %v75
    %s78 = scalar_lea.vmem [#allocation0], 6
    %79 = vst.msk [vmem:[%s78] sm:$0xc] %vm76, %v75
    %s80 = scalar_lea.vmem %s0, 11
    %v81 = vld [vmem:[%s80] sm:$0x1]
    %s82 = scalar_lea.vmem %s0, 59
    %s83 = smov 6
    %v84 = vld [vmem:[%s82] ss:$-16 sm:%s83]
    %vm85 = vcmask 1042433
    %v86 = vsel %vm85, %v84, %v81
    %s87 = scalar_lea.vmem %s0, 56
    %v88 = vld [vmem:[%s87] sm:$0x8]
    %vm89 = vcmask 1043459
    %v90 = vsel %vm89, %v88, %v86
    %91 = vrot.lane.b32.xlu0 %v90, 88
    %v92 = vpop.permute.xlu0 %91
    %vm93 = vcmask 786112
    %94 = vst.msk [vmem:[#allocation0] sm:$0x3] %vm93, %v92
    %s95 = scalar_lea.vmem [#allocation0], 6
    %96 = vst.msk [vmem:[%s95] sm:$0xc] %vm93, %v92
    %s97 = scalar_lea.vmem %s0, 10
    %v98 = vld [vmem:[%s97] sm:$0x1]
    %s99 = scalar_lea.vmem %s0, 58
    %s100 = smov 6
    %v101 = vld [vmem:[%s99] ss:$-16 sm:%s100]
    %vm102 = vcmask 1042433
    %v103 = vsel %vm102, %v101, %v98
    %s104 = scalar_lea.vmem %s0, 55
    %v105 = vld [vmem:[%s104] sm:$0x8]
    %vm106 = vcmask 1043459
    %v107 = vsel %vm106, %v105, %v103
    %108 = vrot.lane.b32.xlu0 %v107, 80
    %v109 = vpop.permute.xlu0 %108
    %vm110 = vcmask 720512
    %111 = vst.msk [vmem:[#allocation0] sm:$0x3] %vm110, %v109
    %s112 = scalar_lea.vmem [#allocation0], 6
    %113 = vst.msk [vmem:[%s112] sm:$0xc] %vm110, %v109
    %s114 = scalar_lea.vmem %s0, 9
    %v115 = vld [vmem:[%s114] sm:$0x1]
    %s116 = scalar_lea.vmem %s0, 57
    %s117 = smov 6
    %v118 = vld [vmem:[%s116] ss:$-16 sm:%s117]
    %vm119 = vcmask 1042433
    %v120 = vsel %vm119, %v118, %v115
    %s121 = scalar_lea.vmem %s0, 54
    %v122 = vld [vmem:[%s121] sm:$0x8]
    %vm123 = vcmask 1043459
    %v124 = vsel %vm123, %v122, %v120
    %125 = vrot.lane.b32.xlu0 %v124, 72
    %v126 = vpop.permute.xlu0 %125
    %vm127 = vcmask 654912
    %128 = vst.msk [vmem:[#allocation0] sm:$0x3] %vm127, %v126
    %s129 = scalar_lea.vmem [#allocation0], 6
    %130 = vst.msk [vmem:[%s129] sm:$0xc] %vm127, %v126
    %s131 = scalar_lea.vmem %s0, 8
    %v132 = vld [vmem:[%s131] sm:$0x1]
    %s133 = scalar_lea.vmem %s0, 56
    %s134 = smov 6
    %v135 = vld [vmem:[%s133] ss:$-16 sm:%s134]
    %vm136 = vcmask 1042433
    %v137 = vsel %vm136, %v135, %v132
    %s138 = scalar_lea.vmem %s0, 53
    %v139 = vld [vmem:[%s138] sm:$0x8]
    %vm140 = vcmask 1043459
    %v141 = vsel %vm140, %v139, %v137
    %142 = vrot.lane.b32.xlu0 %v141, 64
    %v143 = vpop.permute.xlu0 %142
    %vm144 = vcmask 589312
    %145 = vst.msk [vmem:[#allocation0] sm:$0x3] %vm144, %v143
    %s146 = scalar_lea.vmem [#allocation0], 6
    %147 = vst.msk [vmem:[%s146] sm:$0xc] %vm144, %v143
    %s148 = scalar_lea.vmem %s0, 7
    %v149 = vld [vmem:[%s148] sm:$0x1]
    %s150 = scalar_lea.vmem %s0, 55
    %s151 = smov 6
    %v152 = vld [vmem:[%s150] ss:$-16 sm:%s151]
    %vm153 = vcmask 1042433
    %v154 = vsel %vm153, %v152, %v149
    %s155 = scalar_lea.vmem %s0, 52
    %v156 = vld [vmem:[%s155] sm:$0x8]
    %vm157 = vcmask 1043459
    %v158 = vsel %vm157, %v156, %v154
    %159 = vrot.lane.b32.xlu0 %v158, 56
    %v160 = vpop.permute.xlu0 %159
    %vm161 = vcmask 523712
    %162 = vst.msk [vmem:[#allocation0] sm:$0x3] %vm161, %v160
    %s163 = scalar_lea.vmem [#allocation0], 6
    %164 = vst.msk [vmem:[%s163] sm:$0xc] %vm161, %v160
    %s165 = scalar_lea.vmem %s0, 6
    %v166 = vld [vmem:[%s165] sm:$0x1]
    %s167 = scalar_lea.vmem %s0, 54
    %s168 = smov 6
    %v169 = vld [vmem:[%s167] ss:$-16 sm:%s168]
    %vm170 = vcmask 1042433
    %v171 = vsel %vm170, %v169, %v166
    %s172 = scalar_lea.vmem %s0, 51
    %v173 = vld [vmem:[%s172] sm:$0x8]
    %vm174 = vcmask 1043459
    %v175 = vsel %vm174, %v173, %v171
    %176 = vrot.lane.b32.xlu0 %v175, 48
    %v177 = vpop.permute.xlu0 %176
    %vm178 = vcmask 458112
    %179 = vst.msk [vmem:[#allocation0] sm:$0x3] %vm178, %v177
    %s180 = scalar_lea.vmem [#allocation0], 6
    %181 = vst.msk [vmem:[%s180] sm:$0xc] %vm178, %v177
    %s182 = scalar_lea.vmem %s0, 5
    %v183 = vld [vmem:[%s182] sm:$0x1]
    %s184 = scalar_lea.vmem %s0, 53
    %s185 = smov 6
    %v186 = vld [vmem:[%s184] ss:$-16 sm:%s185]
    %vm187 = vcmask 1042433
    %v188 = vsel %vm187, %v186, %v183
    %s189 = scalar_lea.vmem %s0, 50
    %v190 = vld [vmem:[%s189] sm:$0x8]
    %vm191 = vcmask 1043459
    %v192 = vsel %vm191, %v190, %v188
    %193 = vrot.lane.b32.xlu0 %v192, 40
    %v194 = vpop.permute.xlu0 %193
    %vm195 = vcmask 392512
    %196 = vst.msk [vmem:[#allocation0] sm:$0x3] %vm195, %v194
    %s197 = scalar_lea.vmem [#allocation0], 6
    %198 = vst.msk [vmem:[%s197] sm:$0xc] %vm195, %v194
    %s199 = scalar_lea.vmem %s0, 4
    %v200 = vld [vmem:[%s199] sm:$0x1]
    %s201 = scalar_lea.vmem %s0, 52
    %s202 = smov 6
    %v203 = vld [vmem:[%s201] ss:$-16 sm:%s202]
    %vm204 = vcmask 1042433
    %v205 = vsel %vm204, %v203, %v200
    %s206 = scalar_lea.vmem %s0, 49
    %v207 = vld [vmem:[%s206] sm:$0x8]
    %vm208 = vcmask 1043459
    %v209 = vsel %vm208, %v207, %v205
    %210 = vrot.lane.b32.xlu0 %v209, 32
    %v211 = vpop.permute.xlu0 %210
    %vm212 = vcmask 326912
    %213 = vst.msk [vmem:[#allocation0] sm:$0x3] %vm212, %v211
    %s214 = scalar_lea.vmem [#allocation0], 6
    %215 = vst.msk [vmem:[%s214] sm:$0xc] %vm212, %v211
    %s216 = scalar_lea.vmem %s0, 3
    %v217 = vld [vmem:[%s216] sm:$0x1]
    %s218 = scalar_lea.vmem %s0, 51
    %s219 = smov 6
    %v220 = vld [vmem:[%s218] ss:$-16 sm:%s219]
    %vm221 = vcmask 1042433
    %v222 = vsel %vm221, %v220, %v217
    %s223 = scalar_lea.vmem %s0, 48
    %v224 = vld [vmem:[%s223] sm:$0x8]
    %vm225 = vcmask 1043459
    %v226 = vsel %vm225, %v224, %v222
    %227 = vrot.lane.b32.xlu0 %v226, 24
    %v228 = vpop.permute.xlu0 %227
    %vm229 = vcmask 261312
    %230 = vst.msk [vmem:[#allocation0] sm:$0x3] %vm229, %v228
    %s231 = scalar_lea.vmem [#allocation0], 6
    %232 = vst.msk [vmem:[%s231] sm:$0xc] %vm229, %v228
    %s233 = scalar_lea.vmem %s0, 2
    %v234 = vld [vmem:[%s233] sm:$0x1]
    %s235 = scalar_lea.vmem %s0, 50
    %s236 = smov 6
    %v237 = vld [vmem:[%s235] ss:$-16 sm:%s236]
    %vm238 = vcmask 1042433
    %v239 = vsel %vm238, %v237, %v234
    %s240 = scalar_lea.vmem %s0, 47
    %v241 = vld [vmem:[%s240] sm:$0x8]
    %vm242 = vcmask 1043459
    %v243 = vsel %vm242, %v241, %v239
    %244 = vrot.lane.b32.xlu0 %v243, 16
    %v245 = vpop.permute.xlu0 %244
    %vm246 = vcmask 195712
    %247 = vst.msk [vmem:[#allocation0] sm:$0x3] %vm246, %v245
    %s248 = scalar_lea.vmem [#allocation0], 6
    %249 = vst.msk [vmem:[%s248] sm:$0xc] %vm246, %v245
    %s250 = scalar_lea.vmem %s0, 1
    %v251 = vld [vmem:[%s250] sm:$0x1]
    %s252 = scalar_lea.vmem %s0, 49
    %s253 = smov 6
    %v254 = vld [vmem:[%s252] ss:$-16 sm:%s253]
    %vm255 = vcmask 1042433
    %v256 = vsel %vm255, %v254, %v251
    %s257 = scalar_lea.vmem %s0, 46
    %v258 = vld [vmem:[%s257] sm:$0x8]
    %vm259 = vcmask 1043459
    %v260 = vsel %vm259, %v258, %v256
    %261 = vrot.lane.b32.xlu0 %v260, 8
    %v262 = vpop.permute.xlu0 %261
    %vm263 = vcmask 130112
    %264 = vst.msk [vmem:[#allocation0] sm:$0x3] %vm263, %v262
    %s265 = scalar_lea.vmem [#allocation0], 6
    %266 = vst.msk [vmem:[%s265] sm:$0xc] %vm263, %v262
    %s268 = sshll.u32 1, 2
    %s269 = ssub.s32 %s268, 1
    %v271 = vld [vmem:[#allocation0] sm:%s269]
    %s272 = sshll.u32 1, 2
    %s273 = ssub.s32 %s272, 1
    %274 = vst [vmem:[%s1] sm:%s273] %v271
    %s275 = scalar_lea.vmem [#allocation0], 8
    %v276 = vld [vmem:[%s275] sm:%s269]
    %s277 = sshll.u32 1, 2
    %s278 = ssub.s32 %s277, 1
    %s279 = scalar_lea.vmem %s1, 2
    %280 = vst [vmem:[%s279] sm:%s278] %v276

// kernel: nf_full_forward.1
$region0: #{nf_full_forward.1}
  #allocation0 [shape = 'u32[]', space=smem, size = 0x4, offset = 0x4, fixed_abs, tag = 'smem constant byte address 0x4 - core index']
  #allocation1 [shape = 'u32[144,128]{1,0:T(1,128)}', space=vmem, size = 0x12000, scoped, tag = 'internal scratch']
  #allocation2 [shape = 'f32[64,384]{1,0:T(8,128)}', space=vmem, size = 0x18000, scoped, tag = 'scratch operand']
  #allocation3 [shape = 'f32[128,384]{1,0:T(8,128)}', space=vmem, size = 0x30000, scoped, tag = 'scratch operand']
  #allocation4 [shape = 'f32[1,384]{1,0:T(1,128)}', space=vmem, size = 0x600, scoped, tag = 'scratch operand']
  #allocation5 [shape = 'f32[384,256]{1,0:T(8,128)}', space=vmem, size = 0x60000, scoped, tag = 'scratch operand']
  #allocation6 [shape = 'f32[1,256]{1,0:T(1,128)}', space=vmem, size = 0x400, scoped, tag = 'scratch operand']
  #allocation7 [shape = 'f32[256,384]{1,0:T(8,128)}', space=vmem, size = 0x60000, scoped, tag = 'scratch operand']
  #allocation8 [shape = 'f32[1,384]{1,0:T(1,128)}', space=vmem, size = 0x600, scoped, tag = 'scratch operand']
  #allocation9 [shape = 's32[6]{0}', space=sflag, size = 0x18, scoped, tag = 'scratch operand']
  #allocation10 [shape = 's32[]', space=sflag, size = 0x4, offset = 0, fixed_abs, tag = 'sflag constant byte address 0x0 - dummy sync flag']
  #allocation11 [shape = 's32[]', space=sflag, size = 0x4, offset = 0, fixed_abs, tag = 'sflag constant byte address 0x0 - dummy sync flag']
  #allocation12 [shape = 's32[]', space=sflag, size = 0x4, offset = 0, fixed_abs, tag = 'sflag constant byte address 0x0 - dummy sync flag']
  #allocation13 [shape = 's32[]', space=sflag, size = 0x4, offset = 0, fixed_abs, tag = 'sflag constant byte address 0x0 - dummy sync flag']
  #allocation14 [shape = 's32[]', space=sflag, size = 0x4, offset = 0, fixed_abs, tag = 'sflag constant byte address 0x0 - dummy sync flag']
  #allocation15 [shape = 's32[]', space=sflag, size = 0x4, offset = 0, fixed_abs, tag = 'sflag constant byte address 0x0 - dummy sync flag']
  %s0 = inlined_call_operand.vmem [shape: f32[64,16], index: 0, kind: input, shape index: {}]
  %s1 = inlined_call_operand.vmem [shape: f32[8,256], index: 1, kind: input, shape index: {}]
  %s2 = inlined_call_operand.vmem [shape: f32[16,384], index: 2, kind: input, shape index: {}]
  %s3 = inlined_call_operand.vmem [shape: f32[1,384], index: 3, kind: input, shape index: {}]
  %s4 = inlined_call_operand.vmem [shape: f32[128,384], index: 4, kind: input, shape index: {}]
  %s5 = inlined_call_operand.vmem [shape: f32[1,384], index: 5, kind: input, shape index: {}]
  %s6 = inlined_call_operand.vmem [shape: f32[128,384], index: 6, kind: input, shape index: {}]
  %s7 = inlined_call_operand.vmem [shape: f32[1,384], index: 7, kind: input, shape index: {}]
  %s8 = inlined_call_operand.vmem [shape: f32[384,256], index: 8, kind: input, shape index: {}]
  %s9 = inlined_call_operand.vmem [shape: f32[1,256], index: 9, kind: input, shape index: {}]
  %s10 = inlined_call_operand.vmem [shape: f32[256,384], index: 10, kind: input, shape index: {}]
  %s11 = inlined_call_operand.vmem [shape: f32[1,384], index: 11, kind: input, shape index: {}]
  %s12 = inlined_call_operand.vmem [shape: f32[8,512], index: 12, kind: output, shape index: {}]
  %s13 = sld [smem:[#allocation0]]
  $region226: #{nf_full_forward.1} parent=0
    _
  %s15 = ssub.s32 1, %s13
  %s16 = scalar_select 0, %s15, %s13
  // Predicated region
  $region2: #{nf_full_forward.1} parent=0 // pred_check
    _
  $region3: #{nf_full_forward.1} parent=0 // pred_check_branch
    %18 = sbr.rel (0) target = $region5
  $region4: #{nf_full_forward.1} parent=0 // pred_region
    _
  $region5: #{nf_full_forward.1} parent=0 // pred_fallthru
    _
  // Predicated region
  $region6: #{nf_full_forward.1} parent=0 // pred_check
    _
  $region7: #{nf_full_forward.1} parent=0 // pred_check_branch
    %20 = sbr.rel (0) target = $region9
  $region8: #{nf_full_forward.1} parent=0 // pred_region
    _
  $region9: #{nf_full_forward.1} parent=0 // pred_fallthru
    _
  // Predicated region
  $region10: #{nf_full_forward.1} parent=0 // pred_check
    _
  $region11: #{nf_full_forward.1} parent=0 // pred_check_branch
    %22 = sbr.rel (0) target = $region13
  $region12: #{nf_full_forward.1} parent=0 // pred_region
    _
  $region13: #{nf_full_forward.1} parent=0 // pred_fallthru
    _
  // Predicated region
  $region14: #{nf_full_forward.1} parent=0 // pred_check
    _
  $region15: #{nf_full_forward.1} parent=0 // pred_check_branch
    %24 = sbr.rel (0) target = $region17
  $region16: #{nf_full_forward.1} parent=0 // pred_region
    _
  $region17: #{nf_full_forward.1} parent=0 // pred_fallthru
    _
  // Predicated region
  $region18: #{nf_full_forward.1} parent=0 // pred_check
    _
  $region19: #{nf_full_forward.1} parent=0 // pred_check_branch
    %26 = sbr.rel (0) target = $region21
  $region20: #{nf_full_forward.1} parent=0 // pred_region
    _
  $region21: #{nf_full_forward.1} parent=0 // pred_fallthru
    _
  // Predicated region
  $region22: #{nf_full_forward.1} parent=0 // pred_check
    _
  $region23: #{nf_full_forward.1} parent=0 // pred_check_branch
    %28 = sbr.rel (0) target = $region25
  $region24: #{nf_full_forward.1} parent=0 // pred_region
    _
  $region25: #{nf_full_forward.1} parent=0 // pred_fallthru
    _
  %p30 = scmp.lt.u32.totalorder 384, 8
  %p31 = pneg %p30
  // Predicated region
  $region26: #{nf_full_forward.1} parent=0 // pred_check
    _
  $region27: #{nf_full_forward.1} parent=0 // pred_check_branch
    %33 = sbr.rel (%p30) target = $region29
  $region28: #{nf_full_forward.1} parent=0 // pred_region
    %s49 = sand.u32 384, 7
    %p50 = scmp.eq.s32.totalorder %s49, 0
    // Predicated region
    $region41: #{nf_full_forward.1} parent=28 // pred_check
      %p51 = pneg %p50
    $region42: #{nf_full_forward.1} parent=28 // pred_check_branch
      %53 = sbr.rel (%p51) target = $region44
    $region43: #{nf_full_forward.1} parent=28 // pred_region
      loop: start=0, step=1, limit=1
      $region45: #{nf_full_forward.1} parent=43 // loop_pre_header
        _
      $region46: #{nf_full_forward.1} parent=43 // loop_header
        %s55 = sphi 0, %s59
        %p56 = scmp.ge.s32.totalorder %s55, 1
        %s60 = sphi %s6, %s6
        %s61 = sphi [#allocation3], [#allocation3]
      $region47: #{nf_full_forward.1} parent=43 // loop_header_branch
        %58 = sbr.rel (%p56) target = $region51
      $region48: #{nf_full_forward.1} parent=43 // loop_body
        %v62 = vld [vmem:[%s60] sm:$0xff]
        %63 = vst [vmem:[%s61] sm:$0xff] %v62
        %v64 = vld [vmem:[%s60 + $0x8] sm:$0xff]
        %65 = vst [vmem:[%s61 + $0x8] sm:$0xff] %v64
        %v66 = vld [vmem:[%s60 + $0x10] sm:$0xff]
        %67 = vst [vmem:[%s61 + $0x10] sm:$0xff] %v66
        %v68 = vld [vmem:[%s60 + $0x18] sm:$0xff]
        %69 = vst [vmem:[%s61 + $0x18] sm:$0xff] %v68
        %v70 = vld [vmem:[%s60 + $0x20] sm:$0xff]
        %71 = vst [vmem:[%s61 + $0x20] sm:$0xff] %v70
        %v72 = vld [vmem:[%s60 + $0x28] sm:$0xff]
        %73 = vst [vmem:[%s61 + $0x28] sm:$0xff] %v72
        %v74 = vld [vmem:[%s60 + $0x30] sm:$0xff]
        %75 = vst [vmem:[%s61 + $0x30] sm:$0xff] %v74
        %v76 = vld [vmem:[%s60 + $0x38] sm:$0xff]
        %77 = vst [vmem:[%s61 + $0x38] sm:$0xff] %v76
        %v78 = vld [vmem:[%s60 + $0x40] sm:$0xff]
        %79 = vst [vmem:[%s61 + $0x40] sm:$0xff] %v78
        %v80 = vld [vmem:[%s60 + $0x48] sm:$0xff]
        %81 = vst [vmem:[%s61 + $0x48] sm:$0xff] %v80
        %v82 = vld [vmem:[%s60 + $0x50] sm:$0xff]
        %83 = vst [vmem:[%s61 + $0x50] sm:$0xff] %v82
        %v84 = vld [vmem:[%s60 + $0x58] sm:$0xff]
        %85 = vst [vmem:[%s61 + $0x58] sm:$0xff] %v84
        %v86 = vld [vmem:[%s60 + $0x60] sm:$0xff]
        %87 = vst [vmem:[%s61 + $0x60] sm:$0xff] %v86
        %v88 = vld [vmem:[%s60 + $0x68] sm:$0xff]
        %89 = vst [vmem:[%s61 + $0x68] sm:$0xff] %v88
        %v90 = vld [vmem:[%s60 + $0x70] sm:$0xff]
        %91 = vst [vmem:[%s61 + $0x70] sm:$0xff] %v90
        %v92 = vld [vmem:[%s60 + $0x78] sm:$0xff]
        %93 = vst [vmem:[%s61 + $0x78] sm:$0xff] %v92
        %v94 = vld [vmem:[%s60 + $0x80] sm:$0xff]
        %95 = vst [vmem:[%s61 + $0x80] sm:$0xff] %v94
        %v96 = vld [vmem:[%s60 + $0x88] sm:$0xff]
        %97 = vst [vmem:[%s61 + $0x88] sm:$0xff] %v96
        %v98 = vld [vmem:[%s60 + $0x90] sm:$0xff]
        %99 = vst [vmem:[%s61 + $0x90] sm:$0xff] %v98
        %v100 = vld [vmem:[%s60 + $0x98] sm:$0xff]
        %101 = vst [vmem:[%s61 + $0x98] sm:$0xff] %v100
        %v102 = vld [vmem:[%s60 + $0xa0] sm:$0xff]
        %103 = vst [vmem:[%s61 + $0xa0] sm:$0xff] %v102
        %v104 = vld [vmem:[%s60 + $0xa8] sm:$0xff]
        %105 = vst [vmem:[%s61 + $0xa8] sm:$0xff] %v104
        %v106 = vld [vmem:[%s60 + $0xb0] sm:$0xff]
        %107 = vst [vmem:[%s61 + $0xb0] sm:$0xff] %v106
        %v108 = vld [vmem:[%s60 + $0xb8] sm:$0xff]
        %109 = vst [vmem:[%s61 + $0xb8] sm:$0xff] %v108
        %v110 = vld [vmem:[%s60 + $0xc0] sm:$0xff]
        %111 = vst [vmem:[%s61 + $0xc0] sm:$0xff] %v110
        %v112 = vld [vmem:[%s60 + $0xc8] sm:$0xff]
        %113 = vst [vmem:[%s61 + $0xc8] sm:$0xff] %v112
        %v114 = vld [vmem:[%s60 + $0xd0] sm:$0xff]
        %115 = vst [vmem:[%s61 + $0xd0] sm:$0xff] %v114
        %v116 = vld [vmem:[%s60 + $0xd8] sm:$0xff]
        %117 = vst [vmem:[%s61 + $0xd8] sm:$0xff] %v116
        %v118 = vld [vmem:[%s60 + $0xe0] sm:$0xff]
        %119 = vst [vmem:[%s61 + $0xe0] sm:$0xff] %v118
        %v120 = vld [vmem:[%s60 + $0xe8] sm:$0xff]
        %121 = vst [vmem:[%s61 + $0xe8] sm:$0xff] %v120
        %v122 = vld [vmem:[%s60 + $0xf0] sm:$0xff]
        %123 = vst [vmem:[%s61 + $0xf0] sm:$0xff] %v122
        %v124 = vld [vmem:[%s60 + $0xf8] sm:$0xff]
        %125 = vst [vmem:[%s61 + $0xf8] sm:$0xff] %v124
        %v126 = vld [vmem:[%s60 + $0x100] sm:$0xff]
        %127 = vst [vmem:[%s61 + $0x100] sm:$0xff] %v126
        %v128 = vld [vmem:[%s60 + $0x108] sm:$0xff]
        %129 = vst [vmem:[%s61 + $0x108] sm:$0xff] %v128
        %v130 = vld [vmem:[%s60 + $0x110] sm:$0xff]
        %131 = vst [vmem:[%s61 + $0x110] sm:$0xff] %v130
        %v132 = vld [vmem:[%s60 + $0x118] sm:$0xff]
        %133 = vst [vmem:[%s61 + $0x118] sm:$0xff] %v132
        %v134 = vld [vmem:[%s60 + $0x120] sm:$0xff]
        %135 = vst [vmem:[%s61 + $0x120] sm:$0xff] %v134
        %v136 = vld [vmem:[%s60 + $0x128] sm:$0xff]
        %137 = vst [vmem:[%s61 + $0x128] sm:$0xff] %v136
        %v138 = vld [vmem:[%s60 + $0x130] sm:$0xff]
        %139 = vst [vmem:[%s61 + $0x130] sm:$0xff] %v138
        %v140 = vld [vmem:[%s60 + $0x138] sm:$0xff]
        %141 = vst [vmem:[%s61 + $0x138] sm:$0xff] %v140
        %v142 = vld [vmem:[%s60 + $0x140] sm:$0xff]
        %143 = vst [vmem:[%s61 + $0x140] sm:$0xff] %v142
        %v144 = vld [vmem:[%s60 + $0x148] sm:$0xff]
        %145 = vst [vmem:[%s61 + $0x148] sm:$0xff] %v144
        %v146 = vld [vmem:[%s60 + $0x150] sm:$0xff]
        %147 = vst [vmem:[%s61 + $0x150] sm:$0xff] %v146
        %v148 = vld [vmem:[%s60 + $0x158] sm:$0xff]
        %149 = vst [vmem:[%s61 + $0x158] sm:$0xff] %v148
        %v150 = vld [vmem:[%s60 + $0x160] sm:$0xff]
        %151 = vst [vmem:[%s61 + $0x160] sm:$0xff] %v150
        %v152 = vld [vmem:[%s60 + $0x168] sm:$0xff]
        %153 = vst [vmem:[%s61 + $0x168] sm:$0xff] %v152
        %v154 = vld [vmem:[%s60 + $0x170] sm:$0xff]
        %155 = vst [vmem:[%s61 + $0x170] sm:$0xff] %v154
        %v156 = vld [vmem:[%s60 + $0x178] sm:$0xff]
        %157 = vst [vmem:[%s61 + $0x178] sm:$0xff] %v156
      $region49: #{nf_full_forward.1} parent=43 // loop_footer
        %s59 = sadd.s32 1, %s55
      $region50: #{nf_full_forward.1} parent=43 // loop_footer_branch
        %54 = sbr.rel target = $region46
      $region51: #{nf_full_forward.1} parent=43 // loop_exit
        _
    $region44: #{nf_full_forward.1} parent=28 // pred_fallthru
      _
    %p158 = pneg %p50
    // Predicated region
    $region52: #{nf_full_forward.1} parent=28 // pred_check
      _
    $region53: #{nf_full_forward.1} parent=28 // pred_check_branch
      %160 = sbr.rel (%p50) target = $region55
    $region54: #{nf_full_forward.1} parent=28 // pred_region
      %s161 = sand.u32 384, 7
    $region55: #{nf_full_forward.1} parent=28 // pred_fallthru
      _
  $region29: #{nf_full_forward.1} parent=0 // pred_fallthru
    _
  // Predicated region
  $region30: #{nf_full_forward.1} parent=0 // pred_check
    %p34 = pneg %p30
  $region31: #{nf_full_forward.1} parent=0 // pred_check_branch
    %36 = sbr.rel (%p34) target = $region33
  $region32: #{nf_full_forward.1} parent=0 // pred_region
    %s37 = sshll.u32 1, 384
    %s38 = ssub.s32 %s37, 1
    loop: start=0, step=1, limit=1
    $region34: #{nf_full_forward.1} parent=32 // loop_pre_header
      _
    $region35: #{nf_full_forward.1} parent=32 // loop_header
      %s40 = sphi 0, %s44
      %p41 = scmp.ge.s32.totalorder %s40, 1
      %s45 = sphi %s6, %s6
      %s46 = sphi [#allocation3], [#allocation3]
    $region36: #{nf_full_forward.1} parent=32 // loop_header_branch
      %43 = sbr.rel (%p41) target = $region40
    $region37: #{nf_full_forward.1} parent=32 // loop_body
      %v47 = vld [vmem:[%s45] sm:%s38]
      %48 = vst [vmem:[%s46] sm:%s38] %v47
    $region38: #{nf_full_forward.1} parent=32 // loop_footer
      %s44 = sadd.s32 1, %s40
    $region39: #{nf_full_forward.1} parent=32 // loop_footer_branch
      %39 = sbr.rel target = $region35
    $region40: #{nf_full_forward.1} parent=32 // loop_exit
      _
  $region33: #{nf_full_forward.1} parent=0 // pred_fallthru
    _
  // Predicated region
  $region56: #{nf_full_forward.1} parent=0 // pred_check
    _
  $region57: #{nf_full_forward.1} parent=0 // pred_check_branch
    %164 = sbr.rel (0) target = $region59
  $region58: #{nf_full_forward.1} parent=0 // pred_region
    %165 = vsyncadd [#allocation9], 6144
  $region59: #{nf_full_forward.1} parent=0 // pred_fallthru
    _
  %s166 = scalar_lea.sflag [#allocation9], 1
  %p168 = scmp.lt.u32.totalorder 3, 8
  %p169 = pneg %p168
  // Predicated region
  $region60: #{nf_full_forward.1} parent=0 // pred_check
    _
  $region61: #{nf_full_forward.1} parent=0 // pred_check_branch
    %171 = sbr.rel (%p168) target = $region63
  $region62: #{nf_full_forward.1} parent=0 // pred_region
    %s187 = sand.u32 3, 7
    %p188 = scmp.eq.s32.totalorder %s187, 0
    %p189 = pneg %p188
    // Predicated region
    $region75: #{nf_full_forward.1} parent=62 // pred_check
      _
    $region76: #{nf_full_forward.1} parent=62 // pred_check_branch
      %191 = sbr.rel (%p188) target = $region78
    $region77: #{nf_full_forward.1} parent=62 // pred_region
      %s192 = sand.u32 3, 7
      %s193 = ssub.s32 3, %s192
      %s194 = scalar_lea.vmem %s7, %s193
      %s195 = ssub.s32 3, %s192
      %s196 = scalar_lea.vmem [#allocation4], %s195
      %s197 = sshll.u32 1, %s192
      %s198 = ssub.s32 %s197, 1
      loop: start=0, step=1, limit=1
      $region79: #{nf_full_forward.1} parent=77 // loop_pre_header
        _
      $region80: #{nf_full_forward.1} parent=77 // loop_header
        %s200 = sphi 0, %s204
        %p201 = scmp.ge.s32.totalorder %s200, 1
        %s205 = sphi %s194, %s194
        %s206 = sphi %s196, %s196
      $region81: #{nf_full_forward.1} parent=77 // loop_header_branch
        %203 = sbr.rel (%p201) target = $region85
      $region82: #{nf_full_forward.1} parent=77 // loop_body
        %v207 = vld [vmem:[%s205] sm:%s198]
        %208 = vst [vmem:[%s206] sm:%s198] %v207
      $region83: #{nf_full_forward.1} parent=77 // loop_footer
        %s204 = sadd.s32 1, %s200
      $region84: #{nf_full_forward.1} parent=77 // loop_footer_branch
        %199 = sbr.rel target = $region80
      $region85: #{nf_full_forward.1} parent=77 // loop_exit
        _
    $region78: #{nf_full_forward.1} parent=62 // pred_fallthru
      _
  $region63: #{nf_full_forward.1} parent=0 // pred_fallthru
    _
  // Predicated region
  $region64: #{nf_full_forward.1} parent=0 // pred_check
    %p172 = pneg %p168
  $region65: #{nf_full_forward.1} parent=0 // pred_check_branch
    %174 = sbr.rel (%p172) target = $region67
  $region66: #{nf_full_forward.1} parent=0 // pred_region
    %s175 = sshll.u32 1, 3
    %s176 = ssub.s32 %s175, 1
    loop: start=0, step=1, limit=1
    $region68: #{nf_full_forward.1} parent=66 // loop_pre_header
      _
    $region69: #{nf_full_forward.1} parent=66 // loop_header
      %s178 = sphi 0, %s182
      %p179 = scmp.ge.s32.totalorder %s178, 1
      %s183 = sphi %s7, %s7
      %s184 = sphi [#allocation4], [#allocation4]
    $region70: #{nf_full_forward.1} parent=66 // loop_header_branch
      %181 = sbr.rel (%p179) target = $region74
    $region71: #{nf_full_forward.1} parent=66 // loop_body
      %v185 = vld [vmem:[%s183] sm:%s176]
      %186 = vst [vmem:[%s184] sm:%s176] %v185
    $region72: #{nf_full_forward.1} parent=66 // loop_footer
      %s182 = sadd.s32 1, %s178
    $region73: #{nf_full_forward.1} parent=66 // loop_footer_branch
      %177 = sbr.rel target = $region69
    $region74: #{nf_full_forward.1} parent=66 // loop_exit
      _
  $region67: #{nf_full_forward.1} parent=0 // pred_fallthru
    _
  // Predicated region
  $region86: #{nf_full_forward.1} parent=0 // pred_check
    _
  $region87: #{nf_full_forward.1} parent=0 // pred_check_branch
    %211 = sbr.rel (0) target = $region89
  $region88: #{nf_full_forward.1} parent=0 // pred_region
    %212 = vsyncadd %s166, 48
  $region89: #{nf_full_forward.1} parent=0 // pred_fallthru
    _
  %s213 = scalar_lea.sflag [#allocation9], 2
  %p215 = scmp.lt.u32.totalorder 768, 8
  %p216 = pneg %p215
  // Predicated region
  $region90: #{nf_full_forward.1} parent=0 // pred_check
    _
  $region91: #{nf_full_forward.1} parent=0 // pred_check_branch
    %218 = sbr.rel (%p215) target = $region93
  $region92: #{nf_full_forward.1} parent=0 // pred_region
    %s234 = sand.u32 768, 7
    %p235 = scmp.eq.s32.totalorder %s234, 0
    // Predicated region
    $region105: #{nf_full_forward.1} parent=92 // pred_check
      %p236 = pneg %p235
    $region106: #{nf_full_forward.1} parent=92 // pred_check_branch
      %238 = sbr.rel (%p236) target = $region108
    $region107: #{nf_full_forward.1} parent=92 // pred_region
      loop: start=0, step=1, limit=1
      $region109: #{nf_full_forward.1} parent=107 // loop_pre_header
        _
      $region110: #{nf_full_forward.1} parent=107 // loop_header
        %s240 = sphi 0, %s244
        %p241 = scmp.ge.s32.totalorder %s240, 1
        %s245 = sphi %s8, %s8
        %s246 = sphi [#allocation5], [#allocation5]
      $region111: #{nf_full_forward.1} parent=107 // loop_header_branch
        %243 = sbr.rel (%p241) target = $region115
      $region112: #{nf_full_forward.1} parent=107 // loop_body
        %v247 = vld [vmem:[%s245] sm:$0xff]
        %248 = vst [vmem:[%s246] sm:$0xff] %v247
        %v249 = vld [vmem:[%s245 + $0x8] sm:$0xff]
        %250 = vst [vmem:[%s246 + $0x8] sm:$0xff] %v249
        %v251 = vld [vmem:[%s245 + $0x10] sm:$0xff]
        %252 = vst [vmem:[%s246 + $0x10] sm:$0xff] %v251
        %v253 = vld [vmem:[%s245 + $0x18] sm:$0xff]
        %254 = vst [vmem:[%s246 + $0x18] sm:$0xff] %v253
        %v255 = vld [vmem:[%s245 + $0x20] sm:$0xff]
        %256 = vst [vmem:[%s246 + $0x20] sm:$0xff] %v255
        %v257 = vld [vmem:[%s245 + $0x28] sm:$0xff]
        %258 = vst [vmem:[%s246 + $0x28] sm:$0xff] %v257
        %v259 = vld [vmem:[%s245 + $0x30] sm:$0xff]
        %260 = vst [vmem:[%s246 + $0x30] sm:$0xff] %v259
        %v261 = vld [vmem:[%s245 + $0x38] sm:$0xff]
        %262 = vst [vmem:[%s246 + $0x38] sm:$0xff] %v261
        %v263 = vld [vmem:[%s245 + $0x40] sm:$0xff]
        %264 = vst [vmem:[%s246 + $0x40] sm:$0xff] %v263
        %v265 = vld [vmem:[%s245 + $0x48] sm:$0xff]
        %266 = vst [vmem:[%s246 + $0x48] sm:$0xff] %v265
        %v267 = vld [vmem:[%s245 + $0x50] sm:$0xff]
        %268 = vst [vmem:[%s246 + $0x50] sm:$0xff] %v267
        %v269 = vld [vmem:[%s245 + $0x58] sm:$0xff]
        %270 = vst [vmem:[%s246 + $0x58] sm:$0xff] %v269
        %v271 = vld [vmem:[%s245 + $0x60] sm:$0xff]
        %272 = vst [vmem:[%s246 + $0x60] sm:$0xff] %v271
        %v273 = vld [vmem:[%s245 + $0x68] sm:$0xff]
        %274 = vst [vmem:[%s246 + $0x68] sm:$0xff] %v273
        %v275 = vld [vmem:[%s245 + $0x70] sm:$0xff]
        %276 = vst [vmem:[%s246 + $0x70] sm:$0xff] %v275
        %v277 = vld [vmem:[%s245 + $0x78] sm:$0xff]
        %278 = vst [vmem:[%s246 + $0x78] sm:$0xff] %v277
        %v279 = vld [vmem:[%s245 + $0x80] sm:$0xff]
        %280 = vst [vmem:[%s246 + $0x80] sm:$0xff] %v279
        %v281 = vld [vmem:[%s245 + $0x88] sm:$0xff]
        %282 = vst [vmem:[%s246 + $0x88] sm:$0xff] %v281
        %v283 = vld [vmem:[%s245 + $0x90] sm:$0xff]
        %284 = vst [vmem:[%s246 + $0x90] sm:$0xff] %v283
        %v285 = vld [vmem:[%s245 + $0x98] sm:$0xff]
        %286 = vst [vmem:[%s246 + $0x98] sm:$0xff] %v285
        %v287 = vld [vmem:[%s245 + $0xa0] sm:$0xff]
        %288 = vst [vmem:[%s246 + $0xa0] sm:$0xff] %v287
        %v289 = vld [vmem:[%s245 + $0xa8] sm:$0xff]
        %290 = vst [vmem:[%s246 + $0xa8] sm:$0xff] %v289
        %v291 = vld [vmem:[%s245 + $0xb0] sm:$0xff]
        %292 = vst [vmem:[%s246 + $0xb0] sm:$0xff] %v291
        %v293 = vld [vmem:[%s245 + $0xb8] sm:$0xff]
        %294 = vst [vmem:[%s246 + $0xb8] sm:$0xff] %v293
        %v295 = vld [vmem:[%s245 + $0xc0] sm:$0xff]
        %296 = vst [vmem:[%s246 + $0xc0] sm:$0xff] %v295
        %v297 = vld [vmem:[%s245 + $0xc8] sm:$0xff]
        %298 = vst [vmem:[%s246 + $0xc8] sm:$0xff] %v297
        %v299 = vld [vmem:[%s245 + $0xd0] sm:$0xff]
        %300 = vst [vmem:[%s246 + $0xd0] sm:$0xff] %v299
        %v301 = vld [vmem:[%s245 + $0xd8] sm:$0xff]
        %302 = vst [vmem:[%s246 + $0xd8] sm:$0xff] %v301
        %v303 = vld [vmem:[%s245 + $0xe0] sm:$0xff]
        %304 = vst [vmem:[%s246 + $0xe0] sm:$0xff] %v303
        %v305 = vld [vmem:[%s245 + $0xe8] sm:$0xff]
        %306 = vst [vmem:[%s246 + $0xe8] sm:$0xff] %v305
        %v307 = vld [vmem:[%s245 + $0xf0] sm:$0xff]
        %308 = vst [vmem:[%s246 + $0xf0] sm:$0xff] %v307
        %v309 = vld [vmem:[%s245 + $0xf8] sm:$0xff]
        %310 = vst [vmem:[%s246 + $0xf8] sm:$0xff] %v309
        %v311 = vld [vmem:[%s245 + $0x100] sm:$0xff]
        %312 = vst [vmem:[%s246 + $0x100] sm:$0xff] %v311
        %v313 = vld [vmem:[%s245 + $0x108] sm:$0xff]
        %314 = vst [vmem:[%s246 + $0x108] sm:$0xff] %v313
        %v315 = vld [vmem:[%s245 + $0x110] sm:$0xff]
        %316 = vst [vmem:[%s246 + $0x110] sm:$0xff] %v315
        %v317 = vld [vmem:[%s245 + $0x118] sm:$0xff]
        %318 = vst [vmem:[%s246 + $0x118] sm:$0xff] %v317
        %v319 = vld [vmem:[%s245 + $0x120] sm:$0xff]
        %320 = vst [vmem:[%s246 + $0x120] sm:$0xff] %v319
        %v321 = vld [vmem:[%s245 + $0x128] sm:$0xff]
        %322 = vst [vmem:[%s246 + $0x128] sm:$0xff] %v321
        %v323 = vld [vmem:[%s245 + $0x130] sm:$0xff]
        %324 = vst [vmem:[%s246 + $0x130] sm:$0xff] %v323
        %v325 = vld [vmem:[%s245 + $0x138] sm:$0xff]
        %326 = vst [vmem:[%s246 + $0x138] sm:$0xff] %v325
        %v327 = vld [vmem:[%s245 + $0x140] sm:$0xff]
        %328 = vst [vmem:[%s246 + $0x140] sm:$0xff] %v327
        %v329 = vld [vmem:[%s245 + $0x148] sm:$0xff]
        %330 = vst [vmem:[%s246 + $0x148] sm:$0xff] %v329
        %v331 = vld [vmem:[%s245 + $0x150] sm:$0xff]
        %332 = vst [vmem:[%s246 + $0x150] sm:$0xff] %v331
        %v333 = vld [vmem:[%s245 + $0x158] sm:$0xff]
        %334 = vst [vmem:[%s246 + $0x158] sm:$0xff] %v333
        %v335 = vld [vmem:[%s245 + $0x160] sm:$0xff]
        %336 = vst [vmem:[%s246 + $0x160] sm:$0xff] %v335
        %v337 = vld [vmem:[%s245 + $0x168] sm:$0xff]
        %338 = vst [vmem:[%s246 + $0x168] sm:$0xff] %v337
        %v339 = vld [vmem:[%s245 + $0x170] sm:$0xff]
        %340 = vst [vmem:[%s246 + $0x170] sm:$0xff] %v339
        %v341 = vld [vmem:[%s245 + $0x178] sm:$0xff]
        %342 = vst [vmem:[%s246 + $0x178] sm:$0xff] %v341
        %v343 = vld [vmem:[%s245 + $0x180] sm:$0xff]
        %344 = vst [vmem:[%s246 + $0x180] sm:$0xff] %v343
        %v345 = vld [vmem:[%s245 + $0x188] sm:$0xff]
        %346 = vst [vmem:[%s246 + $0x188] sm:$0xff] %v345
        %v347 = vld [vmem:[%s245 + $0x190] sm:$0xff]
        %348 = vst [vmem:[%s246 + $0x190] sm:$0xff] %v347
        %v349 = vld [vmem:[%s245 + $0x198] sm:$0xff]
        %350 = vst [vmem:[%s246 + $0x198] sm:$0xff] %v349
        %v351 = vld [vmem:[%s245 + $0x1a0] sm:$0xff]
        %352 = vst [vmem:[%s246 + $0x1a0] sm:$0xff] %v351
        %v353 = vld [vmem:[%s245 + $0x1a8] sm:$0xff]
        %354 = vst [vmem:[%s246 + $0x1a8] sm:$0xff] %v353
        %v355 = vld [vmem:[%s245 + $0x1b0] sm:$0xff]
        %356 = vst [vmem:[%s246 + $0x1b0] sm:$0xff] %v355
        %v357 = vld [vmem:[%s245 + $0x1b8] sm:$0xff]
        %358 = vst [vmem:[%s246 + $0x1b8] sm:$0xff] %v357
        %v359 = vld [vmem:[%s245 + $0x1c0] sm:$0xff]
        %360 = vst [vmem:[%s246 + $0x1c0] sm:$0xff] %v359
        %v361 = vld [vmem:[%s245 + $0x1c8] sm:$0xff]
        %362 = vst [vmem:[%s246 + $0x1c8] sm:$0xff] %v361
        %v363 = vld [vmem:[%s245 + $0x1d0] sm:$0xff]
        %364 = vst [vmem:[%s246 + $0x1d0] sm:$0xff] %v363
        %v365 = vld [vmem:[%s245 + $0x1d8] sm:$0xff]
        %366 = vst [vmem:[%s246 + $0x1d8] sm:$0xff] %v365
        %v367 = vld [vmem:[%s245 + $0x1e0] sm:$0xff]
        %368 = vst [vmem:[%s246 + $0x1e0] sm:$0xff] %v367
        %v369 = vld [vmem:[%s245 + $0x1e8] sm:$0xff]
        %370 = vst [vmem:[%s246 + $0x1e8] sm:$0xff] %v369
        %v371 = vld [vmem:[%s245 + $0x1f0] sm:$0xff]
        %372 = vst [vmem:[%s246 + $0x1f0] sm:$0xff] %v371
        %v373 = vld [vmem:[%s245 + $0x1f8] sm:$0xff]
        %374 = vst [vmem:[%s246 + $0x1f8] sm:$0xff] %v373
        %v375 = vld [vmem:[%s245 + $0x200] sm:$0xff]
        %376 = vst [vmem:[%s246 + $0x200] sm:$0xff] %v375
        %v377 = vld [vmem:[%s245 + $0x208] sm:$0xff]
        %378 = vst [vmem:[%s246 + $0x208] sm:$0xff] %v377
        %v379 = vld [vmem:[%s245 + $0x210] sm:$0xff]
        %380 = vst [vmem:[%s246 + $0x210] sm:$0xff] %v379
        %v381 = vld [vmem:[%s245 + $0x218] sm:$0xff]
        %382 = vst [vmem:[%s246 + $0x218] sm:$0xff] %v381
        %v383 = vld [vmem:[%s245 + $0x220] sm:$0xff]
        %384 = vst [vmem:[%s246 + $0x220] sm:$0xff] %v383
        %v385 = vld [vmem:[%s245 + $0x228] sm:$0xff]
        %386 = vst [vmem:[%s246 + $0x228] sm:$0xff] %v385
        %v387 = vld [vmem:[%s245 + $0x230] sm:$0xff]
        %388 = vst [vmem:[%s246 + $0x230] sm:$0xff] %v387
        %v389 = vld [vmem:[%s245 + $0x238] sm:$0xff]
        %390 = vst [vmem:[%s246 + $0x238] sm:$0xff] %v389
        %v391 = vld [vmem:[%s245 + $0x240] sm:$0xff]
        %392 = vst [vmem:[%s246 + $0x240] sm:$0xff] %v391
        %v393 = vld [vmem:[%s245 + $0x248] sm:$0xff]
        %394 = vst [vmem:[%s246 + $0x248] sm:$0xff] %v393
        %v395 = vld [vmem:[%s245 + $0x250] sm:$0xff]
        %396 = vst [vmem:[%s246 + $0x250] sm:$0xff] %v395
        %v397 = vld [vmem:[%s245 + $0x258] sm:$0xff]
        %398 = vst [vmem:[%s246 + $0x258] sm:$0xff] %v397
        %v399 = vld [vmem:[%s245 + $0x260] sm:$0xff]
        %400 = vst [vmem:[%s246 + $0x260] sm:$0xff] %v399
        %v401 = vld [vmem:[%s245 + $0x268] sm:$0xff]
        %402 = vst [vmem:[%s246 + $0x268] sm:$0xff] %v401
        %v403 = vld [vmem:[%s245 + $0x270] sm:$0xff]
        %404 = vst [vmem:[%s246 + $0x270] sm:$0xff] %v403
        %v405 = vld [vmem:[%s245 + $0x278] sm:$0xff]
        %406 = vst [vmem:[%s246 + $0x278] sm:$0xff] %v405
        %v407 = vld [vmem:[%s245 + $0x280] sm:$0xff]
        %408 = vst [vmem:[%s246 + $0x280] sm:$0xff] %v407
        %v409 = vld [vmem:[%s245 + $0x288] sm:$0xff]
        %410 = vst [vmem:[%s246 + $0x288] sm:$0xff] %v409
        %v411 = vld [vmem:[%s245 + $0x290] sm:$0xff]
        %412 = vst [vmem:[%s246 + $0x290] sm:$0xff] %v411
        %v413 = vld [vmem:[%s245 + $0x298] sm:$0xff]
        %414 = vst [vmem:[%s246 + $0x298] sm:$0xff] %v413
        %v415 = vld [vmem:[%s245 + $0x2a0] sm:$0xff]
        %416 = vst [vmem:[%s246 + $0x2a0] sm:$0xff] %v415
        %v417 = vld [vmem:[%s245 + $0x2a8] sm:$0xff]
        %418 = vst [vmem:[%s246 + $0x2a8] sm:$0xff] %v417
        %v419 = vld [vmem:[%s245 + $0x2b0] sm:$0xff]
        %420 = vst [vmem:[%s246 + $0x2b0] sm:$0xff] %v419
        %v421 = vld [vmem:[%s245 + $0x2b8] sm:$0xff]
        %422 = vst [vmem:[%s246 + $0x2b8] sm:$0xff] %v421
        %v423 = vld [vmem:[%s245 + $0x2c0] sm:$0xff]
        %424 = vst [vmem:[%s246 + $0x2c0] sm:$0xff] %v423
        %v425 = vld [vmem:[%s245 + $0x2c8] sm:$0xff]
        %426 = vst [vmem:[%s246 + $0x2c8] sm:$0xff] %v425
        %v427 = vld [vmem:[%s245 + $0x2d0] sm:$0xff]
        %428 = vst [vmem:[%s246 + $0x2d0] sm:$0xff] %v427
        %v429 = vld [vmem:[%s245 + $0x2d8] sm:$0xff]
        %430 = vst [vmem:[%s246 + $0x2d8] sm:$0xff] %v429
        %v431 = vld [vmem:[%s245 + $0x2e0] sm:$0xff]
        %432 = vst [vmem:[%s246 + $0x2e0] sm:$0xff] %v431
        %v433 = vld [vmem:[%s245 + $0x2e8] sm:$0xff]
        %434 = vst [vmem:[%s246 + $0x2e8] sm:$0xff] %v433
        %v435 = vld [vmem:[%s245 + $0x2f0] sm:$0xff]
        %436 = vst [vmem:[%s246 + $0x2f0] sm:$0xff] %v435
        %v437 = vld [vmem:[%s245 + $0x2f8] sm:$0xff]
        %438 = vst [vmem:[%s246 + $0x2f8] sm:$0xff] %v437
      $region113: #{nf_full_forward.1} parent=107 // loop_footer
        %s244 = sadd.s32 1, %s240
      $region114: #{nf_full_forward.1} parent=107 // loop_footer_branch
        %239 = sbr.rel target = $region110
      $region115: #{nf_full_forward.1} parent=107 // loop_exit
        _
    $region108: #{nf_full_forward.1} parent=92 // pred_fallthru
      _
    %p439 = pneg %p235
    // Predicated region
    $region116: #{nf_full_forward.1} parent=92 // pred_check
      _
    $region117: #{nf_full_forward.1} parent=92 // pred_check_branch
      %441 = sbr.rel (%p235) target = $region119
    $region118: #{nf_full_forward.1} parent=92 // pred_region
      %s442 = sand.u32 768, 7
    $region119: #{nf_full_forward.1} parent=92 // pred_fallthru
      _
  $region93: #{nf_full_forward.1} parent=0 // pred_fallthru
    _
  // Predicated region
  $region94: #{nf_full_forward.1} parent=0 // pred_check
    %p219 = pneg %p215
  $region95: #{nf_full_forward.1} parent=0 // pred_check_branch
    %221 = sbr.rel (%p219) target = $region97
  $region96: #{nf_full_forward.1} parent=0 // pred_region
    %s222 = sshll.u32 1, 768
    %s223 = ssub.s32 %s222, 1
    loop: start=0, step=1, limit=1
    $region98: #{nf_full_forward.1} parent=96 // loop_pre_header
      _
    $region99: #{nf_full_forward.1} parent=96 // loop_header
      %s225 = sphi 0, %s229
      %p226 = scmp.ge.s32.totalorder %s225, 1
      %s230 = sphi %s8, %s8
      %s231 = sphi [#allocation5], [#allocation5]
    $region100: #{nf_full_forward.1} parent=96 // loop_header_branch
      %228 = sbr.rel (%p226) target = $region104
    $region101: #{nf_full_forward.1} parent=96 // loop_body
      %v232 = vld [vmem:[%s230] sm:%s223]
      %233 = vst [vmem:[%s231] sm:%s223] %v232
    $region102: #{nf_full_forward.1} parent=96 // loop_footer
      %s229 = sadd.s32 1, %s225
    $region103: #{nf_full_forward.1} parent=96 // loop_footer_branch
      %224 = sbr.rel target = $region99
    $region104: #{nf_full_forward.1} parent=96 // loop_exit
      _
  $region97: #{nf_full_forward.1} parent=0 // pred_fallthru
    _
  // Predicated region
  $region120: #{nf_full_forward.1} parent=0 // pred_check
    _
  $region121: #{nf_full_forward.1} parent=0 // pred_check_branch
    %445 = sbr.rel (0) target = $region123
  $region122: #{nf_full_forward.1} parent=0 // pred_region
    %446 = vsyncadd %s213, 12288
  $region123: #{nf_full_forward.1} parent=0 // pred_fallthru
    _
  %s447 = scalar_lea.sflag [#allocation9], 3
  %p449 = scmp.lt.u32.totalorder 2, 8
  %p450 = pneg %p449
  // Predicated region
  $region124: #{nf_full_forward.1} parent=0 // pred_check
    _
  $region125: #{nf_full_forward.1} parent=0 // pred_check_branch
    %452 = sbr.rel (%p449) target = $region127
  $region126: #{nf_full_forward.1} parent=0 // pred_region
    %s468 = sand.u32 2, 7
    %p469 = scmp.eq.s32.totalorder %s468, 0
    %p470 = pneg %p469
    // Predicated region
    $region139: #{nf_full_forward.1} parent=126 // pred_check
      _
    $region140: #{nf_full_forward.1} parent=126 // pred_check_branch
      %472 = sbr.rel (%p469) target = $region142
    $region141: #{nf_full_forward.1} parent=126 // pred_region
      %s473 = sand.u32 2, 7
      %s474 = ssub.s32 2, %s473
      %s475 = scalar_lea.vmem %s9, %s474
      %s476 = ssub.s32 2, %s473
      %s477 = scalar_lea.vmem [#allocation6], %s476
      %s478 = sshll.u32 1, %s473
      %s479 = ssub.s32 %s478, 1
      loop: start=0, step=1, limit=1
      $region143: #{nf_full_forward.1} parent=141 // loop_pre_header
        _
      $region144: #{nf_full_forward.1} parent=141 // loop_header
        %s481 = sphi 0, %s485
        %p482 = scmp.ge.s32.totalorder %s481, 1
        %s486 = sphi %s475, %s475
        %s487 = sphi %s477, %s477
      $region145: #{nf_full_forward.1} parent=141 // loop_header_branch
        %484 = sbr.rel (%p482) target = $region149
      $region146: #{nf_full_forward.1} parent=141 // loop_body
        %v488 = vld [vmem:[%s486] sm:%s479]
        %489 = vst [vmem:[%s487] sm:%s479] %v488
      $region147: #{nf_full_forward.1} parent=141 // loop_footer
        %s485 = sadd.s32 1, %s481
      $region148: #{nf_full_forward.1} parent=141 // loop_footer_branch
        %480 = sbr.rel target = $region144
      $region149: #{nf_full_forward.1} parent=141 // loop_exit
        _
    $region142: #{nf_full_forward.1} parent=126 // pred_fallthru
      _
  $region127: #{nf_full_forward.1} parent=0 // pred_fallthru
    _
  // Predicated region
  $region128: #{nf_full_forward.1} parent=0 // pred_check
    %p453 = pneg %p449
  $region129: #{nf_full_forward.1} parent=0 // pred_check_branch
    %455 = sbr.rel (%p453) target = $region131
  $region130: #{nf_full_forward.1} parent=0 // pred_region
    %s456 = sshll.u32 1, 2
    %s457 = ssub.s32 %s456, 1
    loop: start=0, step=1, limit=1
    $region132: #{nf_full_forward.1} parent=130 // loop_pre_header
      _
    $region133: #{nf_full_forward.1} parent=130 // loop_header
      %s459 = sphi 0, %s463
      %p460 = scmp.ge.s32.totalorder %s459, 1
      %s464 = sphi %s9, %s9
      %s465 = sphi [#allocation6], [#allocation6]
    $region134: #{nf_full_forward.1} parent=130 // loop_header_branch
      %462 = sbr.rel (%p460) target = $region138
    $region135: #{nf_full_forward.1} parent=130 // loop_body
      %v466 = vld [vmem:[%s464] sm:%s457]
      %467 = vst [vmem:[%s465] sm:%s457] %v466
    $region136: #{nf_full_forward.1} parent=130 // loop_footer
      %s463 = sadd.s32 1, %s459
    $region137: #{nf_full_forward.1} parent=130 // loop_footer_branch
      %458 = sbr.rel target = $region133
    $region138: #{nf_full_forward.1} parent=130 // loop_exit
      _
  $region131: #{nf_full_forward.1} parent=0 // pred_fallthru
    _
  // Predicated region
  $region150: #{nf_full_forward.1} parent=0 // pred_check
    _
  $region151: #{nf_full_forward.1} parent=0 // pred_check_branch
    %492 = sbr.rel (0) target = $region153
  $region152: #{nf_full_forward.1} parent=0 // pred_region
    %493 = vsyncadd %s447, 32
  $region153: #{nf_full_forward.1} parent=0 // pred_fallthru
    _
  %s494 = scalar_lea.sflag [#allocation9], 4
  %p496 = scmp.lt.u32.totalorder 768, 8
  %p497 = pneg %p496
  // Predicated region
  $region154: #{nf_full_forward.1} parent=0 // pred_check
    _
  $region155: #{nf_full_forward.1} parent=0 // pred_check_branch
    %499 = sbr.rel (%p496) target = $region157
  $region156: #{nf_full_forward.1} parent=0 // pred_region
    %s515 = sand.u32 768, 7
    %p516 = scmp.eq.s32.totalorder %s515, 0
    // Predicated region
    $region169: #{nf_full_forward.1} parent=156 // pred_check
      %p517 = pneg %p516
    $region170: #{nf_full_forward.1} parent=156 // pred_check_branch
      %519 = sbr.rel (%p517) target = $region172
    $region171: #{nf_full_forward.1} parent=156 // pred_region
      loop: start=0, step=1, limit=1
      $region173: #{nf_full_forward.1} parent=171 // loop_pre_header
        _
      $region174: #{nf_full_forward.1} parent=171 // loop_header
        %s521 = sphi 0, %s525
        %p522 = scmp.ge.s32.totalorder %s521, 1
        %s526 = sphi %s10, %s10
        %s527 = sphi [#allocation7], [#allocation7]
      $region175: #{nf_full_forward.1} parent=171 // loop_header_branch
        %524 = sbr.rel (%p522) target = $region179
      $region176: #{nf_full_forward.1} parent=171 // loop_body
        %v528 = vld [vmem:[%s526] sm:$0xff]
        %529 = vst [vmem:[%s527] sm:$0xff] %v528
        %v530 = vld [vmem:[%s526 + $0x8] sm:$0xff]
        %531 = vst [vmem:[%s527 + $0x8] sm:$0xff] %v530
        %v532 = vld [vmem:[%s526 + $0x10] sm:$0xff]
        %533 = vst [vmem:[%s527 + $0x10] sm:$0xff] %v532
        %v534 = vld [vmem:[%s526 + $0x18] sm:$0xff]
        %535 = vst [vmem:[%s527 + $0x18] sm:$0xff] %v534
        %v536 = vld [vmem:[%s526 + $0x20] sm:$0xff]
        %537 = vst [vmem:[%s527 + $0x20] sm:$0xff] %v536
        %v538 = vld [vmem:[%s526 + $0x28] sm:$0xff]
        %539 = vst [vmem:[%s527 + $0x28] sm:$0xff] %v538
        %v540 = vld [vmem:[%s526 + $0x30] sm:$0xff]
        %541 = vst [vmem:[%s527 + $0x30] sm:$0xff] %v540
        %v542 = vld [vmem:[%s526 + $0x38] sm:$0xff]
        %543 = vst [vmem:[%s527 + $0x38] sm:$0xff] %v542
        %v544 = vld [vmem:[%s526 + $0x40] sm:$0xff]
        %545 = vst [vmem:[%s527 + $0x40] sm:$0xff] %v544
        %v546 = vld [vmem:[%s526 + $0x48] sm:$0xff]
        %547 = vst [vmem:[%s527 + $0x48] sm:$0xff] %v546
        %v548 = vld [vmem:[%s526 + $0x50] sm:$0xff]
        %549 = vst [vmem:[%s527 + $0x50] sm:$0xff] %v548
        %v550 = vld [vmem:[%s526 + $0x58] sm:$0xff]
        %551 = vst [vmem:[%s527 + $0x58] sm:$0xff] %v550
        %v552 = vld [vmem:[%s526 + $0x60] sm:$0xff]
        %553 = vst [vmem:[%s527 + $0x60] sm:$0xff] %v552
        %v554 = vld [vmem:[%s526 + $0x68] sm:$0xff]
        %555 = vst [vmem:[%s527 + $0x68] sm:$0xff] %v554
        %v556 = vld [vmem:[%s526 + $0x70] sm:$0xff]
        %557 = vst [vmem:[%s527 + $0x70] sm:$0xff] %v556
        %v558 = vld [vmem:[%s526 + $0x78] sm:$0xff]
        %559 = vst [vmem:[%s527 + $0x78] sm:$0xff] %v558
        %v560 = vld [vmem:[%s526 + $0x80] sm:$0xff]
        %561 = vst [vmem:[%s527 + $0x80] sm:$0xff] %v560
        %v562 = vld [vmem:[%s526 + $0x88] sm:$0xff]
        %563 = vst [vmem:[%s527 + $0x88] sm:$0xff] %v562
        %v564 = vld [vmem:[%s526 + $0x90] sm:$0xff]
        %565 = vst [vmem:[%s527 + $0x90] sm:$0xff] %v564
        %v566 = vld [vmem:[%s526 + $0x98] sm:$0xff]
        %567 = vst [vmem:[%s527 + $0x98] sm:$0xff] %v566
        %v568 = vld [vmem:[%s526 + $0xa0] sm:$0xff]
        %569 = vst [vmem:[%s527 + $0xa0] sm:$0xff] %v568
        %v570 = vld [vmem:[%s526 + $0xa8] sm:$0xff]
        %571 = vst [vmem:[%s527 + $0xa8] sm:$0xff] %v570
        %v572 = vld [vmem:[%s526 + $0xb0] sm:$0xff]
        %573 = vst [vmem:[%s527 + $0xb0] sm:$0xff] %v572
        %v574 = vld [vmem:[%s526 + $0xb8] sm:$0xff]
        %575 = vst [vmem:[%s527 + $0xb8] sm:$0xff] %v574
        %v576 = vld [vmem:[%s526 + $0xc0] sm:$0xff]
        %577 = vst [vmem:[%s527 + $0xc0] sm:$0xff] %v576
        %v578 = vld [vmem:[%s526 + $0xc8] sm:$0xff]
        %579 = vst [vmem:[%s527 + $0xc8] sm:$0xff] %v578
        %v580 = vld [vmem:[%s526 + $0xd0] sm:$0xff]
        %581 = vst [vmem:[%s527 + $0xd0] sm:$0xff] %v580
        %v582 = vld [vmem:[%s526 + $0xd8] sm:$0xff]
        %583 = vst [vmem:[%s527 + $0xd8] sm:$0xff] %v582
        %v584 = vld [vmem:[%s526 + $0xe0] sm:$0xff]
        %585 = vst [vmem:[%s527 + $0xe0] sm:$0xff] %v584
        %v586 = vld [vmem:[%s526 + $0xe8] sm:$0xff]
        %587 = vst [vmem:[%s527 + $0xe8] sm:$0xff] %v586
        %v588 = vld [vmem:[%s526 + $0xf0] sm:$0xff]
        %589 = vst [vmem:[%s527 + $0xf0] sm:$0xff] %v588
        %v590 = vld [vmem:[%s526 + $0xf8] sm:$0xff]
        %591 = vst [vmem:[%s527 + $0xf8] sm:$0xff] %v590
        %v592 = vld [vmem:[%s526 + $0x100] sm:$0xff]
        %593 = vst [vmem:[%s527 + $0x100] sm:$0xff] %v592
        %v594 = vld [vmem:[%s526 + $0x108] sm:$0xff]
        %595 = vst [vmem:[%s527 + $0x108] sm:$0xff] %v594
        %v596 = vld [vmem:[%s526 + $0x110] sm:$0xff]
        %597 = vst [vmem:[%s527 + $0x110] sm:$0xff] %v596
        %v598 = vld [vmem:[%s526 + $0x118] sm:$0xff]
        %599 = vst [vmem:[%s527 + $0x118] sm:$0xff] %v598
        %v600 = vld [vmem:[%s526 + $0x120] sm:$0xff]
        %601 = vst [vmem:[%s527 + $0x120] sm:$0xff] %v600
        %v602 = vld [vmem:[%s526 + $0x128] sm:$0xff]
        %603 = vst [vmem:[%s527 + $0x128] sm:$0xff] %v602
        %v604 = vld [vmem:[%s526 + $0x130] sm:$0xff]
        %605 = vst [vmem:[%s527 + $0x130] sm:$0xff] %v604
        %v606 = vld [vmem:[%s526 + $0x138] sm:$0xff]
        %607 = vst [vmem:[%s527 + $0x138] sm:$0xff] %v606
        %v608 = vld [vmem:[%s526 + $0x140] sm:$0xff]
        %609 = vst [vmem:[%s527 + $0x140] sm:$0xff] %v608
        %v610 = vld [vmem:[%s526 + $0x148] sm:$0xff]
        %611 = vst [vmem:[%s527 + $0x148] sm:$0xff] %v610
        %v612 = vld [vmem:[%s526 + $0x150] sm:$0xff]
        %613 = vst [vmem:[%s527 + $0x150] sm:$0xff] %v612
        %v614 = vld [vmem:[%s526 + $0x158] sm:$0xff]
        %615 = vst [vmem:[%s527 + $0x158] sm:$0xff] %v614
        %v616 = vld [vmem:[%s526 + $0x160] sm:$0xff]
        %617 = vst [vmem:[%s527 + $0x160] sm:$0xff] %v616
        %v618 = vld [vmem:[%s526 + $0x168] sm:$0xff]
        %619 = vst [vmem:[%s527 + $0x168] sm:$0xff] %v618
        %v620 = vld [vmem:[%s526 + $0x170] sm:$0xff]
        %621 = vst [vmem:[%s527 + $0x170] sm:$0xff] %v620
        %v622 = vld [vmem:[%s526 + $0x178] sm:$0xff]
        %623 = vst [vmem:[%s527 + $0x178] sm:$0xff] %v622
        %v624 = vld [vmem:[%s526 + $0x180] sm:$0xff]
        %625 = vst [vmem:[%s527 + $0x180] sm:$0xff] %v624
        %v626 = vld [vmem:[%s526 + $0x188] sm:$0xff]
        %627 = vst [vmem:[%s527 + $0x188] sm:$0xff] %v626
        %v628 = vld [vmem:[%s526 + $0x190] sm:$0xff]
        %629 = vst [vmem:[%s527 + $0x190] sm:$0xff] %v628
        %v630 = vld [vmem:[%s526 + $0x198] sm:$0xff]
        %631 = vst [vmem:[%s527 + $0x198] sm:$0xff] %v630
        %v632 = vld [vmem:[%s526 + $0x1a0] sm:$0xff]
        %633 = vst [vmem:[%s527 + $0x1a0] sm:$0xff] %v632
        %v634 = vld [vmem:[%s526 + $0x1a8] sm:$0xff]
        %635 = vst [vmem:[%s527 + $0x1a8] sm:$0xff] %v634
        %v636 = vld [vmem:[%s526 + $0x1b0] sm:$0xff]
        %637 = vst [vmem:[%s527 + $0x1b0] sm:$0xff] %v636
        %v638 = vld [vmem:[%s526 + $0x1b8] sm:$0xff]
        %639 = vst [vmem:[%s527 + $0x1b8] sm:$0xff] %v638
        %v640 = vld [vmem:[%s526 + $0x1c0] sm:$0xff]
        %641 = vst [vmem:[%s527 + $0x1c0] sm:$0xff] %v640
        %v642 = vld [vmem:[%s526 + $0x1c8] sm:$0xff]
        %643 = vst [vmem:[%s527 + $0x1c8] sm:$0xff] %v642
        %v644 = vld [vmem:[%s526 + $0x1d0] sm:$0xff]
        %645 = vst [vmem:[%s527 + $0x1d0] sm:$0xff] %v644
        %v646 = vld [vmem:[%s526 + $0x1d8] sm:$0xff]
        %647 = vst [vmem:[%s527 + $0x1d8] sm:$0xff] %v646
        %v648 = vld [vmem:[%s526 + $0x1e0] sm:$0xff]
        %649 = vst [vmem:[%s527 + $0x1e0] sm:$0xff] %v648
        %v650 = vld [vmem:[%s526 + $0x1e8] sm:$0xff]
        %651 = vst [vmem:[%s527 + $0x1e8] sm:$0xff] %v650
        %v652 = vld [vmem:[%s526 + $0x1f0] sm:$0xff]
        %653 = vst [vmem:[%s527 + $0x1f0] sm:$0xff] %v652
        %v654 = vld [vmem:[%s526 + $0x1f8] sm:$0xff]
        %655 = vst [vmem:[%s527 + $0x1f8] sm:$0xff] %v654
        %v656 = vld [vmem:[%s526 + $0x200] sm:$0xff]
        %657 = vst [vmem:[%s527 + $0x200] sm:$0xff] %v656
        %v658 = vld [vmem:[%s526 + $0x208] sm:$0xff]
        %659 = vst [vmem:[%s527 + $0x208] sm:$0xff] %v658
        %v660 = vld [vmem:[%s526 + $0x210] sm:$0xff]
        %661 = vst [vmem:[%s527 + $0x210] sm:$0xff] %v660
        %v662 = vld [vmem:[%s526 + $0x218] sm:$0xff]
        %663 = vst [vmem:[%s527 + $0x218] sm:$0xff] %v662
        %v664 = vld [vmem:[%s526 + $0x220] sm:$0xff]
        %665 = vst [vmem:[%s527 + $0x220] sm:$0xff] %v664
        %v666 = vld [vmem:[%s526 + $0x228] sm:$0xff]
        %667 = vst [vmem:[%s527 + $0x228] sm:$0xff] %v666
        %v668 = vld [vmem:[%s526 + $0x230] sm:$0xff]
        %669 = vst [vmem:[%s527 + $0x230] sm:$0xff] %v668
        %v670 = vld [vmem:[%s526 + $0x238] sm:$0xff]
        %671 = vst [vmem:[%s527 + $0x238] sm:$0xff] %v670
        %v672 = vld [vmem:[%s526 + $0x240] sm:$0xff]
        %673 = vst [vmem:[%s527 + $0x240] sm:$0xff] %v672
        %v674 = vld [vmem:[%s526 + $0x248] sm:$0xff]
        %675 = vst [vmem:[%s527 + $0x248] sm:$0xff] %v674
        %v676 = vld [vmem:[%s526 + $0x250] sm:$0xff]
        %677 = vst [vmem:[%s527 + $0x250] sm:$0xff] %v676
        %v678 = vld [vmem:[%s526 + $0x258] sm:$0xff]
        %679 = vst [vmem:[%s527 + $0x258] sm:$0xff] %v678
        %v680 = vld [vmem:[%s526 + $0x260] sm:$0xff]
        %681 = vst [vmem:[%s527 + $0x260] sm:$0xff] %v680
        %v682 = vld [vmem:[%s526 + $0x268] sm:$0xff]
        %683 = vst [vmem:[%s527 + $0x268] sm:$0xff] %v682
        %v684 = vld [vmem:[%s526 + $0x270] sm:$0xff]
        %685 = vst [vmem:[%s527 + $0x270] sm:$0xff] %v684
        %v686 = vld [vmem:[%s526 + $0x278] sm:$0xff]
        %687 = vst [vmem:[%s527 + $0x278] sm:$0xff] %v686
        %v688 = vld [vmem:[%s526 + $0x280] sm:$0xff]
        %689 = vst [vmem:[%s527 + $0x280] sm:$0xff] %v688
        %v690 = vld [vmem:[%s526 + $0x288] sm:$0xff]
        %691 = vst [vmem:[%s527 + $0x288] sm:$0xff] %v690
        %v692 = vld [vmem:[%s526 + $0x290] sm:$0xff]
        %693 = vst [vmem:[%s527 + $0x290] sm:$0xff] %v692
        %v694 = vld [vmem:[%s526 + $0x298] sm:$0xff]
        %695 = vst [vmem:[%s527 + $0x298] sm:$0xff] %v694
        %v696 = vld [vmem:[%s526 + $0x2a0] sm:$0xff]
        %697 = vst [vmem:[%s527 + $0x2a0] sm:$0xff] %v696
        %v698 = vld [vmem:[%s526 + $0x2a8] sm:$0xff]
        %699 = vst [vmem:[%s527 + $0x2a8] sm:$0xff] %v698
        %v700 = vld [vmem:[%s526 + $0x2b0] sm:$0xff]
        %701 = vst [vmem:[%s527 + $0x2b0] sm:$0xff] %v700
        %v702 = vld [vmem:[%s526 + $0x2b8] sm:$0xff]
        %703 = vst [vmem:[%s527 + $0x2b8] sm:$0xff] %v702
        %v704 = vld [vmem:[%s526 + $0x2c0] sm:$0xff]
        %705 = vst [vmem:[%s527 + $0x2c0] sm:$0xff] %v704
        %v706 = vld [vmem:[%s526 + $0x2c8] sm:$0xff]
        %707 = vst [vmem:[%s527 + $0x2c8] sm:$0xff] %v706
        %v708 = vld [vmem:[%s526 + $0x2d0] sm:$0xff]
        %709 = vst [vmem:[%s527 + $0x2d0] sm:$0xff] %v708
        %v710 = vld [vmem:[%s526 + $0x2d8] sm:$0xff]
        %711 = vst [vmem:[%s527 + $0x2d8] sm:$0xff] %v710
        %v712 = vld [vmem:[%s526 + $0x2e0] sm:$0xff]
        %713 = vst [vmem:[%s527 + $0x2e0] sm:$0xff] %v712
        %v714 = vld [vmem:[%s526 + $0x2e8] sm:$0xff]
        %715 = vst [vmem:[%s527 + $0x2e8] sm:$0xff] %v714
        %v716 = vld [vmem:[%s526 + $0x2f0] sm:$0xff]
        %717 = vst [vmem:[%s527 + $0x2f0] sm:$0xff] %v716
        %v718 = vld [vmem:[%s526 + $0x2f8] sm:$0xff]
        %719 = vst [vmem:[%s527 + $0x2f8] sm:$0xff] %v718
      $region177: #{nf_full_forward.1} parent=171 // loop_footer
        %s525 = sadd.s32 1, %s521
      $region178: #{nf_full_forward.1} parent=171 // loop_footer_branch
        %520 = sbr.rel target = $region174
      $region179: #{nf_full_forward.1} parent=171 // loop_exit
        _
    $region172: #{nf_full_forward.1} parent=156 // pred_fallthru
      _
    %p720 = pneg %p516
    // Predicated region
    $region180: #{nf_full_forward.1} parent=156 // pred_check
      _
    $region181: #{nf_full_forward.1} parent=156 // pred_check_branch
      %722 = sbr.rel (%p516) target = $region183
    $region182: #{nf_full_forward.1} parent=156 // pred_region
      %s723 = sand.u32 768, 7
    $region183: #{nf_full_forward.1} parent=156 // pred_fallthru
      _
  $region157: #{nf_full_forward.1} parent=0 // pred_fallthru
    _
  // Predicated region
  $region158: #{nf_full_forward.1} parent=0 // pred_check
    %p500 = pneg %p496
  $region159: #{nf_full_forward.1} parent=0 // pred_check_branch
    %502 = sbr.rel (%p500) target = $region161
  $region160: #{nf_full_forward.1} parent=0 // pred_region
    %s503 = sshll.u32 1, 768
    %s504 = ssub.s32 %s503, 1
    loop: start=0, step=1, limit=1
    $region162: #{nf_full_forward.1} parent=160 // loop_pre_header
      _
    $region163: #{nf_full_forward.1} parent=160 // loop_header
      %s506 = sphi 0, %s510
      %p507 = scmp.ge.s32.totalorder %s506, 1
      %s511 = sphi %s10, %s10
      %s512 = sphi [#allocation7], [#allocation7]
    $region164: #{nf_full_forward.1} parent=160 // loop_header_branch
      %509 = sbr.rel (%p507) target = $region168
    $region165: #{nf_full_forward.1} parent=160 // loop_body
      %v513 = vld [vmem:[%s511] sm:%s504]
      %514 = vst [vmem:[%s512] sm:%s504] %v513
    $region166: #{nf_full_forward.1} parent=160 // loop_footer
      %s510 = sadd.s32 1, %s506
    $region167: #{nf_full_forward.1} parent=160 // loop_footer_branch
      %505 = sbr.rel target = $region163
    $region168: #{nf_full_forward.1} parent=160 // loop_exit
      _
  $region161: #{nf_full_forward.1} parent=0 // pred_fallthru
    _
  // Predicated region
  $region184: #{nf_full_forward.1} parent=0 // pred_check
    _
  $region185: #{nf_full_forward.1} parent=0 // pred_check_branch
    %726 = sbr.rel (0) target = $region187
  $region186: #{nf_full_forward.1} parent=0 // pred_region
    %727 = vsyncadd %s494, 12288
  $region187: #{nf_full_forward.1} parent=0 // pred_fallthru
    _
  %s728 = scalar_lea.sflag [#allocation9], 5
  %p730 = scmp.lt.u32.totalorder 3, 8
  %p731 = pneg %p730
  // Predicated region
  $region188: #{nf_full_forward.1} parent=0 // pred_check
    _
  $region189: #{nf_full_forward.1} parent=0 // pred_check_branch
    %733 = sbr.rel (%p730) target = $region191
  $region190: #{nf_full_forward.1} parent=0 // pred_region
    %s749 = sand.u32 3, 7
    %p750 = scmp.eq.s32.totalorder %s749, 0
    %p751 = pneg %p750
    // Predicated region
    $region203: #{nf_full_forward.1} parent=190 // pred_check
      _
    $region204: #{nf_full_forward.1} parent=190 // pred_check_branch
      %753 = sbr.rel (%p750) target = $region206
    $region205: #{nf_full_forward.1} parent=190 // pred_region
      %s754 = sand.u32 3, 7
      %s755 = ssub.s32 3, %s754
      %s756 = scalar_lea.vmem %s11, %s755
      %s757 = ssub.s32 3, %s754
      %s758 = scalar_lea.vmem [#allocation8], %s757
      %s759 = sshll.u32 1, %s754
      %s760 = ssub.s32 %s759, 1
      loop: start=0, step=1, limit=1
      $region207: #{nf_full_forward.1} parent=205 // loop_pre_header
        _
      $region208: #{nf_full_forward.1} parent=205 // loop_header
        %s762 = sphi 0, %s766
        %p763 = scmp.ge.s32.totalorder %s762, 1
        %s767 = sphi %s756, %s756
        %s768 = sphi %s758, %s758
      $region209: #{nf_full_forward.1} parent=205 // loop_header_branch
        %765 = sbr.rel (%p763) target = $region213
      $region210: #{nf_full_forward.1} parent=205 // loop_body
        %v769 = vld [vmem:[%s767] sm:%s760]
        %770 = vst [vmem:[%s768] sm:%s760] %v769
      $region211: #{nf_full_forward.1} parent=205 // loop_footer
        %s766 = sadd.s32 1, %s762
      $region212: #{nf_full_forward.1} parent=205 // loop_footer_branch
        %761 = sbr.rel target = $region208
      $region213: #{nf_full_forward.1} parent=205 // loop_exit
        _
    $region206: #{nf_full_forward.1} parent=190 // pred_fallthru
      _
  $region191: #{nf_full_forward.1} parent=0 // pred_fallthru
    _
  // Predicated region
  $region192: #{nf_full_forward.1} parent=0 // pred_check
    %p734 = pneg %p730
  $region193: #{nf_full_forward.1} parent=0 // pred_check_branch
    %736 = sbr.rel (%p734) target = $region195
  $region194: #{nf_full_forward.1} parent=0 // pred_region
    %s737 = sshll.u32 1, 3
    %s738 = ssub.s32 %s737, 1
    loop: start=0, step=1, limit=1
    $region196: #{nf_full_forward.1} parent=194 // loop_pre_header
      _
    $region197: #{nf_full_forward.1} parent=194 // loop_header
      %s740 = sphi 0, %s744
      %p741 = scmp.ge.s32.totalorder %s740, 1
      %s745 = sphi %s11, %s11
      %s746 = sphi [#allocation8], [#allocation8]
    $region198: #{nf_full_forward.1} parent=194 // loop_header_branch
      %743 = sbr.rel (%p741) target = $region202
    $region199: #{nf_full_forward.1} parent=194 // loop_body
      %v747 = vld [vmem:[%s745] sm:%s738]
      %748 = vst [vmem:[%s746] sm:%s738] %v747
    $region200: #{nf_full_forward.1} parent=194 // loop_footer
      %s744 = sadd.s32 1, %s740
    $region201: #{nf_full_forward.1} parent=194 // loop_footer_branch
      %739 = sbr.rel target = $region197
    $region202: #{nf_full_forward.1} parent=194 // loop_exit
      _
  $region195: #{nf_full_forward.1} parent=0 // pred_fallthru
    _
  // Predicated region
  $region214: #{nf_full_forward.1} parent=0 // pred_check
    _
  $region215: #{nf_full_forward.1} parent=0 // pred_check_branch
    %773 = sbr.rel (0) target = $region217
  $region216: #{nf_full_forward.1} parent=0 // pred_region
    %774 = vsyncadd %s728, 48
  $region217: #{nf_full_forward.1} parent=0 // pred_fallthru
    _
  %v775 = vld [vmem:[%s0] sm:$0xff]
  %v776 = vld [vmem:[%s0 + $0x8] sm:$0xff]
  %v777 = vld [vmem:[%s0 + $0x10] sm:$0xff]
  %v778 = vld [vmem:[%s0 + $0x18] sm:$0xff]
  %v779 = vld [vmem:[%s0 + $0x20] sm:$0xff]
  %v780 = vld [vmem:[%s0 + $0x28] sm:$0xff]
  %v781 = vld [vmem:[%s0 + $0x30] sm:$0xff]
  %v782 = vld [vmem:[%s0 + $0x38] sm:$0xff]
  %v783 = vld [vmem:[%s2] sm:$0xff]
  %v784 = vld [vmem:[%s2 + $0x8] sm:$0xff]
  %v785 = vld [vmem:[%s2 + $0x10] sm:$0xff]
  %v786 = vld [vmem:[%s2 + $0x18] sm:$0xff]
  %v787 = vld [vmem:[%s2 + $0x20] sm:$0xff]
  %v788 = vld [vmem:[%s2 + $0x28] sm:$0xff]
  %v789 = vld [vmem:[%s3] sm:$0x7]
  %v791 = vlaneseq
  %v792 = vshrl.u32 %v791, 7
  %v793 = vsub.s32 0, %v792
  %v794 = vrot.slane %v789, %v793
  %v795 = vlaneseq
  %v796 = vshrl.u32 %v795, 7
  %v797 = vsub.s32 1, %v796
  %v798 = vrot.slane %v789, %v797
  %v799 = vlaneseq
  %v800 = vshrl.u32 %v799, 7
  %v801 = vsub.s32 2, %v800
  %v802 = vrot.slane %v789, %v801
  %vm806 = vcmask 130048
  %v808 = vsel %vm806, %v775, 0
  %v811 = vsel %vm806, %v776, 0
  %v814 = vsel %vm806, %v777, 0
  %v817 = vsel %vm806, %v778, 0
  %v820 = vsel %vm806, %v779, 0
  %v823 = vsel %vm806, %v780, 0
  %v826 = vsel %vm806, %v781, 0
  %v829 = vsel %vm806, %v782, 0
  %831 = vmatprep.subr.mxu0 0.0
  %832 = vmatpush1.msra.mxu0 0.0
  %833 = vmatprep.subr.mxu0 0.0
  %834 = vmatpush1.msra.mxu0 0.0
  %835 = vmatprep.subr.mxu0 0.0
  %836 = vmatpush1.msra.mxu0 0.0
  %837 = vmatprep.subr.mxu0 0.0
  %838 = vmatpush1.msra.mxu0 0.0
  %839 = vmatprep.subr.mxu0 0.0
  %840 = vmatpush1.msra.mxu0 0.0
  %841 = vmatprep.subr.mxu0 0.0
  %842 = vmatpush1.msra.mxu0 0.0
  %843 = vmatprep.subr.mxu0 0.0
  %844 = vmatpush1.msra.mxu0 0.0
  %845 = vmatprep.subr.mxu0 0.0
  %846 = vmatpush1.msra.mxu0 0.0
  %847 = vmatprep.subr.mxu0 0.0
  %848 = vmatpush1.msra.mxu0 0.0
  %849 = vmatprep.subr.mxu0 0.0
  %850 = vmatpush1.msra.mxu0 0.0
  %851 = vmatprep.subr.mxu0 0.0
  %852 = vmatpush1.msra.mxu0 0.0
  %853 = vmatprep.subr.mxu0 0.0
  %854 = vmatpush1.msra.mxu0 0.0
  %855 = vmatprep.subr.mxu0 0.0
  %856 = vmatpush1.msra.mxu0 0.0
  %857 = vmatprep.subr.mxu0 0.0
  %858 = vmatpush1.msra.mxu0 0.0
  %859 = vmatprep.subr.mxu0 %v787
  %860 = vmatpush1.msra.mxu0 %v786
  %861 = vmatprep.subr.mxu0 %v784
  %862 = vmatpush1.msra.mxu0 %v783
  %863 = vmatprep.subr.mxu0 0.0
  %864 = vmatpush2.msra.mxu0 0.0
  %865 = vmatprep.subr.mxu0 0.0
  %866 = vmatpush2.msra.mxu0 0.0
  %867 = vmatprep.subr.mxu0 0.0
  %868 = vmatpush2.msra.mxu0 0.0
  %869 = vmatprep.subr.mxu0 0.0
  %870 = vmatpush2.msra.mxu0 0.0
  %871 = vmatprep.subr.mxu0 0.0
  %872 = vmatpush2.msra.mxu0 0.0
  %873 = vmatprep.subr.mxu0 0.0
  %874 = vmatpush2.msra.mxu0 0.0
  %875 = vmatprep.subr.mxu0 0.0
  %876 = vmatpush2.msra.mxu0 0.0
  %877 = vmatprep.subr.mxu0 0.0
  %878 = vmatpush2.msra.mxu0 0.0
  %879 = vmatprep.subr.mxu0 0.0
  %880 = vmatpush2.msra.mxu0 0.0
  %881 = vmatprep.subr.mxu0 0.0
  %882 = vmatpush2.msra.mxu0 0.0
  %883 = vmatprep.subr.mxu0 0.0
  %884 = vmatpush2.msra.mxu0 0.0
  %885 = vmatprep.subr.mxu0 0.0
  %886 = vmatpush2.msra.mxu0 0.0
  %887 = vmatprep.subr.mxu0 0.0
  %888 = vmatpush2.msra.mxu0 0.0
  %889 = vmatprep.subr.mxu0 0.0
  %890 = vmatpush2.msra.mxu0 0.0
  %891 = vmatprep.subr.mxu0 0.0
  %892 = vmatpush2.msra.mxu0 0.0
  %893 = vmatprep.subr.mxu0 0.0
  %894 = vmatpush2.msra.mxu0 0.0
  %895 = vmatprep.mubr.f32.mxu0 0.0
  %896 = vmatmul.mubr.f32.gmra.mxu0 %v808
  %v897 = vpop.f32.mrf.mxu0
  %v898 = vadd.f32 %v794, %v897
  %v899 = vpop.f32.mrf.mxu0
  %v900 = vadd.f32 %v798, %v899
  %901 = vmatprep.mubr.f32.mxu0 0.0
  %902 = vmatmul.mubr.f32.gmra.mxu0 %v811
  %v903 = vpop.f32.mrf.mxu0
  %v904 = vadd.f32 %v794, %v903
  %v905 = vpop.f32.mrf.mxu0
  %v906 = vadd.f32 %v798, %v905
  %907 = vmatprep.mubr.f32.mxu0 0.0
  %908 = vmatmul.mubr.f32.gmra.mxu0 %v814
  %v909 = vpop.f32.mrf.mxu0
  %v910 = vadd.f32 %v794, %v909
  %v911 = vpop.f32.mrf.mxu0
  %v912 = vadd.f32 %v798, %v911
  %913 = vmatprep.mubr.f32.mxu0 0.0
  %914 = vmatmul.mubr.f32.gmra.mxu0 %v817
  %v915 = vpop.f32.mrf.mxu0
  %v916 = vadd.f32 %v794, %v915
  %v917 = vpop.f32.mrf.mxu0
  %v918 = vadd.f32 %v798, %v917
  %919 = vmatprep.mubr.f32.mxu0 0.0
  %920 = vmatmul.mubr.f32.gmra.mxu0 %v820
  %v921 = vpop.f32.mrf.mxu0
  %v922 = vadd.f32 %v794, %v921
  %v923 = vpop.f32.mrf.mxu0
  %v924 = vadd.f32 %v798, %v923
  %925 = vmatprep.mubr.f32.mxu0 0.0
  %926 = vmatmul.mubr.f32.gmra.mxu0 %v823
  %v927 = vpop.f32.mrf.mxu0
  %v928 = vadd.f32 %v794, %v927
  %v929 = vpop.f32.mrf.mxu0
  %v930 = vadd.f32 %v798, %v929
  %931 = vmatprep.mubr.f32.mxu0 0.0
  %932 = vmatmul.mubr.f32.gmra.mxu0 %v826
  %v933 = vpop.f32.mrf.mxu0
  %v934 = vadd.f32 %v794, %v933
  %v935 = vpop.f32.mrf.mxu0
  %v936 = vadd.f32 %v798, %v935
  %937 = vmatprep.mubr.f32.mxu0 0.0
  %938 = vmatmul.mubr.f32.gmra.mxu0 %v829
  %v939 = vpop.f32.mrf.mxu0
  %v940 = vadd.f32 %v794, %v939
  %v941 = vpop.f32.mrf.mxu0
  %v942 = vadd.f32 %v798, %v941
  %943 = vdwg.mxu0
  %944 = vmatprep.subr.mxu0 0.0
  %945 = vmatpush1.msra.mxu0 0.0
  %946 = vmatprep.subr.mxu0 0.0
  %947 = vmatpush1.msra.mxu0 0.0
  %948 = vmatprep.subr.mxu0 0.0
  %949 = vmatpush1.msra.mxu0 0.0
  %950 = vmatprep.subr.mxu0 0.0
  %951 = vmatpush1.msra.mxu0 0.0
  %952 = vmatprep.subr.mxu0 0.0
  %953 = vmatpush1.msra.mxu0 0.0
  %954 = vmatprep.subr.mxu0 0.0
  %955 = vmatpush1.msra.mxu0 0.0
  %956 = vmatprep.subr.mxu0 0.0
  %957 = vmatpush1.msra.mxu0 0.0
  %958 = vmatprep.subr.mxu0 0.0
  %959 = vmatpush1.msra.mxu0 0.0
  %960 = vmatprep.subr.mxu0 0.0
  %961 = vmatpush1.msra.mxu0 0.0
  %962 = vmatprep.subr.mxu0 0.0
  %963 = vmatpush1.msra.mxu0 0.0
  %964 = vmatprep.subr.mxu0 0.0
  %965 = vmatpush1.msra.mxu0 0.0
  %966 = vmatprep.subr.mxu0 0.0
  %967 = vmatpush1.msra.mxu0 0.0
  %968 = vmatprep.subr.mxu0 0.0
  %969 = vmatpush1.msra.mxu0 0.0
  %970 = vmatprep.subr.mxu0 0.0
  %971 = vmatpush1.msra.mxu0 0.0
  %972 = vmatprep.subr.mxu0 0.0
  %973 = vmatpush1.msra.mxu0 %v788
  %974 = vmatprep.subr.mxu0 0.0
  %975 = vmatpush1.msra.mxu0 %v785
  %976 = vmatprep.subr.mxu0 0.0
  %977 = vmatpush2.msra.mxu0 0.0
  %978 = vmatprep.subr.mxu0 0.0
  %979 = vmatpush2.msra.mxu0 0.0
  %980 = vmatprep.subr.mxu0 0.0
  %981 = vmatpush2.msra.mxu0 0.0
  %982 = vmatprep.subr.mxu0 0.0
  %983 = vmatpush2.msra.mxu0 0.0
  %984 = vmatprep.subr.mxu0 0.0
  %985 = vmatpush2.msra.mxu0 0.0
  %986 = vmatprep.subr.mxu0 0.0
  %987 = vmatpush2.msra.mxu0 0.0
  %988 = vmatprep.subr.mxu0 0.0
  %989 = vmatpush2.msra.mxu0 0.0
  %990 = vmatprep.subr.mxu0 0.0
  %991 = vmatpush2.msra.mxu0 0.0
  %992 = vmatprep.subr.mxu0 0.0
  %993 = vmatpush2.msra.mxu0 0.0
  %994 = vmatprep.subr.mxu0 0.0
  %995 = vmatpush2.msra.mxu0 0.0
  %996 = vmatprep.subr.mxu0 0.0
  %997 = vmatpush2.msra.mxu0 0.0
  %998 = vmatprep.subr.mxu0 0.0
  %999 = vmatpush2.msra.mxu0 0.0
  %1000 = vmatprep.subr.mxu0 0.0
  %1001 = vmatpush2.msra.mxu0 0.0
  %1002 = vmatprep.subr.mxu0 0.0
  %1003 = vmatpush2.msra.mxu0 0.0
  %1004 = vmatprep.subr.mxu0 0.0
  %1005 = vmatpush2.msra.mxu0 0.0
  %1006 = vmatprep.subr.mxu0 0.0
  %1007 = vmatpush2.msra.mxu0 0.0
  %1008 = vmatprep.mubr.f32.mxu0 0.0
  %1009 = vmatmul.mubr.f32.gmra.mxu0 %v808
  %v1010 = vpop.f32.mrf.mxu0
  %v1011 = vadd.f32 %v802, %v1010
  %v1012 = vpop.f32.mrf.mxu0
  %1013 = vmatprep.mubr.f32.mxu0 0.0
  %1014 = vmatmul.mubr.f32.gmra.mxu0 %v811
  %v1015 = vpop.f32.mrf.mxu0
  %v1016 = vadd.f32 %v802, %v1015
  %v1017 = vpop.f32.mrf.mxu0
  %1018 = vmatprep.mubr.f32.mxu0 0.0
  %1019 = vmatmul.mubr.f32.gmra.mxu0 %v814
  %v1020 = vpop.f32.mrf.mxu0
  %v1021 = vadd.f32 %v802, %v1020
  %v1022 = vpop.f32.mrf.mxu0
  %1023 = vmatprep.mubr.f32.mxu0 0.0
  %1024 = vmatmul.mubr.f32.gmra.mxu0 %v817
  %v1025 = vpop.f32.mrf.mxu0
  %v1026 = vadd.f32 %v802, %v1025
  %v1027 = vpop.f32.mrf.mxu0
  %1028 = vmatprep.mubr.f32.mxu0 0.0
  %1029 = vmatmul.mubr.f32.gmra.mxu0 %v820
  %v1030 = vpop.f32.mrf.mxu0
  %v1031 = vadd.f32 %v802, %v1030
  %v1032 = vpop.f32.mrf.mxu0
  %1033 = vmatprep.mubr.f32.mxu0 0.0
  %1034 = vmatmul.mubr.f32.gmra.mxu0 %v823
  %v1035 = vpop.f32.mrf.mxu0
  %v1036 = vadd.f32 %v802, %v1035
  %v1037 = vpop.f32.mrf.mxu0
  %1038 = vmatprep.mubr.f32.mxu0 0.0
  %1039 = vmatmul.mubr.f32.gmra.mxu0 %v826
  %v1040 = vpop.f32.mrf.mxu0
  %v1041 = vadd.f32 %v802, %v1040
  %v1042 = vpop.f32.mrf.mxu0
  %1043 = vmatprep.mubr.f32.mxu0 0.0
  %1044 = vmatmul.mubr.f32.gmra.mxu0 %v829
  %v1045 = vpop.f32.mrf.mxu0
  %v1046 = vadd.f32 %v802, %v1045
  %v1047 = vpop.f32.mrf.mxu0
  %1048 = vdwg.mxu0
  %1049 = vst [vmem:[#allocation2] sm:$0xff] %v898
  %1050 = vst [vmem:[#allocation2 + $0x8] sm:$0xff] %v900
  %1051 = vst [vmem:[#allocation2 + $0x10] sm:$0xff] %v1011
  %1052 = vst [vmem:[#allocation2 + $0x18] sm:$0xff] %v904
  %1053 = vst [vmem:[#allocation2 + $0x20] sm:$0xff] %v906
  %1054 = vst [vmem:[#allocation2 + $0x28] sm:$0xff] %v1016
  %1055 = vst [vmem:[#allocation2 + $0x30] sm:$0xff] %v910
  %1056 = vst [vmem:[#allocation2 + $0x38] sm:$0xff] %v912
  %1057 = vst [vmem:[#allocation2 + $0x40] sm:$0xff] %v1021
  %1058 = vst [vmem:[#allocation2 + $0x48] sm:$0xff] %v916
  %1059 = vst [vmem:[#allocation2 + $0x50] sm:$0xff] %v918
  %1060 = vst [vmem:[#allocation2 + $0x58] sm:$0xff] %v1026
  %1061 = vst [vmem:[#allocation2 + $0x60] sm:$0xff] %v922
  %1062 = vst [vmem:[#allocation2 + $0x68] sm:$0xff] %v924
  %1063 = vst [vmem:[#allocation2 + $0x70] sm:$0xff] %v1031
  %1064 = vst [vmem:[#allocation2 + $0x78] sm:$0xff] %v928
  %1065 = vst [vmem:[#allocation2 + $0x80] sm:$0xff] %v930
  %1066 = vst [vmem:[#allocation2 + $0x88] sm:$0xff] %v1036
  %1067 = vst [vmem:[#allocation2 + $0x90] sm:$0xff] %v934
  %1068 = vst [vmem:[#allocation2 + $0x98] sm:$0xff] %v936
  %1069 = vst [vmem:[#allocation2 + $0xa0] sm:$0xff] %v1041
  %1070 = vst [vmem:[#allocation2 + $0xa8] sm:$0xff] %v940
  %1071 = vst [vmem:[#allocation2 + $0xb0] sm:$0xff] %v942
  %1072 = vst [vmem:[#allocation2 + $0xb8] sm:$0xff] %v1046
  %v1073 = vld [vmem:[%s5] sm:$0x7]
  %v1075 = vlaneseq
  %v1076 = vshrl.u32 %v1075, 7
  %v1077 = vsub.s32 0, %v1076
  %v1078 = vrot.slane %v1073, %v1077
  %v1079 = vlaneseq
  %v1080 = vshrl.u32 %v1079, 7
  %v1081 = vsub.s32 1, %v1080
  %v1082 = vrot.slane %v1073, %v1081
  %v1083 = vlaneseq
  %v1084 = vshrl.u32 %v1083, 7
  %v1085 = vsub.s32 2, %v1084
  %v1086 = vrot.slane %v1073, %v1085
  %v1090 = vld [vmem:[#allocation2] sm:$0xff]
  %v1091 = vld [vmem:[#allocation2 + $0x8] sm:$0xff]
  %v1092 = vld [vmem:[#allocation2 + $0x10] sm:$0xff]
  %v1093 = vld [vmem:[%s4] sm:$0xff]
  %v1094 = vld [vmem:[%s4 + $0x8] sm:$0xff]
  %v1095 = vld [vmem:[%s4 + $0x10] sm:$0xff]
  %v1096 = vld [vmem:[%s4 + $0x18] sm:$0xff]
  %v1097 = vld [vmem:[%s4 + $0x20] sm:$0xff]
  %v1098 = vld [vmem:[%s4 + $0x28] sm:$0xff]
  %v1099 = vld [vmem:[%s4 + $0x30] sm:$0xff]
  %v1100 = vld [vmem:[%s4 + $0x38] sm:$0xff]
  %v1101 = vld [vmem:[%s4 + $0x40] sm:$0xff]
  %v1102 = vld [vmem:[%s4 + $0x48] sm:$0xff]
  %v1103 = vld [vmem:[%s4 + $0x50] sm:$0xff]
  %v1104 = vld [vmem:[%s4 + $0x58] sm:$0xff]
  %v1105 = vld [vmem:[%s4 + $0x60] sm:$0xff]
  %v1106 = vld [vmem:[%s4 + $0x68] sm:$0xff]
  %v1107 = vld [vmem:[%s4 + $0x70] sm:$0xff]
  %v1108 = vld [vmem:[%s4 + $0x78] sm:$0xff]
  %v1109 = vld [vmem:[%s4 + $0x80] sm:$0xff]
  %v1110 = vld [vmem:[%s4 + $0x88] sm:$0xff]
  %v1111 = vld [vmem:[%s4 + $0x90] sm:$0xff]
  %v1112 = vld [vmem:[%s4 + $0x98] sm:$0xff]
  %v1113 = vld [vmem:[%s4 + $0xa0] sm:$0xff]
  %v1114 = vld [vmem:[%s4 + $0xa8] sm:$0xff]
  %v1115 = vld [vmem:[%s4 + $0xb0] sm:$0xff]
  %v1116 = vld [vmem:[%s4 + $0xb8] sm:$0xff]
  %v1117 = vld [vmem:[%s4 + $0xc0] sm:$0xff]
  %v1118 = vld [vmem:[%s4 + $0xc8] sm:$0xff]
  %v1119 = vld [vmem:[%s4 + $0xd0] sm:$0xff]
  %v1120 = vld [vmem:[%s4 + $0xd8] sm:$0xff]
  %v1121 = vld [vmem:[%s4 + $0xe0] sm:$0xff]
  %v1122 = vld [vmem:[%s4 + $0xe8] sm:$0xff]
  %v1123 = vld [vmem:[%s4 + $0xf0] sm:$0xff]
  %v1124 = vld [vmem:[%s4 + $0xf8] sm:$0xff]
  %v1125 = vld [vmem:[%s4 + $0x100] sm:$0xff]
  %v1126 = vld [vmem:[%s4 + $0x108] sm:$0xff]
  %v1127 = vld [vmem:[%s4 + $0x110] sm:$0xff]
  %v1128 = vld [vmem:[%s4 + $0x118] sm:$0xff]
  %v1129 = vld [vmem:[%s4 + $0x120] sm:$0xff]
  %v1130 = vld [vmem:[%s4 + $0x128] sm:$0xff]
  %v1131 = vld [vmem:[%s4 + $0x130] sm:$0xff]
  %v1132 = vld [vmem:[%s4 + $0x138] sm:$0xff]
  %v1133 = vld [vmem:[%s4 + $0x140] sm:$0xff]
  %v1134 = vld [vmem:[%s4 + $0x148] sm:$0xff]
  %v1135 = vld [vmem:[%s4 + $0x150] sm:$0xff]
  %v1136 = vld [vmem:[%s4 + $0x158] sm:$0xff]
  %v1137 = vld [vmem:[%s4 + $0x160] sm:$0xff]
  %v1138 = vld [vmem:[%s4 + $0x168] sm:$0xff]
  %v1139 = vld [vmem:[%s4 + $0x170] sm:$0xff]
  %v1140 = vld [vmem:[%s4 + $0x178] sm:$0xff]
  %1141 = vmatprep.subr.mxu0 %v1139
  %1142 = vmatpush1.msra.mxu0 %v1138
  %1143 = vmatprep.subr.mxu0 %v1136
  %1144 = vmatpush1.msra.mxu0 %v1135
  %1145 = vmatprep.subr.mxu0 %v1133
  %1146 = vmatpush1.msra.mxu0 %v1132
  %1147 = vmatprep.subr.mxu0 %v1130
  %1148 = vmatpush1.msra.mxu0 %v1129
  %1149 = vmatprep.subr.mxu0 %v1127
  %1150 = vmatpush1.msra.mxu0 %v1126
  %1151 = vmatprep.subr.mxu0 %v1124
  %1152 = vmatpush1.msra.mxu0 %v1123
  %1153 = vmatprep.subr.mxu0 %v1121
  %1154 = vmatpush1.msra.mxu0 %v1120
  %1155 = vmatprep.subr.mxu0 %v1118
  %1156 = vmatpush1.msra.mxu0 %v1117
  %1157 = vmatprep.subr.mxu0 %v1115
  %1158 = vmatpush1.msra.mxu0 %v1114
  %1159 = vmatprep.subr.mxu0 %v1112
  %1160 = vmatpush1.msra.mxu0 %v1111
  %1161 = vmatprep.subr.mxu0 %v1109
  %1162 = vmatpush1.msra.mxu0 %v1108
  %1163 = vmatprep.subr.mxu0 %v1106
  %1164 = vmatpush1.msra.mxu0 %v1105
  %1165 = vmatprep.subr.mxu0 %v1103
  %1166 = vmatpush1.msra.mxu0 %v1102
  %1167 = vmatprep.subr.mxu0 %v1100
  %1168 = vmatpush1.msra.mxu0 %v1099
  %1169 = vmatprep.subr.mxu0 %v1097
  %1170 = vmatpush1.msra.mxu0 %v1096
  %1171 = vmatprep.subr.mxu0 %v1094
  %1172 = vmatpush1.msra.mxu0 %v1093
  %1173 = vmatprep.subr.mxu0 0.0
  %1174 = vmatpush2.msra.mxu0 0.0
  %1175 = vmatprep.subr.mxu0 0.0
  %1176 = vmatpush2.msra.mxu0 0.0
  %1177 = vmatprep.subr.mxu0 0.0
  %1178 = vmatpush2.msra.mxu0 0.0
  %1179 = vmatprep.subr.mxu0 0.0
  %1180 = vmatpush2.msra.mxu0 0.0
  %1181 = vmatprep.subr.mxu0 0.0
  %1182 = vmatpush2.msra.mxu0 0.0
  %1183 = vmatprep.subr.mxu0 0.0
  %1184 = vmatpush2.msra.mxu0 0.0
  %1185 = vmatprep.subr.mxu0 0.0
  %1186 = vmatpush2.msra.mxu0 0.0
  %1187 = vmatprep.subr.mxu0 0.0
  %1188 = vmatpush2.msra.mxu0 0.0
  %1189 = vmatprep.subr.mxu0 0.0
  %1190 = vmatpush2.msra.mxu0 0.0
  %1191 = vmatprep.subr.mxu0 0.0
  %1192 = vmatpush2.msra.mxu0 0.0
  %1193 = vmatprep.subr.mxu0 0.0
  %1194 = vmatpush2.msra.mxu0 0.0
  %1195 = vmatprep.subr.mxu0 0.0
  %1196 = vmatpush2.msra.mxu0 0.0
  %1197 = vmatprep.subr.mxu0 0.0
  %1198 = vmatpush2.msra.mxu0 0.0
  %1199 = vmatprep.subr.mxu0 0.0
  %1200 = vmatpush2.msra.mxu0 0.0
  %1201 = vmatprep.subr.mxu0 0.0
  %1202 = vmatpush2.msra.mxu0 0.0
  %1203 = vmatprep.subr.mxu0 0.0
  %1204 = vmatpush2.msra.mxu0 0.0
  %1205 = vmatprep.mubr.f32.mxu0 0.0
  %1206 = vmatmul.mubr.f32.gmra.mxu0 0.0
  %v1207 = vpop.f32.mrf.mxu0
  %v1208 = vadd.f32 %v1078, %v1207
  %v1209 = vpop.f32.mrf.mxu0
  %v1210 = vadd.f32 %v1082, %v1209
  %1211 = vdwg.mxu0
  %1212 = vmatprep.subr.mxu0 0.0
  %1213 = vmatpush1.msra.mxu0 %v1140
  %1214 = vmatprep.subr.mxu0 0.0
  %1215 = vmatpush1.msra.mxu0 %v1137
  %1216 = vmatprep.subr.mxu0 0.0
  %1217 = vmatpush1.msra.mxu0 %v1134
  %1218 = vmatprep.subr.mxu0 0.0
  %1219 = vmatpush1.msra.mxu0 %v1131
  %1220 = vmatprep.subr.mxu0 0.0
  %1221 = vmatpush1.msra.mxu0 %v1128
  %1222 = vmatprep.subr.mxu0 0.0
  %1223 = vmatpush1.msra.mxu0 %v1125
  %1224 = vmatprep.subr.mxu0 0.0
  %1225 = vmatpush1.msra.mxu0 %v1122
  %1226 = vmatprep.subr.mxu0 0.0
  %1227 = vmatpush1.msra.mxu0 %v1119
  %1228 = vmatprep.subr.mxu0 0.0
  %1229 = vmatpush1.msra.mxu0 %v1116
  %1230 = vmatprep.subr.mxu0 0.0
  %1231 = vmatpush1.msra.mxu0 %v1113
  %1232 = vmatprep.subr.mxu0 0.0
  %1233 = vmatpush1.msra.mxu0 %v1110
  %1234 = vmatprep.subr.mxu0 0.0
  %1235 = vmatpush1.msra.mxu0 %v1107
  %1236 = vmatprep.subr.mxu0 0.0
  %1237 = vmatpush1.msra.mxu0 %v1104
  %1238 = vmatprep.subr.mxu0 0.0
  %1239 = vmatpush1.msra.mxu0 %v1101
  %1240 = vmatprep.subr.mxu0 0.0
  %1241 = vmatpush1.msra.mxu0 %v1098
  %1242 = vmatprep.subr.mxu0 0.0
  %1243 = vmatpush1.msra.mxu0 %v1095
  %1244 = vmatprep.subr.mxu0 0.0
  %1245 = vmatpush2.msra.mxu0 0.0
  %1246 = vmatprep.subr.mxu0 0.0
  %1247 = vmatpush2.msra.mxu0 0.0
  %1248 = vmatprep.subr.mxu0 0.0
  %1249 = vmatpush2.msra.mxu0 0.0
  %1250 = vmatprep.subr.mxu0 0.0
  %1251 = vmatpush2.msra.mxu0 0.0
  %1252 = vmatprep.subr.mxu0 0.0
  %1253 = vmatpush2.msra.mxu0 0.0
  %1254 = vmatprep.subr.mxu0 0.0
  %1255 = vmatpush2.msra.mxu0 0.0
  %1256 = vmatprep.subr.mxu0 0.0
  %1257 = vmatpush2.msra.mxu0 0.0
  %1258 = vmatprep.subr.mxu0 0.0
  %1259 = vmatpush2.msra.mxu0 0.0
  %1260 = vmatprep.subr.mxu0 0.0
  %1261 = vmatpush2.msra.mxu0 0.0
  %1262 = vmatprep.subr.mxu0 0.0
  %1263 = vmatpush2.msra.mxu0 0.0
  %1264 = vmatprep.subr.mxu0 0.0
  %1265 = vmatpush2.msra.mxu0 0.0
  %1266 = vmatprep.subr.mxu0 0.0
  %1267 = vmatpush2.msra.mxu0 0.0
  %1268 = vmatprep.subr.mxu0 0.0
  %1269 = vmatpush2.msra.mxu0 0.0
  %1270 = vmatprep.subr.mxu0 0.0
  %1271 = vmatpush2.msra.mxu0 0.0
  %1272 = vmatprep.subr.mxu0 0.0
  %1273 = vmatpush2.msra.mxu0 0.0
  %1274 = vmatprep.subr.mxu0 0.0
  %1275 = vmatpush2.msra.mxu0 0.0
  %1276 = vmatprep.mubr.f32.mxu0 0.0
  %1277 = vmatmul.mubr.f32.gmra.mxu0 0.0
  %v1278 = vpop.f32.mrf.mxu0
  %v1279 = vadd.f32 %v1086, %v1278
  %v1280 = vpop.f32.mrf.mxu0
  %1281 = vdwg.mxu0
  %v1282 = vadd.f32 %v1090, %v1208
  %v1283 = vxor.u32 %v1282, 2147483648
  %v1284 = vmul.f32 %v1283, 1.442695
  %v1285 = vpow.pop %v1284
  %v1286 = vadd.f32 %v1285, 1.0
  %v1287 = vrcp.pop %v1286
  %v1288 = vmul.f32 1.0, %v1287
  %v1289 = vadd.f32 %v1091, %v1210
  %v1290 = vxor.u32 %v1289, 2147483648
  %v1291 = vmul.f32 %v1290, 1.442695
  %v1292 = vpow.pop %v1291
  %v1293 = vadd.f32 %v1292, 1.0
  %v1294 = vrcp.pop %v1293
  %v1295 = vmul.f32 1.0, %v1294
  %v1296 = vmul.f32 %v1288, %v1279
  %v1297 = vadd.f32 %v1092, %v1296
  %v1298 = vtanh.pop %v1297
  %v1299 = vsub.f32 1.0, %v1295
  %v1300 = vmul.f32 %v1299, %v1298
  %v1301 = vmul.f32 %v1295, 0.0
  %v1302 = vadd.f32 %v1300, %v1301
  %v1303 = vld [vmem:[#allocation2 + $0x18] sm:$0xff]
  %v1304 = vld [vmem:[#allocation2 + $0x20] sm:$0xff]
  %v1305 = vld [vmem:[#allocation2 + $0x28] sm:$0xff]
  %1306 = vmatprep.subr.mxu0 %v1139
  %1307 = vmatpush1.msra.mxu0 %v1138
  %1308 = vmatprep.subr.mxu0 %v1136
  %1309 = vmatpush1.msra.mxu0 %v1135
  %1310 = vmatprep.subr.mxu0 %v1133
  %1311 = vmatpush1.msra.mxu0 %v1132
  %1312 = vmatprep.subr.mxu0 %v1130
  %1313 = vmatpush1.msra.mxu0 %v1129
  %1314 = vmatprep.subr.mxu0 %v1127
  %1315 = vmatpush1.msra.mxu0 %v1126
  %1316 = vmatprep.subr.mxu0 %v1124
  %1317 = vmatpush1.msra.mxu0 %v1123
  %1318 = vmatprep.subr.mxu0 %v1121
  %1319 = vmatpush1.msra.mxu0 %v1120
  %1320 = vmatprep.subr.mxu0 %v1118
  %1321 = vmatpush1.msra.mxu0 %v1117
  %1322 = vmatprep.subr.mxu0 %v1115
  %1323 = vmatpush1.msra.mxu0 %v1114
  %1324 = vmatprep.subr.mxu0 %v1112
  %1325 = vmatpush1.msra.mxu0 %v1111
  %1326 = vmatprep.subr.mxu0 %v1109
  %1327 = vmatpush1.msra.mxu0 %v1108
  %1328 = vmatprep.subr.mxu0 %v1106
  %1329 = vmatpush1.msra.mxu0 %v1105
  %1330 = vmatprep.subr.mxu0 %v1103
  %1331 = vmatpush1.msra.mxu0 %v1102
  %1332 = vmatprep.subr.mxu0 %v1100
  %1333 = vmatpush1.msra.mxu0 %v1099
  %1334 = vmatprep.subr.mxu0 %v1097
  %1335 = vmatpush1.msra.mxu0 %v1096
  %1336 = vmatprep.subr.mxu0 %v1094
  %1337 = vmatpush1.msra.mxu0 %v1093
  %1338 = vmatprep.subr.mxu0 0.0
  %1339 = vmatpush2.msra.mxu0 0.0
  %1340 = vmatprep.subr.mxu0 0.0
  %1341 = vmatpush2.msra.mxu0 0.0
  %1342 = vmatprep.subr.mxu0 0.0
  %1343 = vmatpush2.msra.mxu0 0.0
  %1344 = vmatprep.subr.mxu0 0.0
  %1345 = vmatpush2.msra.mxu0 0.0
  %1346 = vmatprep.subr.mxu0 0.0
  %1347 = vmatpush2.msra.mxu0 0.0
  %1348 = vmatprep.subr.mxu0 0.0
  %1349 = vmatpush2.msra.mxu0 0.0
  %1350 = vmatprep.subr.mxu0 0.0
  %1351 = vmatpush2.msra.mxu0 0.0
  %1352 = vmatprep.subr.mxu0 0.0
  %1353 = vmatpush2.msra.mxu0 0.0
  %1354 = vmatprep.subr.mxu0 0.0
  %1355 = vmatpush2.msra.mxu0 0.0
  %1356 = vmatprep.subr.mxu0 0.0
  %1357 = vmatpush2.msra.mxu0 0.0
  %1358 = vmatprep.subr.mxu0 0.0
  %1359 = vmatpush2.msra.mxu0 0.0
  %1360 = vmatprep.subr.mxu0 0.0
  %1361 = vmatpush2.msra.mxu0 0.0
  %1362 = vmatprep.subr.mxu0 0.0
  %1363 = vmatpush2.msra.mxu0 0.0
  %1364 = vmatprep.subr.mxu0 0.0
  %1365 = vmatpush2.msra.mxu0 0.0
  %1366 = vmatprep.subr.mxu0 0.0
  %1367 = vmatpush2.msra.mxu0 0.0
  %1368 = vmatprep.subr.mxu0 0.0
  %1369 = vmatpush2.msra.mxu0 0.0
  %1370 = vmatprep.mubr.f32.mxu0 0.0
  %1371 = vmatmul.mubr.f32.gmra.mxu0 %v1302
  %v1372 = vpop.f32.mrf.mxu0
  %v1373 = vadd.f32 %v1078, %v1372
  %v1374 = vpop.f32.mrf.mxu0
  %v1375 = vadd.f32 %v1082, %v1374
  %1376 = vdwg.mxu0
  %1377 = vmatprep.subr.mxu0 0.0
  %1378 = vmatpush1.msra.mxu0 %v1140
  %1379 = vmatprep.subr.mxu0 0.0
  %1380 = vmatpush1.msra.mxu0 %v1137
  %1381 = vmatprep.subr.mxu0 0.0
  %1382 = vmatpush1.msra.mxu0 %v1134
  %1383 = vmatprep.subr.mxu0 0.0
  %1384 = vmatpush1.msra.mxu0 %v1131
  %1385 = vmatprep.subr.mxu0 0.0
  %1386 = vmatpush1.msra.mxu0 %v1128
  %1387 = vmatprep.subr.mxu0 0.0
  %1388 = vmatpush1.msra.mxu0 %v1125
  %1389 = vmatprep.subr.mxu0 0.0
  %1390 = vmatpush1.msra.mxu0 %v1122
  %1391 = vmatprep.subr.mxu0 0.0
  %1392 = vmatpush1.msra.mxu0 %v1119
  %1393 = vmatprep.subr.mxu0 0.0
  %1394 = vmatpush1.msra.mxu0 %v1116
  %1395 = vmatprep.subr.mxu0 0.0
  %1396 = vmatpush1.msra.mxu0 %v1113
  %1397 = vmatprep.subr.mxu0 0.0
  %1398 = vmatpush1.msra.mxu0 %v1110
  %1399 = vmatprep.subr.mxu0 0.0
  %1400 = vmatpush1.msra.mxu0 %v1107
  %1401 = vmatprep.subr.mxu0 0.0
  %1402 = vmatpush1.msra.mxu0 %v1104
  %1403 = vmatprep.subr.mxu0 0.0
  %1404 = vmatpush1.msra.mxu0 %v1101
  %1405 = vmatprep.subr.mxu0 0.0
  %1406 = vmatpush1.msra.mxu0 %v1098
  %1407 = vmatprep.subr.mxu0 0.0
  %1408 = vmatpush1.msra.mxu0 %v1095
  %1409 = vmatprep.subr.mxu0 0.0
  %1410 = vmatpush2.msra.mxu0 0.0
  %1411 = vmatprep.subr.mxu0 0.0
  %1412 = vmatpush2.msra.mxu0 0.0
  %1413 = vmatprep.subr.mxu0 0.0
  %1414 = vmatpush2.msra.mxu0 0.0
  %1415 = vmatprep.subr.mxu0 0.0
  %1416 = vmatpush2.msra.mxu0 0.0
  %1417 = vmatprep.subr.mxu0 0.0
  %1418 = vmatpush2.msra.mxu0 0.0
  %1419 = vmatprep.subr.mxu0 0.0
  %1420 = vmatpush2.msra.mxu0 0.0
  %1421 = vmatprep.subr.mxu0 0.0
  %1422 = vmatpush2.msra.mxu0 0.0
  %1423 = vmatprep.subr.mxu0 0.0
  %1424 = vmatpush2.msra.mxu0 0.0
  %1425 = vmatprep.subr.mxu0 0.0
  %1426 = vmatpush2.msra.mxu0 0.0
  %1427 = vmatprep.subr.mxu0 0.0
  %1428 = vmatpush2.msra.mxu0 0.0
  %1429 = vmatprep.subr.mxu0 0.0
  %1430 = vmatpush2.msra.mxu0 0.0
  %1431 = vmatprep.subr.mxu0 0.0
  %1432 = vmatpush2.msra.mxu0 0.0
  %1433 = vmatprep.subr.mxu0 0.0
  %1434 = vmatpush2.msra.mxu0 0.0
  %1435 = vmatprep.subr.mxu0 0.0
  %1436 = vmatpush2.msra.mxu0 0.0
  %1437 = vmatprep.subr.mxu0 0.0
  %1438 = vmatpush2.msra.mxu0 0.0
  %1439 = vmatprep.subr.mxu0 0.0
  %1440 = vmatpush2.msra.mxu0 0.0
  %1441 = vmatprep.mubr.f32.mxu0 0.0
  %1442 = vmatmul.mubr.f32.gmra.mxu0 %v1302
  %v1443 = vpop.f32.mrf.mxu0
  %v1444 = vadd.f32 %v1086, %v1443
  %v1445 = vpop.f32.mrf.mxu0
  %1446 = vdwg.mxu0
  %v1447 = vadd.f32 %v1303, %v1373
  %v1448 = vxor.u32 %v1447, 2147483648
  %v1449 = vmul.f32 %v1448, 1.442695
  %v1450 = vpow.pop %v1449
  %v1451 = vadd.f32 %v1450, 1.0
  %v1452 = vrcp.pop %v1451
  %v1453 = vmul.f32 1.0, %v1452
  %v1454 = vadd.f32 %v1304, %v1375
  %v1455 = vxor.u32 %v1454, 2147483648
  %v1456 = vmul.f32 %v1455, 1.442695
  %v1457 = vpow.pop %v1456
  %v1458 = vadd.f32 %v1457, 1.0
  %v1459 = vrcp.pop %v1458
  %v1460 = vmul.f32 1.0, %v1459
  %v1461 = vmul.f32 %v1453, %v1444
  %v1462 = vadd.f32 %v1305, %v1461
  %v1463 = vtanh.pop %v1462
  %v1464 = vsub.f32 1.0, %v1460
  %v1465 = vmul.f32 %v1464, %v1463
  %v1466 = vmul.f32 %v1460, %v1302
  %v1467 = vadd.f32 %v1465, %v1466
  %v1468 = vld [vmem:[#allocation2 + $0x30] sm:$0xff]
  %v1469 = vld [vmem:[#allocation2 + $0x38] sm:$0xff]
  %v1470 = vld [vmem:[#allocation2 + $0x40] sm:$0xff]
  %1471 = vmatprep.subr.mxu0 %v1139
  %1472 = vmatpush1.msra.mxu0 %v1138
  %1473 = vmatprep.subr.mxu0 %v1136
  %1474 = vmatpush1.msra.mxu0 %v1135
  %1475 = vmatprep.subr.mxu0 %v1133
  %1476 = vmatpush1.msra.mxu0 %v1132
  %1477 = vmatprep.subr.mxu0 %v1130
  %1478 = vmatpush1.msra.mxu0 %v1129
  %1479 = vmatprep.subr.mxu0 %v1127
  %1480 = vmatpush1.msra.mxu0 %v1126
  %1481 = vmatprep.subr.mxu0 %v1124
  %1482 = vmatpush1.msra.mxu0 %v1123
  %1483 = vmatprep.subr.mxu0 %v1121
  %1484 = vmatpush1.msra.mxu0 %v1120
  %1485 = vmatprep.subr.mxu0 %v1118
  %1486 = vmatpush1.msra.mxu0 %v1117
  %1487 = vmatprep.subr.mxu0 %v1115
  %1488 = vmatpush1.msra.mxu0 %v1114
  %1489 = vmatprep.subr.mxu0 %v1112
  %1490 = vmatpush1.msra.mxu0 %v1111
  %1491 = vmatprep.subr.mxu0 %v1109
  %1492 = vmatpush1.msra.mxu0 %v1108
  %1493 = vmatprep.subr.mxu0 %v1106
  %1494 = vmatpush1.msra.mxu0 %v1105
  %1495 = vmatprep.subr.mxu0 %v1103
  %1496 = vmatpush1.msra.mxu0 %v1102
  %1497 = vmatprep.subr.mxu0 %v1100
  %1498 = vmatpush1.msra.mxu0 %v1099
  %1499 = vmatprep.subr.mxu0 %v1097
  %1500 = vmatpush1.msra.mxu0 %v1096
  %1501 = vmatprep.subr.mxu0 %v1094
  %1502 = vmatpush1.msra.mxu0 %v1093
  %1503 = vmatprep.subr.mxu0 0.0
  %1504 = vmatpush2.msra.mxu0 0.0
  %1505 = vmatprep.subr.mxu0 0.0
  %1506 = vmatpush2.msra.mxu0 0.0
  %1507 = vmatprep.subr.mxu0 0.0
  %1508 = vmatpush2.msra.mxu0 0.0
  %1509 = vmatprep.subr.mxu0 0.0
  %1510 = vmatpush2.msra.mxu0 0.0
  %1511 = vmatprep.subr.mxu0 0.0
  %1512 = vmatpush2.msra.mxu0 0.0
  %1513 = vmatprep.subr.mxu0 0.0
  %1514 = vmatpush2.msra.mxu0 0.0
  %1515 = vmatprep.subr.mxu0 0.0
  %1516 = vmatpush2.msra.mxu0 0.0
  %1517 = vmatprep.subr.mxu0 0.0
  %1518 = vmatpush2.msra.mxu0 0.0
  %1519 = vmatprep.subr.mxu0 0.0
  %1520 = vmatpush2.msra.mxu0 0.0
  %1521 = vmatprep.subr.mxu0 0.0
  %1522 = vmatpush2.msra.mxu0 0.0
  %1523 = vmatprep.subr.mxu0 0.0
  %1524 = vmatpush2.msra.mxu0 0.0
  %1525 = vmatprep.subr.mxu0 0.0
  %1526 = vmatpush2.msra.mxu0 0.0
  %1527 = vmatprep.subr.mxu0 0.0
  %1528 = vmatpush2.msra.mxu0 0.0
  %1529 = vmatprep.subr.mxu0 0.0
  %1530 = vmatpush2.msra.mxu0 0.0
  %1531 = vmatprep.subr.mxu0 0.0
  %1532 = vmatpush2.msra.mxu0 0.0
  %1533 = vmatprep.subr.mxu0 0.0
  %1534 = vmatpush2.msra.mxu0 0.0
  %1535 = vmatprep.mubr.f32.mxu0 0.0
  %1536 = vmatmul.mubr.f32.gmra.mxu0 %v1467
  %v1537 = vpop.f32.mrf.mxu0
  %v1538 = vadd.f32 %v1078, %v1537
  %v1539 = vpop.f32.mrf.mxu0
  %v1540 = vadd.f32 %v1082, %v1539
  %1541 = vdwg.mxu0
  %1542 = vmatprep.subr.mxu0 0.0
  %1543 = vmatpush1.msra.mxu0 %v1140
  %1544 = vmatprep.subr.mxu0 0.0
  %1545 = vmatpush1.msra.mxu0 %v1137
  %1546 = vmatprep.subr.mxu0 0.0
  %1547 = vmatpush1.msra.mxu0 %v1134
  %1548 = vmatprep.subr.mxu0 0.0
  %1549 = vmatpush1.msra.mxu0 %v1131
  %1550 = vmatprep.subr.mxu0 0.0
  %1551 = vmatpush1.msra.mxu0 %v1128
  %1552 = vmatprep.subr.mxu0 0.0
  %1553 = vmatpush1.msra.mxu0 %v1125
  %1554 = vmatprep.subr.mxu0 0.0
  %1555 = vmatpush1.msra.mxu0 %v1122
  %1556 = vmatprep.subr.mxu0 0.0
  %1557 = vmatpush1.msra.mxu0 %v1119
  %1558 = vmatprep.subr.mxu0 0.0
  %1559 = vmatpush1.msra.mxu0 %v1116
  %1560 = vmatprep.subr.mxu0 0.0
  %1561 = vmatpush1.msra.mxu0 %v1113
  %1562 = vmatprep.subr.mxu0 0.0
  %1563 = vmatpush1.msra.mxu0 %v1110
  %1564 = vmatprep.subr.mxu0 0.0
  %1565 = vmatpush1.msra.mxu0 %v1107
  %1566 = vmatprep.subr.mxu0 0.0
  %1567 = vmatpush1.msra.mxu0 %v1104
  %1568 = vmatprep.subr.mxu0 0.0
  %1569 = vmatpush1.msra.mxu0 %v1101
  %1570 = vmatprep.subr.mxu0 0.0
  %1571 = vmatpush1.msra.mxu0 %v1098
  %1572 = vmatprep.subr.mxu0 0.0
  %1573 = vmatpush1.msra.mxu0 %v1095
  %1574 = vmatprep.subr.mxu0 0.0
  %1575 = vmatpush2.msra.mxu0 0.0
  %1576 = vmatprep.subr.mxu0 0.0
  %1577 = vmatpush2.msra.mxu0 0.0
  %1578 = vmatprep.subr.mxu0 0.0
  %1579 = vmatpush2.msra.mxu0 0.0
  %1580 = vmatprep.subr.mxu0 0.0
  %1581 = vmatpush2.msra.mxu0 0.0
  %1582 = vmatprep.subr.mxu0 0.0
  %1583 = vmatpush2.msra.mxu0 0.0
  %1584 = vmatprep.subr.mxu0 0.0
  %1585 = vmatpush2.msra.mxu0 0.0
  %1586 = vmatprep.subr.mxu0 0.0
  %1587 = vmatpush2.msra.mxu0 0.0
  %1588 = vmatprep.subr.mxu0 0.0
  %1589 = vmatpush2.msra.mxu0 0.0
  %1590 = vmatprep.subr.mxu0 0.0
  %1591 = vmatpush2.msra.mxu0 0.0
  %1592 = vmatprep.subr.mxu0 0.0
  %1593 = vmatpush2.msra.mxu0 0.0
  %1594 = vmatprep.subr.mxu0 0.0
  %1595 = vmatpush2.msra.mxu0 0.0
  %1596 = vmatprep.subr.mxu0 0.0
  %1597 = vmatpush2.msra.mxu0 0.0
  %1598 = vmatprep.subr.mxu0 0.0
  %1599 = vmatpush2.msra.mxu0 0.0
  %1600 = vmatprep.subr.mxu0 0.0
  %1601 = vmatpush2.msra.mxu0 0.0
  %1602 = vmatprep.subr.mxu0 0.0
  %1603 = vmatpush2.msra.mxu0 0.0
  %1604 = vmatprep.subr.mxu0 0.0
  %1605 = vmatpush2.msra.mxu0 0.0
  %1606 = vmatprep.mubr.f32.mxu0 0.0
  %1607 = vmatmul.mubr.f32.gmra.mxu0 %v1467
  %v1608 = vpop.f32.mrf.mxu0
  %v1609 = vadd.f32 %v1086, %v1608
  %v1610 = vpop.f32.mrf.mxu0
  %1611 = vdwg.mxu0
  %v1612 = vadd.f32 %v1468, %v1538
  %v1613 = vxor.u32 %v1612, 2147483648
  %v1614 = vmul.f32 %v1613, 1.442695
  %v1615 = vpow.pop %v1614
  %v1616 = vadd.f32 %v1615, 1.0
  %v1617 = vrcp.pop %v1616
  %v1618 = vmul.f32 1.0, %v1617
  %v1619 = vadd.f32 %v1469, %v1540
  %v1620 = vxor.u32 %v1619, 2147483648
  %v1621 = vmul.f32 %v1620, 1.442695
  %v1622 = vpow.pop %v1621
  %v1623 = vadd.f32 %v1622, 1.0
  %v1624 = vrcp.pop %v1623
  %v1625 = vmul.f32 1.0, %v1624
  %v1626 = vmul.f32 %v1618, %v1609
  %v1627 = vadd.f32 %v1470, %v1626
  %v1628 = vtanh.pop %v1627
  %v1629 = vsub.f32 1.0, %v1625
  %v1630 = vmul.f32 %v1629, %v1628
  %v1631 = vmul.f32 %v1625, %v1467
  %v1632 = vadd.f32 %v1630, %v1631
  %v1633 = vld [vmem:[#allocation2 + $0x48] sm:$0xff]
  %v1634 = vld [vmem:[#allocation2 + $0x50] sm:$0xff]
  %v1635 = vld [vmem:[#allocation2 + $0x58] sm:$0xff]
  %1636 = vmatprep.subr.mxu0 %v1139
  %1637 = vmatpush1.msra.mxu0 %v1138
  %1638 = vmatprep.subr.mxu0 %v1136
  %1639 = vmatpush1.msra.mxu0 %v1135
  %1640 = vmatprep.subr.mxu0 %v1133
  %1641 = vmatpush1.msra.mxu0 %v1132
  %1642 = vmatprep.subr.mxu0 %v1130
  %1643 = vmatpush1.msra.mxu0 %v1129
  %1644 = vmatprep.subr.mxu0 %v1127
  %1645 = vmatpush1.msra.mxu0 %v1126
  %1646 = vmatprep.subr.mxu0 %v1124
  %1647 = vmatpush1.msra.mxu0 %v1123
  %1648 = vmatprep.subr.mxu0 %v1121
  %1649 = vmatpush1.msra.mxu0 %v1120
  %1650 = vmatprep.subr.mxu0 %v1118
  %1651 = vmatpush1.msra.mxu0 %v1117
  %1652 = vmatprep.subr.mxu0 %v1115
  %1653 = vmatpush1.msra.mxu0 %v1114
  %1654 = vmatprep.subr.mxu0 %v1112
  %1655 = vmatpush1.msra.mxu0 %v1111
  %1656 = vmatprep.subr.mxu0 %v1109
  %1657 = vmatpush1.msra.mxu0 %v1108
  %1658 = vmatprep.subr.mxu0 %v1106
  %1659 = vmatpush1.msra.mxu0 %v1105
  %1660 = vmatprep.subr.mxu0 %v1103
  %1661 = vmatpush1.msra.mxu0 %v1102
  %1662 = vmatprep.subr.mxu0 %v1100
  %1663 = vmatpush1.msra.mxu0 %v1099
  %1664 = vmatprep.subr.mxu0 %v1097
  %1665 = vmatpush1.msra.mxu0 %v1096
  %1666 = vmatprep.subr.mxu0 %v1094
  %1667 = vmatpush1.msra.mxu0 %v1093
  %1668 = vmatprep.subr.mxu0 0.0
  %1669 = vmatpush2.msra.mxu0 0.0
  %1670 = vmatprep.subr.mxu0 0.0
  %1671 = vmatpush2.msra.mxu0 0.0
  %1672 = vmatprep.subr.mxu0 0.0
  %1673 = vmatpush2.msra.mxu0 0.0
  %1674 = vmatprep.subr.mxu0 0.0
  %1675 = vmatpush2.msra.mxu0 0.0
  %1676 = vmatprep.subr.mxu0 0.0
  %1677 = vmatpush2.msra.mxu0 0.0
  %1678 = vmatprep.subr.mxu0 0.0
  %1679 = vmatpush2.msra.mxu0 0.0
  %1680 = vmatprep.subr.mxu0 0.0
  %1681 = vmatpush2.msra.mxu0 0.0
  %1682 = vmatprep.subr.mxu0 0.0
  %1683 = vmatpush2.msra.mxu0 0.0
  %1684 = vmatprep.subr.mxu0 0.0
  %1685 = vmatpush2.msra.mxu0 0.0
  %1686 = vmatprep.subr.mxu0 0.0
  %1687 = vmatpush2.msra.mxu0 0.0
  %1688 = vmatprep.subr.mxu0 0.0
  %1689 = vmatpush2.msra.mxu0 0.0
  %1690 = vmatprep.subr.mxu0 0.0
  %1691 = vmatpush2.msra.mxu0 0.0
  %1692 = vmatprep.subr.mxu0 0.0
  %1693 = vmatpush2.msra.mxu0 0.0
  %1694 = vmatprep.subr.mxu0 0.0
  %1695 = vmatpush2.msra.mxu0 0.0
  %1696 = vmatprep.subr.mxu0 0.0
  %1697 = vmatpush2.msra.mxu0 0.0
  %1698 = vmatprep.subr.mxu0 0.0
  %1699 = vmatpush2.msra.mxu0 0.0
  %1700 = vmatprep.mubr.f32.mxu0 0.0
  %1701 = vmatmul.mubr.f32.gmra.mxu0 %v1632
  %v1702 = vpop.f32.mrf.mxu0
  %v1703 = vadd.f32 %v1078, %v1702
  %v1704 = vpop.f32.mrf.mxu0
  %v1705 = vadd.f32 %v1082, %v1704
  %1706 = vdwg.mxu0
  %1707 = vmatprep.subr.mxu0 0.0
  %1708 = vmatpush1.msra.mxu0 %v1140
  %1709 = vmatprep.subr.mxu0 0.0
  %1710 = vmatpush1.msra.mxu0 %v1137
  %1711 = vmatprep.subr.mxu0 0.0
  %1712 = vmatpush1.msra.mxu0 %v1134
  %1713 = vmatprep.subr.mxu0 0.0
  %1714 = vmatpush1.msra.mxu0 %v1131
  %1715 = vmatprep.subr.mxu0 0.0
  %1716 = vmatpush1.msra.mxu0 %v1128
  %1717 = vmatprep.subr.mxu0 0.0
  %1718 = vmatpush1.msra.mxu0 %v1125
  %1719 = vmatprep.subr.mxu0 0.0
  %1720 = vmatpush1.msra.mxu0 %v1122
  %1721 = vmatprep.subr.mxu0 0.0
  %1722 = vmatpush1.msra.mxu0 %v1119
  %1723 = vmatprep.subr.mxu0 0.0
  %1724 = vmatpush1.msra.mxu0 %v1116
  %1725 = vmatprep.subr.mxu0 0.0
  %1726 = vmatpush1.msra.mxu0 %v1113
  %1727 = vmatprep.subr.mxu0 0.0
  %1728 = vmatpush1.msra.mxu0 %v1110
  %1729 = vmatprep.subr.mxu0 0.0
  %1730 = vmatpush1.msra.mxu0 %v1107
  %1731 = vmatprep.subr.mxu0 0.0
  %1732 = vmatpush1.msra.mxu0 %v1104
  %1733 = vmatprep.subr.mxu0 0.0
  %1734 = vmatpush1.msra.mxu0 %v1101
  %1735 = vmatprep.subr.mxu0 0.0
  %1736 = vmatpush1.msra.mxu0 %v1098
  %1737 = vmatprep.subr.mxu0 0.0
  %1738 = vmatpush1.msra.mxu0 %v1095
  %1739 = vmatprep.subr.mxu0 0.0
  %1740 = vmatpush2.msra.mxu0 0.0
  %1741 = vmatprep.subr.mxu0 0.0
  %1742 = vmatpush2.msra.mxu0 0.0
  %1743 = vmatprep.subr.mxu0 0.0
  %1744 = vmatpush2.msra.mxu0 0.0
  %1745 = vmatprep.subr.mxu0 0.0
  %1746 = vmatpush2.msra.mxu0 0.0
  %1747 = vmatprep.subr.mxu0 0.0
  %1748 = vmatpush2.msra.mxu0 0.0
  %1749 = vmatprep.subr.mxu0 0.0
  %1750 = vmatpush2.msra.mxu0 0.0
  %1751 = vmatprep.subr.mxu0 0.0
  %1752 = vmatpush2.msra.mxu0 0.0
  %1753 = vmatprep.subr.mxu0 0.0
  %1754 = vmatpush2.msra.mxu0 0.0
  %1755 = vmatprep.subr.mxu0 0.0
  %1756 = vmatpush2.msra.mxu0 0.0
  %1757 = vmatprep.subr.mxu0 0.0
  %1758 = vmatpush2.msra.mxu0 0.0
  %1759 = vmatprep.subr.mxu0 0.0
  %1760 = vmatpush2.msra.mxu0 0.0
  %1761 = vmatprep.subr.mxu0 0.0
  %1762 = vmatpush2.msra.mxu0 0.0
  %1763 = vmatprep.subr.mxu0 0.0
  %1764 = vmatpush2.msra.mxu0 0.0
  %1765 = vmatprep.subr.mxu0 0.0
  %1766 = vmatpush2.msra.mxu0 0.0
  %1767 = vmatprep.subr.mxu0 0.0
  %1768 = vmatpush2.msra.mxu0 0.0
  %1769 = vmatprep.subr.mxu0 0.0
  %1770 = vmatpush2.msra.mxu0 0.0
  %1771 = vmatprep.mubr.f32.mxu0 0.0
  %1772 = vmatmul.mubr.f32.gmra.mxu0 %v1632
  %v1773 = vpop.f32.mrf.mxu0
  %v1774 = vadd.f32 %v1086, %v1773
  %v1775 = vpop.f32.mrf.mxu0
  %1776 = vdwg.mxu0
  %v1777 = vadd.f32 %v1633, %v1703
  %v1778 = vxor.u32 %v1777, 2147483648
  %v1779 = vmul.f32 %v1778, 1.442695
  %v1780 = vpow.pop %v1779
  %v1781 = vadd.f32 %v1780, 1.0
  %v1782 = vrcp.pop %v1781
  %v1783 = vmul.f32 1.0, %v1782
  %v1784 = vadd.f32 %v1634, %v1705
  %v1785 = vxor.u32 %v1784, 2147483648
  %v1786 = vmul.f32 %v1785, 1.442695
  %v1787 = vpow.pop %v1786
  %v1788 = vadd.f32 %v1787, 1.0
  %v1789 = vrcp.pop %v1788
  %v1790 = vmul.f32 1.0, %v1789
  %v1791 = vmul.f32 %v1783, %v1774
  %v1792 = vadd.f32 %v1635, %v1791
  %v1793 = vtanh.pop %v1792
  %v1794 = vsub.f32 1.0, %v1790
  %v1795 = vmul.f32 %v1794, %v1793
  %v1796 = vmul.f32 %v1790, %v1632
  %v1797 = vadd.f32 %v1795, %v1796
  %v1798 = vld [vmem:[#allocation2 + $0x60] sm:$0xff]
  %v1799 = vld [vmem:[#allocation2 + $0x68] sm:$0xff]
  %v1800 = vld [vmem:[#allocation2 + $0x70] sm:$0xff]
  %1801 = vmatprep.subr.mxu0 %v1139
  %1802 = vmatpush1.msra.mxu0 %v1138
  %1803 = vmatprep.subr.mxu0 %v1136
  %1804 = vmatpush1.msra.mxu0 %v1135
  %1805 = vmatprep.subr.mxu0 %v1133
  %1806 = vmatpush1.msra.mxu0 %v1132
  %1807 = vmatprep.subr.mxu0 %v1130
  %1808 = vmatpush1.msra.mxu0 %v1129
  %1809 = vmatprep.subr.mxu0 %v1127
  %1810 = vmatpush1.msra.mxu0 %v1126
  %1811 = vmatprep.subr.mxu0 %v1124
  %1812 = vmatpush1.msra.mxu0 %v1123
  %1813 = vmatprep.subr.mxu0 %v1121
  %1814 = vmatpush1.msra.mxu0 %v1120
  %1815 = vmatprep.subr.mxu0 %v1118
  %1816 = vmatpush1.msra.mxu0 %v1117
  %1817 = vmatprep.subr.mxu0 %v1115
  %1818 = vmatpush1.msra.mxu0 %v1114
  %1819 = vmatprep.subr.mxu0 %v1112
  %1820 = vmatpush1.msra.mxu0 %v1111
  %1821 = vmatprep.subr.mxu0 %v1109
  %1822 = vmatpush1.msra.mxu0 %v1108
  %1823 = vmatprep.subr.mxu0 %v1106
  %1824 = vmatpush1.msra.mxu0 %v1105
  %1825 = vmatprep.subr.mxu0 %v1103
  %1826 = vmatpush1.msra.mxu0 %v1102
  %1827 = vmatprep.subr.mxu0 %v1100
  %1828 = vmatpush1.msra.mxu0 %v1099
  %1829 = vmatprep.subr.mxu0 %v1097
  %1830 = vmatpush1.msra.mxu0 %v1096
  %1831 = vmatprep.subr.mxu0 %v1094
  %1832 = vmatpush1.msra.mxu0 %v1093
  %1833 = vmatprep.subr.mxu0 0.0
  %1834 = vmatpush2.msra.mxu0 0.0
  %1835 = vmatprep.subr.mxu0 0.0
  %1836 = vmatpush2.msra.mxu0 0.0
  %1837 = vmatprep.subr.mxu0 0.0
  %1838 = vmatpush2.msra.mxu0 0.0
  %1839 = vmatprep.subr.mxu0 0.0
  %1840 = vmatpush2.msra.mxu0 0.0
  %1841 = vmatprep.subr.mxu0 0.0
  %1842 = vmatpush2.msra.mxu0 0.0
  %1843 = vmatprep.subr.mxu0 0.0
  %1844 = vmatpush2.msra.mxu0 0.0
  %1845 = vmatprep.subr.mxu0 0.0
  %1846 = vmatpush2.msra.mxu0 0.0
  %1847 = vmatprep.subr.mxu0 0.0
  %1848 = vmatpush2.msra.mxu0 0.0
  %1849 = vmatprep.subr.mxu0 0.0
  %1850 = vmatpush2.msra.mxu0 0.0
  %1851 = vmatprep.subr.mxu0 0.0
  %1852 = vmatpush2.msra.mxu0 0.0
  %1853 = vmatprep.subr.mxu0 0.0
  %1854 = vmatpush2.msra.mxu0 0.0
  %1855 = vmatprep.subr.mxu0 0.0
  %1856 = vmatpush2.msra.mxu0 0.0
  %1857 = vmatprep.subr.mxu0 0.0
  %1858 = vmatpush2.msra.mxu0 0.0
  %1859 = vmatprep.subr.mxu0 0.0
  %1860 = vmatpush2.msra.mxu0 0.0
  %1861 = vmatprep.subr.mxu0 0.0
  %1862 = vmatpush2.msra.mxu0 0.0
  %1863 = vmatprep.subr.mxu0 0.0
  %1864 = vmatpush2.msra.mxu0 0.0
  %1865 = vmatprep.mubr.f32.mxu0 0.0
  %1866 = vmatmul.mubr.f32.gmra.mxu0 %v1797
  %v1867 = vpop.f32.mrf.mxu0
  %v1868 = vadd.f32 %v1078, %v1867
  %v1869 = vpop.f32.mrf.mxu0
  %v1870 = vadd.f32 %v1082, %v1869
  %1871 = vdwg.mxu0
  %1872 = vmatprep.subr.mxu0 0.0
  %1873 = vmatpush1.msra.mxu0 %v1140
  %1874 = vmatprep.subr.mxu0 0.0
  %1875 = vmatpush1.msra.mxu0 %v1137
  %1876 = vmatprep.subr.mxu0 0.0
  %1877 = vmatpush1.msra.mxu0 %v1134
  %1878 = vmatprep.subr.mxu0 0.0
  %1879 = vmatpush1.msra.mxu0 %v1131
  %1880 = vmatprep.subr.mxu0 0.0
  %1881 = vmatpush1.msra.mxu0 %v1128
  %1882 = vmatprep.subr.mxu0 0.0
  %1883 = vmatpush1.msra.mxu0 %v1125
  %1884 = vmatprep.subr.mxu0 0.0
  %1885 = vmatpush1.msra.mxu0 %v1122
  %1886 = vmatprep.subr.mxu0 0.0
  %1887 = vmatpush1.msra.mxu0 %v1119
  %1888 = vmatprep.subr.mxu0 0.0
  %1889 = vmatpush1.msra.mxu0 %v1116
  %1890 = vmatprep.subr.mxu0 0.0
  %1891 = vmatpush1.msra.mxu0 %v1113
  %1892 = vmatprep.subr.mxu0 0.0
  %1893 = vmatpush1.msra.mxu0 %v1110
  %1894 = vmatprep.subr.mxu0 0.0
  %1895 = vmatpush1.msra.mxu0 %v1107
  %1896 = vmatprep.subr.mxu0 0.0
  %1897 = vmatpush1.msra.mxu0 %v1104
  %1898 = vmatprep.subr.mxu0 0.0
  %1899 = vmatpush1.msra.mxu0 %v1101
  %1900 = vmatprep.subr.mxu0 0.0
  %1901 = vmatpush1.msra.mxu0 %v1098
  %1902 = vmatprep.subr.mxu0 0.0
  %1903 = vmatpush1.msra.mxu0 %v1095
  %1904 = vmatprep.subr.mxu0 0.0
  %1905 = vmatpush2.msra.mxu0 0.0
  %1906 = vmatprep.subr.mxu0 0.0
  %1907 = vmatpush2.msra.mxu0 0.0
  %1908 = vmatprep.subr.mxu0 0.0
  %1909 = vmatpush2.msra.mxu0 0.0
  %1910 = vmatprep.subr.mxu0 0.0
  %1911 = vmatpush2.msra.mxu0 0.0
  %1912 = vmatprep.subr.mxu0 0.0
  %1913 = vmatpush2.msra.mxu0 0.0
  %1914 = vmatprep.subr.mxu0 0.0
  %1915 = vmatpush2.msra.mxu0 0.0
  %1916 = vmatprep.subr.mxu0 0.0
  %1917 = vmatpush2.msra.mxu0 0.0
  %1918 = vmatprep.subr.mxu0 0.0
  %1919 = vmatpush2.msra.mxu0 0.0
  %1920 = vmatprep.subr.mxu0 0.0
  %1921 = vmatpush2.msra.mxu0 0.0
  %1922 = vmatprep.subr.mxu0 0.0
  %1923 = vmatpush2.msra.mxu0 0.0
  %1924 = vmatprep.subr.mxu0 0.0
  %1925 = vmatpush2.msra.mxu0 0.0
  %1926 = vmatprep.subr.mxu0 0.0
  %1927 = vmatpush2.msra.mxu0 0.0
  %1928 = vmatprep.subr.mxu0 0.0
  %1929 = vmatpush2.msra.mxu0 0.0
  %1930 = vmatprep.subr.mxu0 0.0
  %1931 = vmatpush2.msra.mxu0 0.0
  %1932 = vmatprep.subr.mxu0 0.0
  %1933 = vmatpush2.msra.mxu0 0.0
  %1934 = vmatprep.subr.mxu0 0.0
  %1935 = vmatpush2.msra.mxu0 0.0
  %1936 = vmatprep.mubr.f32.mxu0 0.0
  %1937 = vmatmul.mubr.f32.gmra.mxu0 %v1797
  %v1938 = vpop.f32.mrf.mxu0
  %v1939 = vadd.f32 %v1086, %v1938
  %v1940 = vpop.f32.mrf.mxu0
  %1941 = vdwg.mxu0
  %v1942 = vadd.f32 %v1798, %v1868
  %v1943 = vxor.u32 %v1942, 2147483648
  %v1944 = vmul.f32 %v1943, 1.442695
  %v1945 = vpow.pop %v1944
  %v1946 = vadd.f32 %v1945, 1.0
  %v1947 = vrcp.pop %v1946
  %v1948 = vmul.f32 1.0, %v1947
  %v1949 = vadd.f32 %v1799, %v1870
  %v1950 = vxor.u32 %v1949, 2147483648
  %v1951 = vmul.f32 %v1950, 1.442695
  %v1952 = vpow.pop %v1951
  %v1953 = vadd.f32 %v1952, 1.0
  %v1954 = vrcp.pop %v1953
  %v1955 = vmul.f32 1.0, %v1954
  %v1956 = vmul.f32 %v1948, %v1939
  %v1957 = vadd.f32 %v1800, %v1956
  %v1958 = vtanh.pop %v1957
  %v1959 = vsub.f32 1.0, %v1955
  %v1960 = vmul.f32 %v1959, %v1958
  %v1961 = vmul.f32 %v1955, %v1797
  %v1962 = vadd.f32 %v1960, %v1961
  %v1963 = vld [vmem:[#allocation2 + $0x78] sm:$0xff]
  %v1964 = vld [vmem:[#allocation2 + $0x80] sm:$0xff]
  %v1965 = vld [vmem:[#allocation2 + $0x88] sm:$0xff]
  %1966 = vmatprep.subr.mxu0 %v1139
  %1967 = vmatpush1.msra.mxu0 %v1138
  %1968 = vmatprep.subr.mxu0 %v1136
  %1969 = vmatpush1.msra.mxu0 %v1135
  %1970 = vmatprep.subr.mxu0 %v1133
  %1971 = vmatpush1.msra.mxu0 %v1132
  %1972 = vmatprep.subr.mxu0 %v1130
  %1973 = vmatpush1.msra.mxu0 %v1129
  %1974 = vmatprep.subr.mxu0 %v1127
  %1975 = vmatpush1.msra.mxu0 %v1126
  %1976 = vmatprep.subr.mxu0 %v1124
  %1977 = vmatpush1.msra.mxu0 %v1123
  %1978 = vmatprep.subr.mxu0 %v1121
  %1979 = vmatpush1.msra.mxu0 %v1120
  %1980 = vmatprep.subr.mxu0 %v1118
  %1981 = vmatpush1.msra.mxu0 %v1117
  %1982 = vmatprep.subr.mxu0 %v1115
  %1983 = vmatpush1.msra.mxu0 %v1114
  %1984 = vmatprep.subr.mxu0 %v1112
  %1985 = vmatpush1.msra.mxu0 %v1111
  %1986 = vmatprep.subr.mxu0 %v1109
  %1987 = vmatpush1.msra.mxu0 %v1108
  %1988 = vmatprep.subr.mxu0 %v1106
  %1989 = vmatpush1.msra.mxu0 %v1105
  %1990 = vmatprep.subr.mxu0 %v1103
  %1991 = vmatpush1.msra.mxu0 %v1102
  %1992 = vmatprep.subr.mxu0 %v1100
  %1993 = vmatpush1.msra.mxu0 %v1099
  %1994 = vmatprep.subr.mxu0 %v1097
  %1995 = vmatpush1.msra.mxu0 %v1096
  %1996 = vmatprep.subr.mxu0 %v1094
  %1997 = vmatpush1.msra.mxu0 %v1093
  %1998 = vmatprep.subr.mxu0 0.0
  %1999 = vmatpush2.msra.mxu0 0.0
  %2000 = vmatprep.subr.mxu0 0.0
  %2001 = vmatpush2.msra.mxu0 0.0
  %2002 = vmatprep.subr.mxu0 0.0
  %2003 = vmatpush2.msra.mxu0 0.0
  %2004 = vmatprep.subr.mxu0 0.0
  %2005 = vmatpush2.msra.mxu0 0.0
  %2006 = vmatprep.subr.mxu0 0.0
  %2007 = vmatpush2.msra.mxu0 0.0
  %2008 = vmatprep.subr.mxu0 0.0
  %2009 = vmatpush2.msra.mxu0 0.0
  %2010 = vmatprep.subr.mxu0 0.0
  %2011 = vmatpush2.msra.mxu0 0.0
  %2012 = vmatprep.subr.mxu0 0.0
  %2013 = vmatpush2.msra.mxu0 0.0
  %2014 = vmatprep.subr.mxu0 0.0
  %2015 = vmatpush2.msra.mxu0 0.0
  %2016 = vmatprep.subr.mxu0 0.0
  %2017 = vmatpush2.msra.mxu0 0.0
  %2018 = vmatprep.subr.mxu0 0.0
  %2019 = vmatpush2.msra.mxu0 0.0
  %2020 = vmatprep.subr.mxu0 0.0
  %2021 = vmatpush2.msra.mxu0 0.0
  %2022 = vmatprep.subr.mxu0 0.0
  %2023 = vmatpush2.msra.mxu0 0.0
  %2024 = vmatprep.subr.mxu0 0.0
  %2025 = vmatpush2.msra.mxu0 0.0
  %2026 = vmatprep.subr.mxu0 0.0
  %2027 = vmatpush2.msra.mxu0 0.0
  %2028 = vmatprep.subr.mxu0 0.0
  %2029 = vmatpush2.msra.mxu0 0.0
  %2030 = vmatprep.mubr.f32.mxu0 0.0
  %2031 = vmatmul.mubr.f32.gmra.mxu0 %v1962
  %v2032 = vpop.f32.mrf.mxu0
  %v2033 = vadd.f32 %v1078, %v2032
  %v2034 = vpop.f32.mrf.mxu0
  %v2035 = vadd.f32 %v1082, %v2034
  %2036 = vdwg.mxu0
  %2037 = vmatprep.subr.mxu0 0.0
  %2038 = vmatpush1.msra.mxu0 %v1140
  %2039 = vmatprep.subr.mxu0 0.0
  %2040 = vmatpush1.msra.mxu0 %v1137
  %2041 = vmatprep.subr.mxu0 0.0
  %2042 = vmatpush1.msra.mxu0 %v1134
  %2043 = vmatprep.subr.mxu0 0.0
  %2044 = vmatpush1.msra.mxu0 %v1131
  %2045 = vmatprep.subr.mxu0 0.0
  %2046 = vmatpush1.msra.mxu0 %v1128
  %2047 = vmatprep.subr.mxu0 0.0
  %2048 = vmatpush1.msra.mxu0 %v1125
  %2049 = vmatprep.subr.mxu0 0.0
  %2050 = vmatpush1.msra.mxu0 %v1122
  %2051 = vmatprep.subr.mxu0 0.0
  %2052 = vmatpush1.msra.mxu0 %v1119
  %2053 = vmatprep.subr.mxu0 0.0
  %2054 = vmatpush1.msra.mxu0 %v1116
  %2055 = vmatprep.subr.mxu0 0.0
  %2056 = vmatpush1.msra.mxu0 %v1113
  %2057 = vmatprep.subr.mxu0 0.0
  %2058 = vmatpush1.msra.mxu0 %v1110
  %2059 = vmatprep.subr.mxu0 0.0
  %2060 = vmatpush1.msra.mxu0 %v1107
  %2061 = vmatprep.subr.mxu0 0.0
  %2062 = vmatpush1.msra.mxu0 %v1104
  %2063 = vmatprep.subr.mxu0 0.0
  %2064 = vmatpush1.msra.mxu0 %v1101
  %2065 = vmatprep.subr.mxu0 0.0
  %2066 = vmatpush1.msra.mxu0 %v1098
  %2067 = vmatprep.subr.mxu0 0.0
  %2068 = vmatpush1.msra.mxu0 %v1095
  %2069 = vmatprep.subr.mxu0 0.0
  %2070 = vmatpush2.msra.mxu0 0.0
  %2071 = vmatprep.subr.mxu0 0.0
  %2072 = vmatpush2.msra.mxu0 0.0
  %2073 = vmatprep.subr.mxu0 0.0
  %2074 = vmatpush2.msra.mxu0 0.0
  %2075 = vmatprep.subr.mxu0 0.0
  %2076 = vmatpush2.msra.mxu0 0.0
  %2077 = vmatprep.subr.mxu0 0.0
  %2078 = vmatpush2.msra.mxu0 0.0
  %2079 = vmatprep.subr.mxu0 0.0
  %2080 = vmatpush2.msra.mxu0 0.0
  %2081 = vmatprep.subr.mxu0 0.0
  %2082 = vmatpush2.msra.mxu0 0.0
  %2083 = vmatprep.subr.mxu0 0.0
  %2084 = vmatpush2.msra.mxu0 0.0
  %2085 = vmatprep.subr.mxu0 0.0
  %2086 = vmatpush2.msra.mxu0 0.0
  %2087 = vmatprep.subr.mxu0 0.0
  %2088 = vmatpush2.msra.mxu0 0.0
  %2089 = vmatprep.subr.mxu0 0.0
  %2090 = vmatpush2.msra.mxu0 0.0
  %2091 = vmatprep.subr.mxu0 0.0
  %2092 = vmatpush2.msra.mxu0 0.0
  %2093 = vmatprep.subr.mxu0 0.0
  %2094 = vmatpush2.msra.mxu0 0.0
  %2095 = vmatprep.subr.mxu0 0.0
  %2096 = vmatpush2.msra.mxu0 0.0
  %2097 = vmatprep.subr.mxu0 0.0
  %2098 = vmatpush2.msra.mxu0 0.0
  %2099 = vmatprep.subr.mxu0 0.0
  %2100 = vmatpush2.msra.mxu0 0.0
  %2101 = vmatprep.mubr.f32.mxu0 0.0
  %2102 = vmatmul.mubr.f32.gmra.mxu0 %v1962
  %v2103 = vpop.f32.mrf.mxu0
  %v2104 = vadd.f32 %v1086, %v2103
  %v2105 = vpop.f32.mrf.mxu0
  %2106 = vdwg.mxu0
  %v2107 = vadd.f32 %v1963, %v2033
  %v2108 = vxor.u32 %v2107, 2147483648
  %v2109 = vmul.f32 %v2108, 1.442695
  %v2110 = vpow.pop %v2109
  %v2111 = vadd.f32 %v2110, 1.0
  %v2112 = vrcp.pop %v2111
  %v2113 = vmul.f32 1.0, %v2112
  %v2114 = vadd.f32 %v1964, %v2035
  %v2115 = vxor.u32 %v2114, 2147483648
  %v2116 = vmul.f32 %v2115, 1.442695
  %v2117 = vpow.pop %v2116
  %v2118 = vadd.f32 %v2117, 1.0
  %v2119 = vrcp.pop %v2118
  %v2120 = vmul.f32 1.0, %v2119
  %v2121 = vmul.f32 %v2113, %v2104
  %v2122 = vadd.f32 %v1965, %v2121
  %v2123 = vtanh.pop %v2122
  %v2124 = vsub.f32 1.0, %v2120
  %v2125 = vmul.f32 %v2124, %v2123
  %v2126 = vmul.f32 %v2120, %v1962
  %v2127 = vadd.f32 %v2125, %v2126
  %v2128 = vld [vmem:[#allocation2 + $0x90] sm:$0xff]
  %v2129 = vld [vmem:[#allocation2 + $0x98] sm:$0xff]
  %v2130 = vld [vmem:[#allocation2 + $0xa0] sm:$0xff]
  %2131 = vmatprep.subr.mxu0 %v1139
  %2132 = vmatpush1.msra.mxu0 %v1138
  %2133 = vmatprep.subr.mxu0 %v1136
  %2134 = vmatpush1.msra.mxu0 %v1135
  %2135 = vmatprep.subr.mxu0 %v1133
  %2136 = vmatpush1.msra.mxu0 %v1132
  %2137 = vmatprep.subr.mxu0 %v1130
  %2138 = vmatpush1.msra.mxu0 %v1129
  %2139 = vmatprep.subr.mxu0 %v1127
  %2140 = vmatpush1.msra.mxu0 %v1126
  %2141 = vmatprep.subr.mxu0 %v1124
  %2142 = vmatpush1.msra.mxu0 %v1123
  %2143 = vmatprep.subr.mxu0 %v1121
  %2144 = vmatpush1.msra.mxu0 %v1120
  %2145 = vmatprep.subr.mxu0 %v1118
  %2146 = vmatpush1.msra.mxu0 %v1117
  %2147 = vmatprep.subr.mxu0 %v1115
  %2148 = vmatpush1.msra.mxu0 %v1114
  %2149 = vmatprep.subr.mxu0 %v1112
  %2150 = vmatpush1.msra.mxu0 %v1111
  %2151 = vmatprep.subr.mxu0 %v1109
  %2152 = vmatpush1.msra.mxu0 %v1108
  %2153 = vmatprep.subr.mxu0 %v1106
  %2154 = vmatpush1.msra.mxu0 %v1105
  %2155 = vmatprep.subr.mxu0 %v1103
  %2156 = vmatpush1.msra.mxu0 %v1102
  %2157 = vmatprep.subr.mxu0 %v1100
  %2158 = vmatpush1.msra.mxu0 %v1099
  %2159 = vmatprep.subr.mxu0 %v1097
  %2160 = vmatpush1.msra.mxu0 %v1096
  %2161 = vmatprep.subr.mxu0 %v1094
  %2162 = vmatpush1.msra.mxu0 %v1093
  %2163 = vmatprep.subr.mxu0 0.0
  %2164 = vmatpush2.msra.mxu0 0.0
  %2165 = vmatprep.subr.mxu0 0.0
  %2166 = vmatpush2.msra.mxu0 0.0
  %2167 = vmatprep.subr.mxu0 0.0
  %2168 = vmatpush2.msra.mxu0 0.0
  %2169 = vmatprep.subr.mxu0 0.0
  %2170 = vmatpush2.msra.mxu0 0.0
  %2171 = vmatprep.subr.mxu0 0.0
  %2172 = vmatpush2.msra.mxu0 0.0
  %2173 = vmatprep.subr.mxu0 0.0
  %2174 = vmatpush2.msra.mxu0 0.0
  %2175 = vmatprep.subr.mxu0 0.0
  %2176 = vmatpush2.msra.mxu0 0.0
  %2177 = vmatprep.subr.mxu0 0.0
  %2178 = vmatpush2.msra.mxu0 0.0
  %2179 = vmatprep.subr.mxu0 0.0
  %2180 = vmatpush2.msra.mxu0 0.0
  %2181 = vmatprep.subr.mxu0 0.0
  %2182 = vmatpush2.msra.mxu0 0.0
  %2183 = vmatprep.subr.mxu0 0.0
  %2184 = vmatpush2.msra.mxu0 0.0
  %2185 = vmatprep.subr.mxu0 0.0
  %2186 = vmatpush2.msra.mxu0 0.0
  %2187 = vmatprep.subr.mxu0 0.0
  %2188 = vmatpush2.msra.mxu0 0.0
  %2189 = vmatprep.subr.mxu0 0.0
  %2190 = vmatpush2.msra.mxu0 0.0
  %2191 = vmatprep.subr.mxu0 0.0
  %2192 = vmatpush2.msra.mxu0 0.0
  %2193 = vmatprep.subr.mxu0 0.0
  %2194 = vmatpush2.msra.mxu0 0.0
  %2195 = vmatprep.mubr.f32.mxu0 0.0
  %2196 = vmatmul.mubr.f32.gmra.mxu0 %v2127
  %v2197 = vpop.f32.mrf.mxu0
  %v2198 = vadd.f32 %v1078, %v2197
  %v2199 = vpop.f32.mrf.mxu0
  %v2200 = vadd.f32 %v1082, %v2199
  %2201 = vdwg.mxu0
  %2202 = vmatprep.subr.mxu0 0.0
  %2203 = vmatpush1.msra.mxu0 %v1140
  %2204 = vmatprep.subr.mxu0 0.0
  %2205 = vmatpush1.msra.mxu0 %v1137
  %2206 = vmatprep.subr.mxu0 0.0
  %2207 = vmatpush1.msra.mxu0 %v1134
  %2208 = vmatprep.subr.mxu0 0.0
  %2209 = vmatpush1.msra.mxu0 %v1131
  %2210 = vmatprep.subr.mxu0 0.0
  %2211 = vmatpush1.msra.mxu0 %v1128
  %2212 = vmatprep.subr.mxu0 0.0
  %2213 = vmatpush1.msra.mxu0 %v1125
  %2214 = vmatprep.subr.mxu0 0.0
  %2215 = vmatpush1.msra.mxu0 %v1122
  %2216 = vmatprep.subr.mxu0 0.0
  %2217 = vmatpush1.msra.mxu0 %v1119
  %2218 = vmatprep.subr.mxu0 0.0
  %2219 = vmatpush1.msra.mxu0 %v1116
  %2220 = vmatprep.subr.mxu0 0.0
  %2221 = vmatpush1.msra.mxu0 %v1113
  %2222 = vmatprep.subr.mxu0 0.0
  %2223 = vmatpush1.msra.mxu0 %v1110
  %2224 = vmatprep.subr.mxu0 0.0
  %2225 = vmatpush1.msra.mxu0 %v1107
  %2226 = vmatprep.subr.mxu0 0.0
  %2227 = vmatpush1.msra.mxu0 %v1104
  %2228 = vmatprep.subr.mxu0 0.0
  %2229 = vmatpush1.msra.mxu0 %v1101
  %2230 = vmatprep.subr.mxu0 0.0
  %2231 = vmatpush1.msra.mxu0 %v1098
  %2232 = vmatprep.subr.mxu0 0.0
  %2233 = vmatpush1.msra.mxu0 %v1095
  %2234 = vmatprep.subr.mxu0 0.0
  %2235 = vmatpush2.msra.mxu0 0.0
  %2236 = vmatprep.subr.mxu0 0.0
  %2237 = vmatpush2.msra.mxu0 0.0
  %2238 = vmatprep.subr.mxu0 0.0
  %2239 = vmatpush2.msra.mxu0 0.0
  %2240 = vmatprep.subr.mxu0 0.0
  %2241 = vmatpush2.msra.mxu0 0.0
  %2242 = vmatprep.subr.mxu0 0.0
  %2243 = vmatpush2.msra.mxu0 0.0
  %2244 = vmatprep.subr.mxu0 0.0
  %2245 = vmatpush2.msra.mxu0 0.0
  %2246 = vmatprep.subr.mxu0 0.0
  %2247 = vmatpush2.msra.mxu0 0.0
  %2248 = vmatprep.subr.mxu0 0.0
  %2249 = vmatpush2.msra.mxu0 0.0
  %2250 = vmatprep.subr.mxu0 0.0
  %2251 = vmatpush2.msra.mxu0 0.0
  %2252 = vmatprep.subr.mxu0 0.0
  %2253 = vmatpush2.msra.mxu0 0.0
  %2254 = vmatprep.subr.mxu0 0.0
  %2255 = vmatpush2.msra.mxu0 0.0
  %2256 = vmatprep.subr.mxu0 0.0
  %2257 = vmatpush2.msra.mxu0 0.0
  %2258 = vmatprep.subr.mxu0 0.0
  %2259 = vmatpush2.msra.mxu0 0.0
  %2260 = vmatprep.subr.mxu0 0.0
  %2261 = vmatpush2.msra.mxu0 0.0
  %2262 = vmatprep.subr.mxu0 0.0
  %2263 = vmatpush2.msra.mxu0 0.0
  %2264 = vmatprep.subr.mxu0 0.0
  %2265 = vmatpush2.msra.mxu0 0.0
  %2266 = vmatprep.mubr.f32.mxu0 0.0
  %2267 = vmatmul.mubr.f32.gmra.mxu0 %v2127
  %v2268 = vpop.f32.mrf.mxu0
  %v2269 = vadd.f32 %v1086, %v2268
  %v2270 = vpop.f32.mrf.mxu0
  %2271 = vdwg.mxu0
  %v2272 = vadd.f32 %v2128, %v2198
  %v2273 = vxor.u32 %v2272, 2147483648
  %v2274 = vmul.f32 %v2273, 1.442695
  %v2275 = vpow.pop %v2274
  %v2276 = vadd.f32 %v2275, 1.0
  %v2277 = vrcp.pop %v2276
  %v2278 = vmul.f32 1.0, %v2277
  %v2279 = vadd.f32 %v2129, %v2200
  %v2280 = vxor.u32 %v2279, 2147483648
  %v2281 = vmul.f32 %v2280, 1.442695
  %v2282 = vpow.pop %v2281
  %v2283 = vadd.f32 %v2282, 1.0
  %v2284 = vrcp.pop %v2283
  %v2285 = vmul.f32 1.0, %v2284
  %v2286 = vmul.f32 %v2278, %v2269
  %v2287 = vadd.f32 %v2130, %v2286
  %v2288 = vtanh.pop %v2287
  %v2289 = vsub.f32 1.0, %v2285
  %v2290 = vmul.f32 %v2289, %v2288
  %v2291 = vmul.f32 %v2285, %v2127
  %v2292 = vadd.f32 %v2290, %v2291
  %v2293 = vld [vmem:[#allocation2 + $0xa8] sm:$0xff]
  %v2294 = vld [vmem:[#allocation2 + $0xb0] sm:$0xff]
  %v2295 = vld [vmem:[#allocation2 + $0xb8] sm:$0xff]
  %2296 = vmatprep.subr.mxu0 %v1139
  %2297 = vmatpush1.msra.mxu0 %v1138
  %2298 = vmatprep.subr.mxu0 %v1136
  %2299 = vmatpush1.msra.mxu0 %v1135
  %2300 = vmatprep.subr.mxu0 %v1133
  %2301 = vmatpush1.msra.mxu0 %v1132
  %2302 = vmatprep.subr.mxu0 %v1130
  %2303 = vmatpush1.msra.mxu0 %v1129
  %2304 = vmatprep.subr.mxu0 %v1127
  %2305 = vmatpush1.msra.mxu0 %v1126
  %2306 = vmatprep.subr.mxu0 %v1124
  %2307 = vmatpush1.msra.mxu0 %v1123
  %2308 = vmatprep.subr.mxu0 %v1121
  %2309 = vmatpush1.msra.mxu0 %v1120
  %2310 = vmatprep.subr.mxu0 %v1118
  %2311 = vmatpush1.msra.mxu0 %v1117
  %2312 = vmatprep.subr.mxu0 %v1115
  %2313 = vmatpush1.msra.mxu0 %v1114
  %2314 = vmatprep.subr.mxu0 %v1112
  %2315 = vmatpush1.msra.mxu0 %v1111
  %2316 = vmatprep.subr.mxu0 %v1109
  %2317 = vmatpush1.msra.mxu0 %v1108
  %2318 = vmatprep.subr.mxu0 %v1106
  %2319 = vmatpush1.msra.mxu0 %v1105
  %2320 = vmatprep.subr.mxu0 %v1103
  %2321 = vmatpush1.msra.mxu0 %v1102
  %2322 = vmatprep.subr.mxu0 %v1100
  %2323 = vmatpush1.msra.mxu0 %v1099
  %2324 = vmatprep.subr.mxu0 %v1097
  %2325 = vmatpush1.msra.mxu0 %v1096
  %2326 = vmatprep.subr.mxu0 %v1094
  %2327 = vmatpush1.msra.mxu0 %v1093
  %2328 = vmatprep.subr.mxu0 0.0
  %2329 = vmatpush2.msra.mxu0 0.0
  %2330 = vmatprep.subr.mxu0 0.0
  %2331 = vmatpush2.msra.mxu0 0.0
  %2332 = vmatprep.subr.mxu0 0.0
  %2333 = vmatpush2.msra.mxu0 0.0
  %2334 = vmatprep.subr.mxu0 0.0
  %2335 = vmatpush2.msra.mxu0 0.0
  %2336 = vmatprep.subr.mxu0 0.0
  %2337 = vmatpush2.msra.mxu0 0.0
  %2338 = vmatprep.subr.mxu0 0.0
  %2339 = vmatpush2.msra.mxu0 0.0
  %2340 = vmatprep.subr.mxu0 0.0
  %2341 = vmatpush2.msra.mxu0 0.0
  %2342 = vmatprep.subr.mxu0 0.0
  %2343 = vmatpush2.msra.mxu0 0.0
  %2344 = vmatprep.subr.mxu0 0.0
  %2345 = vmatpush2.msra.mxu0 0.0
  %2346 = vmatprep.subr.mxu0 0.0
  %2347 = vmatpush2.msra.mxu0 0.0
  %2348 = vmatprep.subr.mxu0 0.0
  %2349 = vmatpush2.msra.mxu0 0.0
  %2350 = vmatprep.subr.mxu0 0.0
  %2351 = vmatpush2.msra.mxu0 0.0
  %2352 = vmatprep.subr.mxu0 0.0
  %2353 = vmatpush2.msra.mxu0 0.0
  %2354 = vmatprep.subr.mxu0 0.0
  %2355 = vmatpush2.msra.mxu0 0.0
  %2356 = vmatprep.subr.mxu0 0.0
  %2357 = vmatpush2.msra.mxu0 0.0
  %2358 = vmatprep.subr.mxu0 0.0
  %2359 = vmatpush2.msra.mxu0 0.0
  %2360 = vmatprep.mubr.f32.mxu0 0.0
  %2361 = vmatmul.mubr.f32.gmra.mxu0 %v2292
  %v2362 = vpop.f32.mrf.mxu0
  %v2363 = vadd.f32 %v1078, %v2362
  %v2364 = vpop.f32.mrf.mxu0
  %v2365 = vadd.f32 %v1082, %v2364
  %2366 = vdwg.mxu0
  %2367 = vmatprep.subr.mxu0 0.0
  %2368 = vmatpush1.msra.mxu0 %v1140
  %2369 = vmatprep.subr.mxu0 0.0
  %2370 = vmatpush1.msra.mxu0 %v1137
  %2371 = vmatprep.subr.mxu0 0.0
  %2372 = vmatpush1.msra.mxu0 %v1134
  %2373 = vmatprep.subr.mxu0 0.0
  %2374 = vmatpush1.msra.mxu0 %v1131
  %2375 = vmatprep.subr.mxu0 0.0
  %2376 = vmatpush1.msra.mxu0 %v1128
  %2377 = vmatprep.subr.mxu0 0.0
  %2378 = vmatpush1.msra.mxu0 %v1125
  %2379 = vmatprep.subr.mxu0 0.0
  %2380 = vmatpush1.msra.mxu0 %v1122
  %2381 = vmatprep.subr.mxu0 0.0
  %2382 = vmatpush1.msra.mxu0 %v1119
  %2383 = vmatprep.subr.mxu0 0.0
  %2384 = vmatpush1.msra.mxu0 %v1116
  %2385 = vmatprep.subr.mxu0 0.0
  %2386 = vmatpush1.msra.mxu0 %v1113
  %2387 = vmatprep.subr.mxu0 0.0
  %2388 = vmatpush1.msra.mxu0 %v1110
  %2389 = vmatprep.subr.mxu0 0.0
  %2390 = vmatpush1.msra.mxu0 %v1107
  %2391 = vmatprep.subr.mxu0 0.0
  %2392 = vmatpush1.msra.mxu0 %v1104
  %2393 = vmatprep.subr.mxu0 0.0
  %2394 = vmatpush1.msra.mxu0 %v1101
  %2395 = vmatprep.subr.mxu0 0.0
  %2396 = vmatpush1.msra.mxu0 %v1098
  %2397 = vmatprep.subr.mxu0 0.0
  %2398 = vmatpush1.msra.mxu0 %v1095
  %2399 = vmatprep.subr.mxu0 0.0
  %2400 = vmatpush2.msra.mxu0 0.0
  %2401 = vmatprep.subr.mxu0 0.0
  %2402 = vmatpush2.msra.mxu0 0.0
  %2403 = vmatprep.subr.mxu0 0.0
  %2404 = vmatpush2.msra.mxu0 0.0
  %2405 = vmatprep.subr.mxu0 0.0
  %2406 = vmatpush2.msra.mxu0 0.0
  %2407 = vmatprep.subr.mxu0 0.0
  %2408 = vmatpush2.msra.mxu0 0.0
  %2409 = vmatprep.subr.mxu0 0.0
  %2410 = vmatpush2.msra.mxu0 0.0
  %2411 = vmatprep.subr.mxu0 0.0
  %2412 = vmatpush2.msra.mxu0 0.0
  %2413 = vmatprep.subr.mxu0 0.0
  %2414 = vmatpush2.msra.mxu0 0.0
  %2415 = vmatprep.subr.mxu0 0.0
  %2416 = vmatpush2.msra.mxu0 0.0
  %2417 = vmatprep.subr.mxu0 0.0
  %2418 = vmatpush2.msra.mxu0 0.0
  %2419 = vmatprep.subr.mxu0 0.0
  %2420 = vmatpush2.msra.mxu0 0.0
  %2421 = vmatprep.subr.mxu0 0.0
  %2422 = vmatpush2.msra.mxu0 0.0
  %2423 = vmatprep.subr.mxu0 0.0
  %2424 = vmatpush2.msra.mxu0 0.0
  %2425 = vmatprep.subr.mxu0 0.0
  %2426 = vmatpush2.msra.mxu0 0.0
  %2427 = vmatprep.subr.mxu0 0.0
  %2428 = vmatpush2.msra.mxu0 0.0
  %2429 = vmatprep.subr.mxu0 0.0
  %2430 = vmatpush2.msra.mxu0 0.0
  %2431 = vmatprep.mubr.f32.mxu0 0.0
  %2432 = vmatmul.mubr.f32.gmra.mxu0 %v2292
  %v2433 = vpop.f32.mrf.mxu0
  %v2434 = vadd.f32 %v1086, %v2433
  %v2435 = vpop.f32.mrf.mxu0
  %2436 = vdwg.mxu0
  %v2437 = vadd.f32 %v2293, %v2363
  %v2438 = vxor.u32 %v2437, 2147483648
  %v2439 = vmul.f32 %v2438, 1.442695
  %v2440 = vpow.pop %v2439
  %v2441 = vadd.f32 %v2440, 1.0
  %v2442 = vrcp.pop %v2441
  %v2443 = vmul.f32 1.0, %v2442
  %v2444 = vadd.f32 %v2294, %v2365
  %v2445 = vxor.u32 %v2444, 2147483648
  %v2446 = vmul.f32 %v2445, 1.442695
  %v2447 = vpow.pop %v2446
  %v2448 = vadd.f32 %v2447, 1.0
  %v2449 = vrcp.pop %v2448
  %v2450 = vmul.f32 1.0, %v2449
  %v2451 = vmul.f32 %v2443, %v2434
  %v2452 = vadd.f32 %v2295, %v2451
  %v2453 = vtanh.pop %v2452
  %v2454 = vsub.f32 1.0, %v2450
  %v2455 = vmul.f32 %v2454, %v2453
  %v2456 = vmul.f32 %v2450, %v2292
  %v2457 = vadd.f32 %v2455, %v2456
  %s2458 = smul.u32 8, 16
  %s2459 = smul.u32 %s2458, 3
  %s2460 = sshll.u32 %s2459, 4
  %2461 = dma.done [#allocation9], %s2460
  %s2462 = smul.u32 1, 3
  %s2463 = sshll.u32 %s2462, 4
  %2464 = dma.done %s166, %s2463
  %s2465 = smul.u32 8, 48
  %s2466 = smul.u32 %s2465, 2
  %s2467 = sshll.u32 %s2466, 4
  %2468 = dma.done %s213, %s2467
  %s2469 = smul.u32 1, 2
  %s2470 = sshll.u32 %s2469, 4
  %2471 = dma.done %s447, %s2470
  %s2472 = smul.u32 8, 32
  %s2473 = smul.u32 %s2472, 3
  %s2474 = sshll.u32 %s2473, 4
  %2475 = dma.done %s494, %s2474
  %s2476 = sshll.u32 %s2462, 4
  %2477 = dma.done %s728, %s2476
  %v2478 = vld [vmem:[#allocation3] sm:$0xff]
  %v2479 = vld [vmem:[#allocation3 + $0x8] sm:$0xff]
  %v2480 = vld [vmem:[#allocation3 + $0x10] sm:$0xff]
  %v2481 = vld [vmem:[#allocation3 + $0x18] sm:$0xff]
  %v2482 = vld [vmem:[#allocation3 + $0x20] sm:$0xff]
  %v2483 = vld [vmem:[#allocation3 + $0x28] sm:$0xff]
  %v2484 = vld [vmem:[#allocation3 + $0x30] sm:$0xff]
  %v2485 = vld [vmem:[#allocation3 + $0x38] sm:$0xff]
  %v2486 = vld [vmem:[#allocation3 + $0x40] sm:$0xff]
  %v2487 = vld [vmem:[#allocation3 + $0x48] sm:$0xff]
  %v2488 = vld [vmem:[#allocation3 + $0x50] sm:$0xff]
  %v2489 = vld [vmem:[#allocation3 + $0x58] sm:$0xff]
  %v2490 = vld [vmem:[#allocation3 + $0x60] sm:$0xff]
  %v2491 = vld [vmem:[#allocation3 + $0x68] sm:$0xff]
  %v2492 = vld [vmem:[#allocation3 + $0x70] sm:$0xff]
  %v2493 = vld [vmem:[#allocation3 + $0x78] sm:$0xff]
  %v2494 = vld [vmem:[#allocation3 + $0x80] sm:$0xff]
  %v2495 = vld [vmem:[#allocation3 + $0x88] sm:$0xff]
  %v2496 = vld [vmem:[#allocation3 + $0x90] sm:$0xff]
  %v2497 = vld [vmem:[#allocation3 + $0x98] sm:$0xff]
  %v2498 = vld [vmem:[#allocation3 + $0xa0] sm:$0xff]
  %v2499 = vld [vmem:[#allocation3 + $0xa8] sm:$0xff]
  %v2500 = vld [vmem:[#allocation3 + $0xb0] sm:$0xff]
  %v2501 = vld [vmem:[#allocation3 + $0xb8] sm:$0xff]
  %v2502 = vld [vmem:[#allocation3 + $0xc0] sm:$0xff]
  %v2503 = vld [vmem:[#allocation3 + $0xc8] sm:$0xff]
  %v2504 = vld [vmem:[#allocation3 + $0xd0] sm:$0xff]
  %v2505 = vld [vmem:[#allocation3 + $0xd8] sm:$0xff]
  %v2506 = vld [vmem:[#allocation3 + $0xe0] sm:$0xff]
  %v2507 = vld [vmem:[#allocation3 + $0xe8] sm:$0xff]
  %v2508 = vld [vmem:[#allocation3 + $0xf0] sm:$0xff]
  %v2509 = vld [vmem:[#allocation3 + $0xf8] sm:$0xff]
  %v2510 = vld [vmem:[#allocation3 + $0x100] sm:$0xff]
  %v2511 = vld [vmem:[#allocation3 + $0x108] sm:$0xff]
  %v2512 = vld [vmem:[#allocation3 + $0x110] sm:$0xff]
  %v2513 = vld [vmem:[#allocation3 + $0x118] sm:$0xff]
  %v2514 = vld [vmem:[#allocation3 + $0x120] sm:$0xff]
  %v2515 = vld [vmem:[#allocation3 + $0x128] sm:$0xff]
  %v2516 = vld [vmem:[#allocation3 + $0x130] sm:$0xff]
  %v2517 = vld [vmem:[#allocation3 + $0x138] sm:$0xff]
  %v2518 = vld [vmem:[#allocation3 + $0x140] sm:$0xff]
  %v2519 = vld [vmem:[#allocation3 + $0x148] sm:$0xff]
  %v2520 = vld [vmem:[#allocation3 + $0x150] sm:$0xff]
  %v2521 = vld [vmem:[#allocation3 + $0x158] sm:$0xff]
  %v2522 = vld [vmem:[#allocation3 + $0x160] sm:$0xff]
  %v2523 = vld [vmem:[#allocation3 + $0x168] sm:$0xff]
  %v2524 = vld [vmem:[#allocation3 + $0x170] sm:$0xff]
  %v2525 = vld [vmem:[#allocation3 + $0x178] sm:$0xff]
  %v2526 = vld [vmem:[#allocation4] sm:$0x7]
  %v2528 = vlaneseq
  %v2529 = vshrl.u32 %v2528, 7
  %v2530 = vsub.s32 0, %v2529
  %v2531 = vrot.slane %v2526, %v2530
  %v2532 = vlaneseq
  %v2533 = vshrl.u32 %v2532, 7
  %v2534 = vsub.s32 1, %v2533
  %v2535 = vrot.slane %v2526, %v2534
  %v2536 = vlaneseq
  %v2537 = vshrl.u32 %v2536, 7
  %v2538 = vsub.s32 2, %v2537
  %v2539 = vrot.slane %v2526, %v2538
  %2543 = vmatprep.subr.mxu0 %v2524
  %2544 = vmatpush1.msra.mxu0 %v2523
  %2545 = vmatprep.subr.mxu0 %v2521
  %2546 = vmatpush1.msra.mxu0 %v2520
  %2547 = vmatprep.subr.mxu0 %v2518
  %2548 = vmatpush1.msra.mxu0 %v2517
  %2549 = vmatprep.subr.mxu0 %v2515
  %2550 = vmatpush1.msra.mxu0 %v2514
  %2551 = vmatprep.subr.mxu0 %v2512
  %2552 = vmatpush1.msra.mxu0 %v2511
  %2553 = vmatprep.subr.mxu0 %v2509
  %2554 = vmatpush1.msra.mxu0 %v2508
  %2555 = vmatprep.subr.mxu0 %v2506
  %2556 = vmatpush1.msra.mxu0 %v2505
  %2557 = vmatprep.subr.mxu0 %v2503
  %2558 = vmatpush1.msra.mxu0 %v2502
  %2559 = vmatprep.subr.mxu0 %v2500
  %2560 = vmatpush1.msra.mxu0 %v2499
  %2561 = vmatprep.subr.mxu0 %v2497
  %2562 = vmatpush1.msra.mxu0 %v2496
  %2563 = vmatprep.subr.mxu0 %v2494
  %2564 = vmatpush1.msra.mxu0 %v2493
  %2565 = vmatprep.subr.mxu0 %v2491
  %2566 = vmatpush1.msra.mxu0 %v2490
  %2567 = vmatprep.subr.mxu0 %v2488
  %2568 = vmatpush1.msra.mxu0 %v2487
  %2569 = vmatprep.subr.mxu0 %v2485
  %2570 = vmatpush1.msra.mxu0 %v2484
  %2571 = vmatprep.subr.mxu0 %v2482
  %2572 = vmatpush1.msra.mxu0 %v2481
  %2573 = vmatprep.subr.mxu0 %v2479
  %2574 = vmatpush1.msra.mxu0 %v2478
  %2575 = vmatprep.subr.mxu0 0.0
  %2576 = vmatpush2.msra.mxu0 0.0
  %2577 = vmatprep.subr.mxu0 0.0
  %2578 = vmatpush2.msra.mxu0 0.0
  %2579 = vmatprep.subr.mxu0 0.0
  %2580 = vmatpush2.msra.mxu0 0.0
  %2581 = vmatprep.subr.mxu0 0.0
  %2582 = vmatpush2.msra.mxu0 0.0
  %2583 = vmatprep.subr.mxu0 0.0
  %2584 = vmatpush2.msra.mxu0 0.0
  %2585 = vmatprep.subr.mxu0 0.0
  %2586 = vmatpush2.msra.mxu0 0.0
  %2587 = vmatprep.subr.mxu0 0.0
  %2588 = vmatpush2.msra.mxu0 0.0
  %2589 = vmatprep.subr.mxu0 0.0
  %2590 = vmatpush2.msra.mxu0 0.0
  %2591 = vmatprep.subr.mxu0 0.0
  %2592 = vmatpush2.msra.mxu0 0.0
  %2593 = vmatprep.subr.mxu0 0.0
  %2594 = vmatpush2.msra.mxu0 0.0
  %2595 = vmatprep.subr.mxu0 0.0
  %2596 = vmatpush2.msra.mxu0 0.0
  %2597 = vmatprep.subr.mxu0 0.0
  %2598 = vmatpush2.msra.mxu0 0.0
  %2599 = vmatprep.subr.mxu0 0.0
  %2600 = vmatpush2.msra.mxu0 0.0
  %2601 = vmatprep.subr.mxu0 0.0
  %2602 = vmatpush2.msra.mxu0 0.0
  %2603 = vmatprep.subr.mxu0 0.0
  %2604 = vmatpush2.msra.mxu0 0.0
  %2605 = vmatprep.subr.mxu0 0.0
  %2606 = vmatpush2.msra.mxu0 0.0
  %2607 = vmatprep.mubr.f32.mxu0 0.0
  %2608 = vmatmul.mubr.f32.gmra.mxu0 %v2457
  %v2609 = vpop.f32.mrf.mxu0
  %v2610 = vadd.f32 %v2531, %v2609
  %v2611 = vpop.f32.mrf.mxu0
  %v2612 = vadd.f32 %v2535, %v2611
  %2613 = vdwg.mxu0
  %2614 = vmatprep.subr.mxu0 0.0
  %2615 = vmatpush1.msra.mxu0 %v2525
  %2616 = vmatprep.subr.mxu0 0.0
  %2617 = vmatpush1.msra.mxu0 %v2522
  %2618 = vmatprep.subr.mxu0 0.0
  %2619 = vmatpush1.msra.mxu0 %v2519
  %2620 = vmatprep.subr.mxu0 0.0
  %2621 = vmatpush1.msra.mxu0 %v2516
  %2622 = vmatprep.subr.mxu0 0.0
  %2623 = vmatpush1.msra.mxu0 %v2513
  %2624 = vmatprep.subr.mxu0 0.0
  %2625 = vmatpush1.msra.mxu0 %v2510
  %2626 = vmatprep.subr.mxu0 0.0
  %2627 = vmatpush1.msra.mxu0 %v2507
  %2628 = vmatprep.subr.mxu0 0.0
  %2629 = vmatpush1.msra.mxu0 %v2504
  %2630 = vmatprep.subr.mxu0 0.0
  %2631 = vmatpush1.msra.mxu0 %v2501
  %2632 = vmatprep.subr.mxu0 0.0
  %2633 = vmatpush1.msra.mxu0 %v2498
  %2634 = vmatprep.subr.mxu0 0.0
  %2635 = vmatpush1.msra.mxu0 %v2495
  %2636 = vmatprep.subr.mxu0 0.0
  %2637 = vmatpush1.msra.mxu0 %v2492
  %2638 = vmatprep.subr.mxu0 0.0
  %2639 = vmatpush1.msra.mxu0 %v2489
  %2640 = vmatprep.subr.mxu0 0.0
  %2641 = vmatpush1.msra.mxu0 %v2486
  %2642 = vmatprep.subr.mxu0 0.0
  %2643 = vmatpush1.msra.mxu0 %v2483
  %2644 = vmatprep.subr.mxu0 0.0
  %2645 = vmatpush1.msra.mxu0 %v2480
  %2646 = vmatprep.subr.mxu0 0.0
  %2647 = vmatpush2.msra.mxu0 0.0
  %2648 = vmatprep.subr.mxu0 0.0
  %2649 = vmatpush2.msra.mxu0 0.0
  %2650 = vmatprep.subr.mxu0 0.0
  %2651 = vmatpush2.msra.mxu0 0.0
  %2652 = vmatprep.subr.mxu0 0.0
  %2653 = vmatpush2.msra.mxu0 0.0
  %2654 = vmatprep.subr.mxu0 0.0
  %2655 = vmatpush2.msra.mxu0 0.0
  %2656 = vmatprep.subr.mxu0 0.0
  %2657 = vmatpush2.msra.mxu0 0.0
  %2658 = vmatprep.subr.mxu0 0.0
  %2659 = vmatpush2.msra.mxu0 0.0
  %2660 = vmatprep.subr.mxu0 0.0
  %2661 = vmatpush2.msra.mxu0 0.0
  %2662 = vmatprep.subr.mxu0 0.0
  %2663 = vmatpush2.msra.mxu0 0.0
  %2664 = vmatprep.subr.mxu0 0.0
  %2665 = vmatpush2.msra.mxu0 0.0
  %2666 = vmatprep.subr.mxu0 0.0
  %2667 = vmatpush2.msra.mxu0 0.0
  %2668 = vmatprep.subr.mxu0 0.0
  %2669 = vmatpush2.msra.mxu0 0.0
  %2670 = vmatprep.subr.mxu0 0.0
  %2671 = vmatpush2.msra.mxu0 0.0
  %2672 = vmatprep.subr.mxu0 0.0
  %2673 = vmatpush2.msra.mxu0 0.0
  %2674 = vmatprep.subr.mxu0 0.0
  %2675 = vmatpush2.msra.mxu0 0.0
  %2676 = vmatprep.subr.mxu0 0.0
  %2677 = vmatpush2.msra.mxu0 0.0
  %2678 = vmatprep.mubr.f32.mxu0 0.0
  %2679 = vmatmul.mubr.f32.gmra.mxu0 %v2457
  %v2680 = vpop.f32.mrf.mxu0
  %v2681 = vadd.f32 %v2539, %v2680
  %v2682 = vpop.f32.mrf.mxu0
  %2683 = vdwg.mxu0
  %v2684 = vtanh.pop %v2610
  %v2685 = vtanh.pop %v2612
  %v2686 = vtanh.pop %v2681
  %v2687 = vld [vmem:[#allocation5] sm:$0xff]
  %v2688 = vld [vmem:[#allocation5 + $0x8] sm:$0xff]
  %v2689 = vld [vmem:[#allocation5 + $0x10] sm:$0xff]
  %v2690 = vld [vmem:[#allocation5 + $0x18] sm:$0xff]
  %v2691 = vld [vmem:[#allocation5 + $0x20] sm:$0xff]
  %v2692 = vld [vmem:[#allocation5 + $0x28] sm:$0xff]
  %v2693 = vld [vmem:[#allocation5 + $0x30] sm:$0xff]
  %v2694 = vld [vmem:[#allocation5 + $0x38] sm:$0xff]
  %v2695 = vld [vmem:[#allocation5 + $0x40] sm:$0xff]
  %v2696 = vld [vmem:[#allocation5 + $0x48] sm:$0xff]
  %v2697 = vld [vmem:[#allocation5 + $0x50] sm:$0xff]
  %v2698 = vld [vmem:[#allocation5 + $0x58] sm:$0xff]
  %v2699 = vld [vmem:[#allocation5 + $0x60] sm:$0xff]
  %v2700 = vld [vmem:[#allocation5 + $0x68] sm:$0xff]
  %v2701 = vld [vmem:[#allocation5 + $0x70] sm:$0xff]
  %v2702 = vld [vmem:[#allocation5 + $0x78] sm:$0xff]
  %v2703 = vld [vmem:[#allocation5 + $0x80] sm:$0xff]
  %v2704 = vld [vmem:[#allocation5 + $0x88] sm:$0xff]
  %v2705 = vld [vmem:[#allocation5 + $0x90] sm:$0xff]
  %v2706 = vld [vmem:[#allocation5 + $0x98] sm:$0xff]
  %v2707 = vld [vmem:[#allocation5 + $0xa0] sm:$0xff]
  %v2708 = vld [vmem:[#allocation5 + $0xa8] sm:$0xff]
  %v2709 = vld [vmem:[#allocation5 + $0xb0] sm:$0xff]
  %v2710 = vld [vmem:[#allocation5 + $0xb8] sm:$0xff]
  %v2711 = vld [vmem:[#allocation5 + $0xc0] sm:$0xff]
  %v2712 = vld [vmem:[#allocation5 + $0xc8] sm:$0xff]
  %v2713 = vld [vmem:[#allocation5 + $0xd0] sm:$0xff]
  %v2714 = vld [vmem:[#allocation5 + $0xd8] sm:$0xff]
  %v2715 = vld [vmem:[#allocation5 + $0xe0] sm:$0xff]
  %v2716 = vld [vmem:[#allocation5 + $0xe8] sm:$0xff]
  %v2717 = vld [vmem:[#allocation5 + $0xf0] sm:$0xff]
  %v2718 = vld [vmem:[#allocation5 + $0xf8] sm:$0xff]
  %v2719 = vld [vmem:[#allocation5 + $0x100] sm:$0xff]
  %v2720 = vld [vmem:[#allocation5 + $0x108] sm:$0xff]
  %v2721 = vld [vmem:[#allocation5 + $0x110] sm:$0xff]
  %v2722 = vld [vmem:[#allocation5 + $0x118] sm:$0xff]
  %v2723 = vld [vmem:[#allocation5 + $0x120] sm:$0xff]
  %v2724 = vld [vmem:[#allocation5 + $0x128] sm:$0xff]
  %v2725 = vld [vmem:[#allocation5 + $0x130] sm:$0xff]
  %v2726 = vld [vmem:[#allocation5 + $0x138] sm:$0xff]
  %v2727 = vld [vmem:[#allocation5 + $0x140] sm:$0xff]
  %v2728 = vld [vmem:[#allocation5 + $0x148] sm:$0xff]
  %v2729 = vld [vmem:[#allocation5 + $0x150] sm:$0xff]
  %v2730 = vld [vmem:[#allocation5 + $0x158] sm:$0xff]
  %v2731 = vld [vmem:[#allocation5 + $0x160] sm:$0xff]
  %v2732 = vld [vmem:[#allocation5 + $0x168] sm:$0xff]
  %v2733 = vld [vmem:[#allocation5 + $0x170] sm:$0xff]
  %v2734 = vld [vmem:[#allocation5 + $0x178] sm:$0xff]
  %v2735 = vld [vmem:[#allocation5 + $0x180] sm:$0xff]
  %v2736 = vld [vmem:[#allocation5 + $0x188] sm:$0xff]
  %v2737 = vld [vmem:[#allocation5 + $0x190] sm:$0xff]
  %v2738 = vld [vmem:[#allocation5 + $0x198] sm:$0xff]
  %v2739 = vld [vmem:[#allocation5 + $0x1a0] sm:$0xff]
  %v2740 = vld [vmem:[#allocation5 + $0x1a8] sm:$0xff]
  %v2741 = vld [vmem:[#allocation5 + $0x1b0] sm:$0xff]
  %v2742 = vld [vmem:[#allocation5 + $0x1b8] sm:$0xff]
  %v2743 = vld [vmem:[#allocation5 + $0x1c0] sm:$0xff]
  %v2744 = vld [vmem:[#allocation5 + $0x1c8] sm:$0xff]
  %v2745 = vld [vmem:[#allocation5 + $0x1d0] sm:$0xff]
  %v2746 = vld [vmem:[#allocation5 + $0x1d8] sm:$0xff]
  %v2747 = vld [vmem:[#allocation5 + $0x1e0] sm:$0xff]
  %v2748 = vld [vmem:[#allocation5 + $0x1e8] sm:$0xff]
  %v2749 = vld [vmem:[#allocation5 + $0x1f0] sm:$0xff]
  %v2750 = vld [vmem:[#allocation5 + $0x1f8] sm:$0xff]
  %v2751 = vld [vmem:[#allocation5 + $0x200] sm:$0xff]
  %v2752 = vld [vmem:[#allocation5 + $0x208] sm:$0xff]
  %v2753 = vld [vmem:[#allocation5 + $0x210] sm:$0xff]
  %v2754 = vld [vmem:[#allocation5 + $0x218] sm:$0xff]
  %v2755 = vld [vmem:[#allocation5 + $0x220] sm:$0xff]
  %v2756 = vld [vmem:[#allocation5 + $0x228] sm:$0xff]
  %v2757 = vld [vmem:[#allocation5 + $0x230] sm:$0xff]
  %v2758 = vld [vmem:[#allocation5 + $0x238] sm:$0xff]
  %v2759 = vld [vmem:[#allocation5 + $0x240] sm:$0xff]
  %v2760 = vld [vmem:[#allocation5 + $0x248] sm:$0xff]
  %v2761 = vld [vmem:[#allocation5 + $0x250] sm:$0xff]
  %v2762 = vld [vmem:[#allocation5 + $0x258] sm:$0xff]
  %v2763 = vld [vmem:[#allocation5 + $0x260] sm:$0xff]
  %v2764 = vld [vmem:[#allocation5 + $0x268] sm:$0xff]
  %v2765 = vld [vmem:[#allocation5 + $0x270] sm:$0xff]
  %v2766 = vld [vmem:[#allocation5 + $0x278] sm:$0xff]
  %v2767 = vld [vmem:[#allocation5 + $0x280] sm:$0xff]
  %v2768 = vld [vmem:[#allocation5 + $0x288] sm:$0xff]
  %v2769 = vld [vmem:[#allocation5 + $0x290] sm:$0xff]
  %v2770 = vld [vmem:[#allocation5 + $0x298] sm:$0xff]
  %v2771 = vld [vmem:[#allocation5 + $0x2a0] sm:$0xff]
  %v2772 = vld [vmem:[#allocation5 + $0x2a8] sm:$0xff]
  %v2773 = vld [vmem:[#allocation5 + $0x2b0] sm:$0xff]
  %v2774 = vld [vmem:[#allocation5 + $0x2b8] sm:$0xff]
  %v2775 = vld [vmem:[#allocation5 + $0x2c0] sm:$0xff]
  %v2776 = vld [vmem:[#allocation5 + $0x2c8] sm:$0xff]
  %v2777 = vld [vmem:[#allocation5 + $0x2d0] sm:$0xff]
  %v2778 = vld [vmem:[#allocation5 + $0x2d8] sm:$0xff]
  %v2779 = vld [vmem:[#allocation5 + $0x2e0] sm:$0xff]
  %v2780 = vld [vmem:[#allocation5 + $0x2e8] sm:$0xff]
  %v2781 = vld [vmem:[#allocation5 + $0x2f0] sm:$0xff]
  %v2782 = vld [vmem:[#allocation5 + $0x2f8] sm:$0xff]
  %v2783 = vld [vmem:[#allocation6] sm:$0x3]
  %v2785 = vlaneseq
  %v2786 = vshrl.u32 %v2785, 7
  %v2787 = vsub.s32 0, %v2786
  %v2788 = vrot.slane %v2783, %v2787
  %v2789 = vlaneseq
  %v2790 = vshrl.u32 %v2789, 7
  %v2791 = vsub.s32 1, %v2790
  %v2792 = vrot.slane %v2783, %v2791
  %2795 = vmatprep.subr.mxu0 %v2718
  %2796 = vmatpush1.msra.mxu0 %v2717
  %2797 = vmatprep.subr.mxu0 %v2716
  %2798 = vmatpush1.msra.mxu0 %v2715
  %2799 = vmatprep.subr.mxu0 %v2714
  %2800 = vmatpush1.msra.mxu0 %v2713
  %2801 = vmatprep.subr.mxu0 %v2712
  %2802 = vmatpush1.msra.mxu0 %v2711
  %2803 = vmatprep.subr.mxu0 %v2710
  %2804 = vmatpush1.msra.mxu0 %v2709
  %2805 = vmatprep.subr.mxu0 %v2708
  %2806 = vmatpush1.msra.mxu0 %v2707
  %2807 = vmatprep.subr.mxu0 %v2706
  %2808 = vmatpush1.msra.mxu0 %v2705
  %2809 = vmatprep.subr.mxu0 %v2704
  %2810 = vmatpush1.msra.mxu0 %v2703
  %2811 = vmatprep.subr.mxu0 %v2702
  %2812 = vmatpush1.msra.mxu0 %v2701
  %2813 = vmatprep.subr.mxu0 %v2700
  %2814 = vmatpush1.msra.mxu0 %v2699
  %2815 = vmatprep.subr.mxu0 %v2698
  %2816 = vmatpush1.msra.mxu0 %v2697
  %2817 = vmatprep.subr.mxu0 %v2696
  %2818 = vmatpush1.msra.mxu0 %v2695
  %2819 = vmatprep.subr.mxu0 %v2694
  %2820 = vmatpush1.msra.mxu0 %v2693
  %2821 = vmatprep.subr.mxu0 %v2692
  %2822 = vmatpush1.msra.mxu0 %v2691
  %2823 = vmatprep.subr.mxu0 %v2690
  %2824 = vmatpush1.msra.mxu0 %v2689
  %2825 = vmatprep.subr.mxu0 %v2688
  %2826 = vmatpush1.msra.mxu0 %v2687
  %2827 = vmatprep.subr.mxu0 %v2750
  %2828 = vmatpush2.msra.mxu0 %v2749
  %2829 = vmatprep.subr.mxu0 %v2748
  %2830 = vmatpush2.msra.mxu0 %v2747
  %2831 = vmatprep.subr.mxu0 %v2746
  %2832 = vmatpush2.msra.mxu0 %v2745
  %2833 = vmatprep.subr.mxu0 %v2744
  %2834 = vmatpush2.msra.mxu0 %v2743
  %2835 = vmatprep.subr.mxu0 %v2742
  %2836 = vmatpush2.msra.mxu0 %v2741
  %2837 = vmatprep.subr.mxu0 %v2740
  %2838 = vmatpush2.msra.mxu0 %v2739
  %2839 = vmatprep.subr.mxu0 %v2738
  %2840 = vmatpush2.msra.mxu0 %v2737
  %2841 = vmatprep.subr.mxu0 %v2736
  %2842 = vmatpush2.msra.mxu0 %v2735
  %2843 = vmatprep.subr.mxu0 %v2734
  %2844 = vmatpush2.msra.mxu0 %v2733
  %2845 = vmatprep.subr.mxu0 %v2732
  %2846 = vmatpush2.msra.mxu0 %v2731
  %2847 = vmatprep.subr.mxu0 %v2730
  %2848 = vmatpush2.msra.mxu0 %v2729
  %2849 = vmatprep.subr.mxu0 %v2728
  %2850 = vmatpush2.msra.mxu0 %v2727
  %2851 = vmatprep.subr.mxu0 %v2726
  %2852 = vmatpush2.msra.mxu0 %v2725
  %2853 = vmatprep.subr.mxu0 %v2724
  %2854 = vmatpush2.msra.mxu0 %v2723
  %2855 = vmatprep.subr.mxu0 %v2722
  %2856 = vmatpush2.msra.mxu0 %v2721
  %2857 = vmatprep.subr.mxu0 %v2720
  %2858 = vmatpush2.msra.mxu0 %v2719
  %2859 = vmatprep.mubr.f32.mxu0 %v2685
  %2860 = vmatmul.mubr.f32.gmra.mxu0 %v2684
  %v2861 = vpop.f32.mrf.mxu0
  %v2862 = vadd.f32 %v2788, %v2861
  %v2863 = vpop.f32.mrf.mxu0
  %v2864 = vadd.f32 %v2792, %v2863
  %2865 = vdwg.mxu0
  %2866 = vmatprep.subr.mxu0 %v2782
  %2867 = vmatpush1.msra.mxu0 %v2781
  %2868 = vmatprep.subr.mxu0 %v2780
  %2869 = vmatpush1.msra.mxu0 %v2779
  %2870 = vmatprep.subr.mxu0 %v2778
  %2871 = vmatpush1.msra.mxu0 %v2777
  %2872 = vmatprep.subr.mxu0 %v2776
  %2873 = vmatpush1.msra.mxu0 %v2775
  %2874 = vmatprep.subr.mxu0 %v2774
  %2875 = vmatpush1.msra.mxu0 %v2773
  %2876 = vmatprep.subr.mxu0 %v2772
  %2877 = vmatpush1.msra.mxu0 %v2771
  %2878 = vmatprep.subr.mxu0 %v2770
  %2879 = vmatpush1.msra.mxu0 %v2769
  %2880 = vmatprep.subr.mxu0 %v2768
  %2881 = vmatpush1.msra.mxu0 %v2767
  %2882 = vmatprep.subr.mxu0 %v2766
  %2883 = vmatpush1.msra.mxu0 %v2765
  %2884 = vmatprep.subr.mxu0 %v2764
  %2885 = vmatpush1.msra.mxu0 %v2763
  %2886 = vmatprep.subr.mxu0 %v2762
  %2887 = vmatpush1.msra.mxu0 %v2761
  %2888 = vmatprep.subr.mxu0 %v2760
  %2889 = vmatpush1.msra.mxu0 %v2759
  %2890 = vmatprep.subr.mxu0 %v2758
  %2891 = vmatpush1.msra.mxu0 %v2757
  %2892 = vmatprep.subr.mxu0 %v2756
  %2893 = vmatpush1.msra.mxu0 %v2755
  %2894 = vmatprep.subr.mxu0 %v2754
  %2895 = vmatpush1.msra.mxu0 %v2753
  %2896 = vmatprep.subr.mxu0 %v2752
  %2897 = vmatpush1.msra.mxu0 %v2751
  %2898 = vmatprep.subr.mxu0 0.0
  %2899 = vmatpush2.msra.mxu0 0.0
  %2900 = vmatprep.subr.mxu0 0.0
  %2901 = vmatpush2.msra.mxu0 0.0
  %2902 = vmatprep.subr.mxu0 0.0
  %2903 = vmatpush2.msra.mxu0 0.0
  %2904 = vmatprep.subr.mxu0 0.0
  %2905 = vmatpush2.msra.mxu0 0.0
  %2906 = vmatprep.subr.mxu0 0.0
  %2907 = vmatpush2.msra.mxu0 0.0
  %2908 = vmatprep.subr.mxu0 0.0
  %2909 = vmatpush2.msra.mxu0 0.0
  %2910 = vmatprep.subr.mxu0 0.0
  %2911 = vmatpush2.msra.mxu0 0.0
  %2912 = vmatprep.subr.mxu0 0.0
  %2913 = vmatpush2.msra.mxu0 0.0
  %2914 = vmatprep.subr.mxu0 0.0
  %2915 = vmatpush2.msra.mxu0 0.0
  %2916 = vmatprep.subr.mxu0 0.0
  %2917 = vmatpush2.msra.mxu0 0.0
  %2918 = vmatprep.subr.mxu0 0.0
  %2919 = vmatpush2.msra.mxu0 0.0
  %2920 = vmatprep.subr.mxu0 0.0
  %2921 = vmatpush2.msra.mxu0 0.0
  %2922 = vmatprep.subr.mxu0 0.0
  %2923 = vmatpush2.msra.mxu0 0.0
  %2924 = vmatprep.subr.mxu0 0.0
  %2925 = vmatpush2.msra.mxu0 0.0
  %2926 = vmatprep.subr.mxu0 0.0
  %2927 = vmatpush2.msra.mxu0 0.0
  %2928 = vmatprep.subr.mxu0 0.0
  %2929 = vmatpush2.msra.mxu0 0.0
  %2930 = vmatprep.mubr.f32.mxu0 0.0
  %2931 = vmatmul.mubr.f32.gmra.mxu0 %v2686
  %v2932 = vpop.f32.mrf.mxu0
  %v2933 = vadd.f32 %v2862, %v2932
  %v2934 = vpop.f32.mrf.mxu0
  %v2935 = vadd.f32 %v2864, %v2934
  %2936 = vdwg.mxu0
  %v2937 = vtanh.pop %v2933
  %v2938 = vtanh.pop %v2935
  %v2939 = vld [vmem:[#allocation7] sm:$0xff]
  %v2940 = vld [vmem:[#allocation7 + $0x8] sm:$0xff]
  %v2941 = vld [vmem:[#allocation7 + $0x10] sm:$0xff]
  %v2942 = vld [vmem:[#allocation7 + $0x18] sm:$0xff]
  %v2943 = vld [vmem:[#allocation7 + $0x20] sm:$0xff]
  %v2944 = vld [vmem:[#allocation7 + $0x28] sm:$0xff]
  %v2945 = vld [vmem:[#allocation7 + $0x30] sm:$0xff]
  %v2946 = vld [vmem:[#allocation7 + $0x38] sm:$0xff]
  %v2947 = vld [vmem:[#allocation7 + $0x40] sm:$0xff]
  %v2948 = vld [vmem:[#allocation7 + $0x48] sm:$0xff]
  %v2949 = vld [vmem:[#allocation7 + $0x50] sm:$0xff]
  %v2950 = vld [vmem:[#allocation7 + $0x58] sm:$0xff]
  %v2951 = vld [vmem:[#allocation7 + $0x60] sm:$0xff]
  %v2952 = vld [vmem:[#allocation7 + $0x68] sm:$0xff]
  %v2953 = vld [vmem:[#allocation7 + $0x70] sm:$0xff]
  %v2954 = vld [vmem:[#allocation7 + $0x78] sm:$0xff]
  %v2955 = vld [vmem:[#allocation7 + $0x80] sm:$0xff]
  %v2956 = vld [vmem:[#allocation7 + $0x88] sm:$0xff]
  %v2957 = vld [vmem:[#allocation7 + $0x90] sm:$0xff]
  %v2958 = vld [vmem:[#allocation7 + $0x98] sm:$0xff]
  %v2959 = vld [vmem:[#allocation7 + $0xa0] sm:$0xff]
  %v2960 = vld [vmem:[#allocation7 + $0xa8] sm:$0xff]
  %v2961 = vld [vmem:[#allocation7 + $0xb0] sm:$0xff]
  %v2962 = vld [vmem:[#allocation7 + $0xb8] sm:$0xff]
  %v2963 = vld [vmem:[#allocation7 + $0xc0] sm:$0xff]
  %v2964 = vld [vmem:[#allocation7 + $0xc8] sm:$0xff]
  %v2965 = vld [vmem:[#allocation7 + $0xd0] sm:$0xff]
  %v2966 = vld [vmem:[#allocation7 + $0xd8] sm:$0xff]
  %v2967 = vld [vmem:[#allocation7 + $0xe0] sm:$0xff]
  %v2968 = vld [vmem:[#allocation7 + $0xe8] sm:$0xff]
  %v2969 = vld [vmem:[#allocation7 + $0xf0] sm:$0xff]
  %v2970 = vld [vmem:[#allocation7 + $0xf8] sm:$0xff]
  %v2971 = vld [vmem:[#allocation7 + $0x100] sm:$0xff]
  %v2972 = vld [vmem:[#allocation7 + $0x108] sm:$0xff]
  %v2973 = vld [vmem:[#allocation7 + $0x110] sm:$0xff]
  %v2974 = vld [vmem:[#allocation7 + $0x118] sm:$0xff]
  %v2975 = vld [vmem:[#allocation7 + $0x120] sm:$0xff]
  %v2976 = vld [vmem:[#allocation7 + $0x128] sm:$0xff]
  %v2977 = vld [vmem:[#allocation7 + $0x130] sm:$0xff]
  %v2978 = vld [vmem:[#allocation7 + $0x138] sm:$0xff]
  %v2979 = vld [vmem:[#allocation7 + $0x140] sm:$0xff]
  %v2980 = vld [vmem:[#allocation7 + $0x148] sm:$0xff]
  %v2981 = vld [vmem:[#allocation7 + $0x150] sm:$0xff]
  %v2982 = vld [vmem:[#allocation7 + $0x158] sm:$0xff]
  %v2983 = vld [vmem:[#allocation7 + $0x160] sm:$0xff]
  %v2984 = vld [vmem:[#allocation7 + $0x168] sm:$0xff]
  %v2985 = vld [vmem:[#allocation7 + $0x170] sm:$0xff]
  %v2986 = vld [vmem:[#allocation7 + $0x178] sm:$0xff]
  %v2987 = vld [vmem:[#allocation7 + $0x180] sm:$0xff]
  %v2988 = vld [vmem:[#allocation7 + $0x188] sm:$0xff]
  %v2989 = vld [vmem:[#allocation7 + $0x190] sm:$0xff]
  %v2990 = vld [vmem:[#allocation7 + $0x198] sm:$0xff]
  %v2991 = vld [vmem:[#allocation7 + $0x1a0] sm:$0xff]
  %v2992 = vld [vmem:[#allocation7 + $0x1a8] sm:$0xff]
  %v2993 = vld [vmem:[#allocation7 + $0x1b0] sm:$0xff]
  %v2994 = vld [vmem:[#allocation7 + $0x1b8] sm:$0xff]
  %v2995 = vld [vmem:[#allocation7 + $0x1c0] sm:$0xff]
  %v2996 = vld [vmem:[#allocation7 + $0x1c8] sm:$0xff]
  %v2997 = vld [vmem:[#allocation7 + $0x1d0] sm:$0xff]
  %v2998 = vld [vmem:[#allocation7 + $0x1d8] sm:$0xff]
  %v2999 = vld [vmem:[#allocation7 + $0x1e0] sm:$0xff]
  %v3000 = vld [vmem:[#allocation7 + $0x1e8] sm:$0xff]
  %v3001 = vld [vmem:[#allocation7 + $0x1f0] sm:$0xff]
  %v3002 = vld [vmem:[#allocation7 + $0x1f8] sm:$0xff]
  %v3003 = vld [vmem:[#allocation7 + $0x200] sm:$0xff]
  %v3004 = vld [vmem:[#allocation7 + $0x208] sm:$0xff]
  %v3005 = vld [vmem:[#allocation7 + $0x210] sm:$0xff]
  %v3006 = vld [vmem:[#allocation7 + $0x218] sm:$0xff]
  %v3007 = vld [vmem:[#allocation7 + $0x220] sm:$0xff]
  %v3008 = vld [vmem:[#allocation7 + $0x228] sm:$0xff]
  %v3009 = vld [vmem:[#allocation7 + $0x230] sm:$0xff]
  %v3010 = vld [vmem:[#allocation7 + $0x238] sm:$0xff]
  %v3011 = vld [vmem:[#allocation7 + $0x240] sm:$0xff]
  %v3012 = vld [vmem:[#allocation7 + $0x248] sm:$0xff]
  %v3013 = vld [vmem:[#allocation7 + $0x250] sm:$0xff]
  %v3014 = vld [vmem:[#allocation7 + $0x258] sm:$0xff]
  %v3015 = vld [vmem:[#allocation7 + $0x260] sm:$0xff]
  %v3016 = vld [vmem:[#allocation7 + $0x268] sm:$0xff]
  %v3017 = vld [vmem:[#allocation7 + $0x270] sm:$0xff]
  %v3018 = vld [vmem:[#allocation7 + $0x278] sm:$0xff]
  %v3019 = vld [vmem:[#allocation7 + $0x280] sm:$0xff]
  %v3020 = vld [vmem:[#allocation7 + $0x288] sm:$0xff]
  %v3021 = vld [vmem:[#allocation7 + $0x290] sm:$0xff]
  %v3022 = vld [vmem:[#allocation7 + $0x298] sm:$0xff]
  %v3023 = vld [vmem:[#allocation7 + $0x2a0] sm:$0xff]
  %v3024 = vld [vmem:[#allocation7 + $0x2a8] sm:$0xff]
  %v3025 = vld [vmem:[#allocation7 + $0x2b0] sm:$0xff]
  %v3026 = vld [vmem:[#allocation7 + $0x2b8] sm:$0xff]
  %v3027 = vld [vmem:[#allocation7 + $0x2c0] sm:$0xff]
  %v3028 = vld [vmem:[#allocation7 + $0x2c8] sm:$0xff]
  %v3029 = vld [vmem:[#allocation7 + $0x2d0] sm:$0xff]
  %v3030 = vld [vmem:[#allocation7 + $0x2d8] sm:$0xff]
  %v3031 = vld [vmem:[#allocation7 + $0x2e0] sm:$0xff]
  %v3032 = vld [vmem:[#allocation7 + $0x2e8] sm:$0xff]
  %v3033 = vld [vmem:[#allocation7 + $0x2f0] sm:$0xff]
  %v3034 = vld [vmem:[#allocation7 + $0x2f8] sm:$0xff]
  %v3035 = vld [vmem:[#allocation8] sm:$0x7]
  %v3037 = vlaneseq
  %v3038 = vshrl.u32 %v3037, 7
  %v3039 = vsub.s32 0, %v3038
  %v3040 = vrot.slane %v3035, %v3039
  %v3041 = vlaneseq
  %v3042 = vshrl.u32 %v3041, 7
  %v3043 = vsub.s32 1, %v3042
  %v3044 = vrot.slane %v3035, %v3043
  %v3045 = vlaneseq
  %v3046 = vshrl.u32 %v3045, 7
  %v3047 = vsub.s32 2, %v3046
  %v3048 = vrot.slane %v3035, %v3047
  %3052 = vmatprep.subr.mxu0 %v2985
  %3053 = vmatpush1.msra.mxu0 %v2984
  %3054 = vmatprep.subr.mxu0 %v2982
  %3055 = vmatpush1.msra.mxu0 %v2981
  %3056 = vmatprep.subr.mxu0 %v2979
  %3057 = vmatpush1.msra.mxu0 %v2978
  %3058 = vmatprep.subr.mxu0 %v2976
  %3059 = vmatpush1.msra.mxu0 %v2975
  %3060 = vmatprep.subr.mxu0 %v2973
  %3061 = vmatpush1.msra.mxu0 %v2972
  %3062 = vmatprep.subr.mxu0 %v2970
  %3063 = vmatpush1.msra.mxu0 %v2969
  %3064 = vmatprep.subr.mxu0 %v2967
  %3065 = vmatpush1.msra.mxu0 %v2966
  %3066 = vmatprep.subr.mxu0 %v2964
  %3067 = vmatpush1.msra.mxu0 %v2963
  %3068 = vmatprep.subr.mxu0 %v2961
  %3069 = vmatpush1.msra.mxu0 %v2960
  %3070 = vmatprep.subr.mxu0 %v2958
  %3071 = vmatpush1.msra.mxu0 %v2957
  %3072 = vmatprep.subr.mxu0 %v2955
  %3073 = vmatpush1.msra.mxu0 %v2954
  %3074 = vmatprep.subr.mxu0 %v2952
  %3075 = vmatpush1.msra.mxu0 %v2951
  %3076 = vmatprep.subr.mxu0 %v2949
  %3077 = vmatpush1.msra.mxu0 %v2948
  %3078 = vmatprep.subr.mxu0 %v2946
  %3079 = vmatpush1.msra.mxu0 %v2945
  %3080 = vmatprep.subr.mxu0 %v2943
  %3081 = vmatpush1.msra.mxu0 %v2942
  %3082 = vmatprep.subr.mxu0 %v2940
  %3083 = vmatpush1.msra.mxu0 %v2939
  %3084 = vmatprep.subr.mxu0 %v3033
  %3085 = vmatpush2.msra.mxu0 %v3032
  %3086 = vmatprep.subr.mxu0 %v3030
  %3087 = vmatpush2.msra.mxu0 %v3029
  %3088 = vmatprep.subr.mxu0 %v3027
  %3089 = vmatpush2.msra.mxu0 %v3026
  %3090 = vmatprep.subr.mxu0 %v3024
  %3091 = vmatpush2.msra.mxu0 %v3023
  %3092 = vmatprep.subr.mxu0 %v3021
  %3093 = vmatpush2.msra.mxu0 %v3020
  %3094 = vmatprep.subr.mxu0 %v3018
  %3095 = vmatpush2.msra.mxu0 %v3017
  %3096 = vmatprep.subr.mxu0 %v3015
  %3097 = vmatpush2.msra.mxu0 %v3014
  %3098 = vmatprep.subr.mxu0 %v3012
  %3099 = vmatpush2.msra.mxu0 %v3011
  %3100 = vmatprep.subr.mxu0 %v3009
  %3101 = vmatpush2.msra.mxu0 %v3008
  %3102 = vmatprep.subr.mxu0 %v3006
  %3103 = vmatpush2.msra.mxu0 %v3005
  %3104 = vmatprep.subr.mxu0 %v3003
  %3105 = vmatpush2.msra.mxu0 %v3002
  %3106 = vmatprep.subr.mxu0 %v3000
  %3107 = vmatpush2.msra.mxu0 %v2999
  %3108 = vmatprep.subr.mxu0 %v2997
  %3109 = vmatpush2.msra.mxu0 %v2996
  %3110 = vmatprep.subr.mxu0 %v2994
  %3111 = vmatpush2.msra.mxu0 %v2993
  %3112 = vmatprep.subr.mxu0 %v2991
  %3113 = vmatpush2.msra.mxu0 %v2990
  %3114 = vmatprep.subr.mxu0 %v2988
  %3115 = vmatpush2.msra.mxu0 %v2987
  %3116 = vmatprep.mubr.f32.mxu0 %v2938
  %3117 = vmatmul.mubr.f32.gmra.mxu0 %v2937
  %v3118 = vpop.f32.mrf.mxu0
  %v3119 = vadd.f32 %v3040, %v3118
  %v3120 = vpop.f32.mrf.mxu0
  %v3121 = vadd.f32 %v3044, %v3120
  %3122 = vdwg.mxu0
  %3123 = vmatprep.subr.mxu0 0.0
  %3124 = vmatpush1.msra.mxu0 %v2986
  %3125 = vmatprep.subr.mxu0 0.0
  %3126 = vmatpush1.msra.mxu0 %v2983
  %3127 = vmatprep.subr.mxu0 0.0
  %3128 = vmatpush1.msra.mxu0 %v2980
  %3129 = vmatprep.subr.mxu0 0.0
  %3130 = vmatpush1.msra.mxu0 %v2977
  %3131 = vmatprep.subr.mxu0 0.0
  %3132 = vmatpush1.msra.mxu0 %v2974
  %3133 = vmatprep.subr.mxu0 0.0
  %3134 = vmatpush1.msra.mxu0 %v2971
  %3135 = vmatprep.subr.mxu0 0.0
  %3136 = vmatpush1.msra.mxu0 %v2968
  %3137 = vmatprep.subr.mxu0 0.0
  %3138 = vmatpush1.msra.mxu0 %v2965
  %3139 = vmatprep.subr.mxu0 0.0
  %3140 = vmatpush1.msra.mxu0 %v2962
  %3141 = vmatprep.subr.mxu0 0.0
  %3142 = vmatpush1.msra.mxu0 %v2959
  %3143 = vmatprep.subr.mxu0 0.0
  %3144 = vmatpush1.msra.mxu0 %v2956
  %3145 = vmatprep.subr.mxu0 0.0
  %3146 = vmatpush1.msra.mxu0 %v2953
  %3147 = vmatprep.subr.mxu0 0.0
  %3148 = vmatpush1.msra.mxu0 %v2950
  %3149 = vmatprep.subr.mxu0 0.0
  %3150 = vmatpush1.msra.mxu0 %v2947
  %3151 = vmatprep.subr.mxu0 0.0
  %3152 = vmatpush1.msra.mxu0 %v2944
  %3153 = vmatprep.subr.mxu0 0.0
  %3154 = vmatpush1.msra.mxu0 %v2941
  %3155 = vmatprep.subr.mxu0 0.0
  %3156 = vmatpush2.msra.mxu0 %v3034
  %3157 = vmatprep.subr.mxu0 0.0
  %3158 = vmatpush2.msra.mxu0 %v3031
  %3159 = vmatprep.subr.mxu0 0.0
  %3160 = vmatpush2.msra.mxu0 %v3028
  %3161 = vmatprep.subr.mxu0 0.0
  %3162 = vmatpush2.msra.mxu0 %v3025
  %3163 = vmatprep.subr.mxu0 0.0
  %3164 = vmatpush2.msra.mxu0 %v3022
  %3165 = vmatprep.subr.mxu0 0.0
  %3166 = vmatpush2.msra.mxu0 %v3019
  %3167 = vmatprep.subr.mxu0 0.0
  %3168 = vmatpush2.msra.mxu0 %v3016
  %3169 = vmatprep.subr.mxu0 0.0
  %3170 = vmatpush2.msra.mxu0 %v3013
  %3171 = vmatprep.subr.mxu0 0.0
  %3172 = vmatpush2.msra.mxu0 %v3010
  %3173 = vmatprep.subr.mxu0 0.0
  %3174 = vmatpush2.msra.mxu0 %v3007
  %3175 = vmatprep.subr.mxu0 0.0
  %3176 = vmatpush2.msra.mxu0 %v3004
  %3177 = vmatprep.subr.mxu0 0.0
  %3178 = vmatpush2.msra.mxu0 %v3001
  %3179 = vmatprep.subr.mxu0 0.0
  %3180 = vmatpush2.msra.mxu0 %v2998
  %3181 = vmatprep.subr.mxu0 0.0
  %3182 = vmatpush2.msra.mxu0 %v2995
  %3183 = vmatprep.subr.mxu0 0.0
  %3184 = vmatpush2.msra.mxu0 %v2992
  %3185 = vmatprep.subr.mxu0 0.0
  %3186 = vmatpush2.msra.mxu0 %v2989
  %3187 = vmatprep.mubr.f32.mxu0 %v2938
  %3188 = vmatmul.mubr.f32.gmra.mxu0 %v2937
  %v3189 = vpop.f32.mrf.mxu0
  %v3190 = vadd.f32 %v3048, %v3189
  %v3191 = vpop.f32.mrf.mxu0
  %3192 = vdwg.mxu0
  %v3193 = vlaneseq
  %v3194 = vshrl.u32 %v3193, 7
  %v3195 = vadd.s32 %v3194, 8
  %v3196 = vadd.s32 %v3194, 16
  %v3197 = vadd.s32 %v3194, 24
  %v3198 = vadd.s32 %v3194, 32
  %v3199 = vadd.s32 %v3194, 40
  %v3200 = vadd.s32 %v3194, 48
  %v3201 = vadd.s32 %v3194, 56
  %v3202 = vadd.s32 %v3194, 64
  %v3203 = vadd.s32 %v3194, 72
  %v3204 = vadd.s32 %v3194, 80
  %v3205 = vadd.s32 %v3194, 88
  %v3206 = vadd.s32 %v3194, 96
  %v3207 = vadd.s32 %v3194, 104
  %v3208 = vadd.s32 %v3194, 112
  %v3209 = vadd.s32 %v3194, 120
  %v3210 = vadd.s32 %v3194, 128
  %v3211 = vadd.s32 %v3194, 136
  %v3212 = vadd.s32 %v3194, 144
  %v3213 = vadd.s32 %v3194, 152
  %v3214 = vadd.s32 %v3194, 160
  %v3215 = vadd.s32 %v3194, 168
  %v3216 = vadd.s32 %v3194, 176
  %v3217 = vadd.s32 %v3194, 184
  %v3218 = vadd.s32 %v3194, 192
  %v3219 = vadd.s32 %v3194, 200
  %v3220 = vadd.s32 %v3194, 208
  %v3221 = vadd.s32 %v3194, 216
  %v3222 = vadd.s32 %v3194, 224
  %v3223 = vadd.s32 %v3194, 232
  %v3224 = vadd.s32 %v3194, 240
  %v3225 = vadd.s32 %v3194, 248
  %v3226 = vlaneseq
  %v3227 = vand.u32 %v3226, 127
  %v3228 = vmul.u32 %v3227, 8
  %vm3229 = vcmp.ge.s32.totalorder %v3194, %v3228
  %vm3230 = vcmp.ge.s32.totalorder %v3195, %v3228
  %vm3231 = vcmp.ge.s32.totalorder %v3196, %v3228
  %vm3232 = vcmp.ge.s32.totalorder %v3197, %v3228
  %vm3233 = vcmp.ge.s32.totalorder %v3198, %v3228
  %vm3234 = vcmp.ge.s32.totalorder %v3199, %v3228
  %vm3235 = vcmp.ge.s32.totalorder %v3200, %v3228
  %vm3236 = vcmp.ge.s32.totalorder %v3201, %v3228
  %vm3237 = vcmp.ge.s32.totalorder %v3202, %v3228
  %vm3238 = vcmp.ge.s32.totalorder %v3203, %v3228
  %vm3239 = vcmp.ge.s32.totalorder %v3204, %v3228
  %vm3240 = vcmp.ge.s32.totalorder %v3205, %v3228
  %vm3241 = vcmp.ge.s32.totalorder %v3206, %v3228
  %vm3242 = vcmp.ge.s32.totalorder %v3207, %v3228
  %vm3243 = vcmp.ge.s32.totalorder %v3208, %v3228
  %vm3244 = vcmp.ge.s32.totalorder %v3209, %v3228
  %vm3245 = vcmp.ge.s32.totalorder %v3210, %v3228
  %vm3246 = vcmp.ge.s32.totalorder %v3211, %v3228
  %vm3247 = vcmp.ge.s32.totalorder %v3212, %v3228
  %vm3248 = vcmp.ge.s32.totalorder %v3213, %v3228
  %vm3249 = vcmp.ge.s32.totalorder %v3214, %v3228
  %vm3250 = vcmp.ge.s32.totalorder %v3215, %v3228
  %vm3251 = vcmp.ge.s32.totalorder %v3216, %v3228
  %vm3252 = vcmp.ge.s32.totalorder %v3217, %v3228
  %vm3253 = vcmp.ge.s32.totalorder %v3218, %v3228
  %vm3254 = vcmp.ge.s32.totalorder %v3219, %v3228
  %vm3255 = vcmp.ge.s32.totalorder %v3220, %v3228
  %vm3256 = vcmp.ge.s32.totalorder %v3221, %v3228
  %vm3257 = vcmp.ge.s32.totalorder %v3222, %v3228
  %vm3258 = vcmp.ge.s32.totalorder %v3223, %v3228
  %vm3259 = vcmp.ge.s32.totalorder %v3224, %v3228
  %vm3260 = vcmp.ge.s32.totalorder %v3225, %v3228
  %v3261 = vadd.s32 %v3228, 8
  %vm3262 = vcmp.lt.s32.totalorder %v3194, %v3261
  %vm3263 = vcmp.lt.s32.totalorder %v3195, %v3261
  %vm3264 = vcmp.lt.s32.totalorder %v3196, %v3261
  %vm3265 = vcmp.lt.s32.totalorder %v3197, %v3261
  %vm3266 = vcmp.lt.s32.totalorder %v3198, %v3261
  %vm3267 = vcmp.lt.s32.totalorder %v3199, %v3261
  %vm3268 = vcmp.lt.s32.totalorder %v3200, %v3261
  %vm3269 = vcmp.lt.s32.totalorder %v3201, %v3261
  %vm3270 = vcmp.lt.s32.totalorder %v3202, %v3261
  %vm3271 = vcmp.lt.s32.totalorder %v3203, %v3261
  %vm3272 = vcmp.lt.s32.totalorder %v3204, %v3261
  %vm3273 = vcmp.lt.s32.totalorder %v3205, %v3261
  %vm3274 = vcmp.lt.s32.totalorder %v3206, %v3261
  %vm3275 = vcmp.lt.s32.totalorder %v3207, %v3261
  %vm3276 = vcmp.lt.s32.totalorder %v3208, %v3261
  %vm3277 = vcmp.lt.s32.totalorder %v3209, %v3261
  %vm3278 = vcmp.lt.s32.totalorder %v3210, %v3261
  %vm3279 = vcmp.lt.s32.totalorder %v3211, %v3261
  %vm3280 = vcmp.lt.s32.totalorder %v3212, %v3261
  %vm3281 = vcmp.lt.s32.totalorder %v3213, %v3261
  %vm3282 = vcmp.lt.s32.totalorder %v3214, %v3261
  %vm3283 = vcmp.lt.s32.totalorder %v3215, %v3261
  %vm3284 = vcmp.lt.s32.totalorder %v3216, %v3261
  %vm3285 = vcmp.lt.s32.totalorder %v3217, %v3261
  %vm3286 = vcmp.lt.s32.totalorder %v3218, %v3261
  %vm3287 = vcmp.lt.s32.totalorder %v3219, %v3261
  %vm3288 = vcmp.lt.s32.totalorder %v3220, %v3261
  %vm3289 = vcmp.lt.s32.totalorder %v3221, %v3261
  %vm3290 = vcmp.lt.s32.totalorder %v3222, %v3261
  %vm3291 = vcmp.lt.s32.totalorder %v3223, %v3261
  %vm3292 = vcmp.lt.s32.totalorder %v3224, %v3261
  %vm3293 = vcmp.lt.s32.totalorder %v3225, %v3261
  %vm3294 = vmand %vm3229, %vm3262
  %vm3295 = vmand %vm3230, %vm3263
  %vm3296 = vmand %vm3231, %vm3264
  %vm3297 = vmand %vm3232, %vm3265
  %vm3298 = vmand %vm3233, %vm3266
  %vm3299 = vmand %vm3234, %vm3267
  %vm3300 = vmand %vm3235, %vm3268
  %vm3301 = vmand %vm3236, %vm3269
  %vm3302 = vmand %vm3237, %vm3270
  %vm3303 = vmand %vm3238, %vm3271
  %vm3304 = vmand %vm3239, %vm3272
  %vm3305 = vmand %vm3240, %vm3273
  %vm3306 = vmand %vm3241, %vm3274
  %vm3307 = vmand %vm3242, %vm3275
  %vm3308 = vmand %vm3243, %vm3276
  %vm3309 = vmand %vm3244, %vm3277
  %vm3310 = vmand %vm3245, %vm3278
  %vm3311 = vmand %vm3246, %vm3279
  %vm3312 = vmand %vm3247, %vm3280
  %vm3313 = vmand %vm3248, %vm3281
  %vm3314 = vmand %vm3249, %vm3282
  %vm3315 = vmand %vm3250, %vm3283
  %vm3316 = vmand %vm3251, %vm3284
  %vm3317 = vmand %vm3252, %vm3285
  %vm3318 = vmand %vm3253, %vm3286
  %vm3319 = vmand %vm3254, %vm3287
  %vm3320 = vmand %vm3255, %vm3288
  %vm3321 = vmand %vm3256, %vm3289
  %vm3322 = vmand %vm3257, %vm3290
  %vm3323 = vmand %vm3258, %vm3291
  %vm3324 = vmand %vm3259, %vm3292
  %vm3325 = vmand %vm3260, %vm3293
  %v3326 = vsel %vm3294, 1.0, 0.0
  %v3327 = vsel %vm3295, 1.0, 0.0
  %v3328 = vsel %vm3296, 1.0, 0.0
  %v3329 = vsel %vm3297, 1.0, 0.0
  %v3330 = vsel %vm3298, 1.0, 0.0
  %v3331 = vsel %vm3299, 1.0, 0.0
  %v3332 = vsel %vm3300, 1.0, 0.0
  %v3333 = vsel %vm3301, 1.0, 0.0
  %v3334 = vsel %vm3302, 1.0, 0.0
  %v3335 = vsel %vm3303, 1.0, 0.0
  %v3336 = vsel %vm3304, 1.0, 0.0
  %v3337 = vsel %vm3305, 1.0, 0.0
  %v3338 = vsel %vm3306, 1.0, 0.0
  %v3339 = vsel %vm3307, 1.0, 0.0
  %v3340 = vsel %vm3308, 1.0, 0.0
  %v3341 = vsel %vm3309, 1.0, 0.0
  %v3342 = vsel %vm3310, 1.0, 0.0
  %v3343 = vsel %vm3311, 1.0, 0.0
  %v3344 = vsel %vm3312, 1.0, 0.0
  %v3345 = vsel %vm3313, 1.0, 0.0
  %v3346 = vsel %vm3314, 1.0, 0.0
  %v3347 = vsel %vm3315, 1.0, 0.0
  %v3348 = vsel %vm3316, 1.0, 0.0
  %v3349 = vsel %vm3317, 1.0, 0.0
  %v3350 = vsel %vm3318, 1.0, 0.0
  %v3351 = vsel %vm3319, 1.0, 0.0
  %v3352 = vsel %vm3320, 1.0, 0.0
  %v3353 = vsel %vm3321, 1.0, 0.0
  %v3354 = vsel %vm3322, 1.0, 0.0
  %v3355 = vsel %vm3323, 1.0, 0.0
  %v3356 = vsel %vm3324, 1.0, 0.0
  %v3357 = vsel %vm3325, 1.0, 0.0
  %v3358 = vld [vmem:[%s1] sm:$0xff]
  %v3359 = vld [vmem:[%s1 + $0x8] sm:$0xff]
  %v3360 = vmul.f32 %v3119, %v3358
  %v3361 = vmul.f32 %v3121, %v3359
  %3362 = vmatprep.subr.mxu0 0.0
  %3363 = vmatpush1.msra.mxu0 %v3341
  %3364 = vmatprep.subr.mxu0 0.0
  %3365 = vmatpush1.msra.mxu0 %v3340
  %3366 = vmatprep.subr.mxu0 0.0
  %3367 = vmatpush1.msra.mxu0 %v3339
  %3368 = vmatprep.subr.mxu0 0.0
  %3369 = vmatpush1.msra.mxu0 %v3338
  %3370 = vmatprep.subr.mxu0 0.0
  %3371 = vmatpush1.msra.mxu0 %v3337
  %3372 = vmatprep.subr.mxu0 0.0
  %3373 = vmatpush1.msra.mxu0 %v3336
  %3374 = vmatprep.subr.mxu0 0.0
  %3375 = vmatpush1.msra.mxu0 %v3335
  %3376 = vmatprep.subr.mxu0 0.0
  %3377 = vmatpush1.msra.mxu0 %v3334
  %3378 = vmatprep.subr.mxu0 0.0
  %3379 = vmatpush1.msra.mxu0 %v3333
  %3380 = vmatprep.subr.mxu0 0.0
  %3381 = vmatpush1.msra.mxu0 %v3332
  %3382 = vmatprep.subr.mxu0 0.0
  %3383 = vmatpush1.msra.mxu0 %v3331
  %3384 = vmatprep.subr.mxu0 0.0
  %3385 = vmatpush1.msra.mxu0 %v3330
  %3386 = vmatprep.subr.mxu0 0.0
  %3387 = vmatpush1.msra.mxu0 %v3329
  %3388 = vmatprep.subr.mxu0 0.0
  %3389 = vmatpush1.msra.mxu0 %v3328
  %3390 = vmatprep.subr.mxu0 0.0
  %3391 = vmatpush1.msra.mxu0 %v3327
  %3392 = vmatprep.subr.mxu0 0.0
  %3393 = vmatpush1.msra.mxu0 %v3326
  %3394 = vmatprep.subr.mxu0 0.0
  %3395 = vmatpush2.msra.mxu0 %v3357
  %3396 = vmatprep.subr.mxu0 0.0
  %3397 = vmatpush2.msra.mxu0 %v3356
  %3398 = vmatprep.subr.mxu0 0.0
  %3399 = vmatpush2.msra.mxu0 %v3355
  %3400 = vmatprep.subr.mxu0 0.0
  %3401 = vmatpush2.msra.mxu0 %v3354
  %3402 = vmatprep.subr.mxu0 0.0
  %3403 = vmatpush2.msra.mxu0 %v3353
  %3404 = vmatprep.subr.mxu0 0.0
  %3405 = vmatpush2.msra.mxu0 %v3352
  %3406 = vmatprep.subr.mxu0 0.0
  %3407 = vmatpush2.msra.mxu0 %v3351
  %3408 = vmatprep.subr.mxu0 0.0
  %3409 = vmatpush2.msra.mxu0 %v3350
  %3410 = vmatprep.subr.mxu0 0.0
  %3411 = vmatpush2.msra.mxu0 %v3349
  %3412 = vmatprep.subr.mxu0 0.0
  %3413 = vmatpush2.msra.mxu0 %v3348
  %3414 = vmatprep.subr.mxu0 0.0
  %3415 = vmatpush2.msra.mxu0 %v3347
  %3416 = vmatprep.subr.mxu0 0.0
  %3417 = vmatpush2.msra.mxu0 %v3346
  %3418 = vmatprep.subr.mxu0 0.0
  %3419 = vmatpush2.msra.mxu0 %v3345
  %3420 = vmatprep.subr.mxu0 0.0
  %3421 = vmatpush2.msra.mxu0 %v3344
  %3422 = vmatprep.subr.mxu0 0.0
  %3423 = vmatpush2.msra.mxu0 %v3343
  %3424 = vmatprep.subr.mxu0 0.0
  %3425 = vmatpush2.msra.mxu0 %v3342
  %3426 = vmatprep.mubr.f32.mxu0 %v3361
  %3427 = vmatmul.mubr.f32.gmra.mxu0 %v3360
  %v3428 = vpop.f32.mrf.mxu0
  %v3429 = vadd.f32 %v3190, %v3428
  %v3430 = vpop.f32.mrf.mxu0
  %3431 = vdwg.mxu0
  %3432 = vst [vmem:[%s12] sm:$0xff] %v3119
  %3433 = vst [vmem:[%s12 + $0x8] sm:$0xff] %v3121
  %3434 = vst [vmem:[%s12 + $0x10] sm:$0xff] %v3190
  %3435 = vst [vmem:[%s12 + $0x18] sm:$0xff] %v3429
  // Predicated region
  $region218: #{nf_full_forward.1} parent=0 // pred_check
    _
  $region219: #{nf_full_forward.1} parent=0 // pred_check_branch
    %3437 = sbr.rel (0) target = $region221
  $region220: #{nf_full_forward.1} parent=0 // pred_region
    _
  $region221: #{nf_full_forward.1} parent=0 // pred_fallthru
    _
  // Predicated region
  $region222: #{nf_full_forward.1} parent=0 // pred_check
    _
  $region223: #{nf_full_forward.1} parent=0 // pred_check_branch
    %3439 = sbr.rel (0) target = $region225
  $region224: #{nf_full_forward.1} parent=0 // pred_region
    _
  $region225: #{nf_full_forward.1} parent=0 // pred_fallthru
    _
  %3440 = vsyncmov [#allocation9]
  %s3441 = vpop.sfrf %3440
  %p3442 = scmp.eq.s32.totalorder %s3441, 0
  %p3443 = pneg %p3442
  %3445 = shalt.err (%p3443)
  %s3446 = scalar_lea.sflag [#allocation9], 1
  %3447 = vsyncmov %s3446
  %s3448 = vpop.sfrf %3447
  %p3449 = scmp.eq.s32.totalorder %s3448, 0
  %p3450 = pneg %p3449
  %3452 = shalt.err (%p3450)
  %s3453 = scalar_lea.sflag [#allocation9], 2
  %3454 = vsyncmov %s3453
  %s3455 = vpop.sfrf %3454
  %p3456 = scmp.eq.s32.totalorder %s3455, 0
  %p3457 = pneg %p3456
  %3459 = shalt.err (%p3457)
  %s3460 = scalar_lea.sflag [#allocation9], 3
  %3461 = vsyncmov %s3460
  %s3462 = vpop.sfrf %3461
  %p3463 = scmp.eq.s32.totalorder %s3462, 0
  %p3464 = pneg %p3463
  %3466 = shalt.err (%p3464)
  %s3467 = scalar_lea.sflag [#allocation9], 4
  %3468 = vsyncmov %s3467
  %s3469 = vpop.sfrf %3468
  %p3470 = scmp.eq.s32.totalorder %s3469, 0
  %p3471 = pneg %p3470
  %3473 = shalt.err (%p3471)
  %s3474 = scalar_lea.sflag [#allocation9], 5
  %3475 = vsyncmov %s3474
  %s3476 = vpop.sfrf %3475
  %p3477 = scmp.eq.s32.totalorder %s3476, 0
  %p3478 = pneg %p3477
  %3480 = shalt.err (%p3478)

</llo_original>
